<compile_context>
chip_gen: v7x
topology: tpu7x:2x2x1
jax: 0.10.0
libtpu: 0.0.40
codegen_flags: <defaults>
</compile_context>

<pallas_src>
import functools

import jax
import jax.numpy as jnp
from jax.experimental import pallas as pl
from jax.experimental.pallas import tpu as pltpu

_DILATIONS = (1, 3, 5)


# ----------------------------------------------------------------------------
# Fused kernel (one batch element per grid step, everything lane-dense)
# ----------------------------------------------------------------------------
def _dac_kernel(x_ref, w_ref, b_ref, w4_ref, m_ref, o_ref, *, C, H, W):
    """x_ref/o_ref : (1, C, H*W) VMEM blocks (flattened NCHW planes).
    w_ref  : (3, C, 9*C)  per-dilated-conv weight columns
             w_ref[ci][o, (ky*3+kx)*C + i] = W_oihw[o, i, ky, kx].
    b_ref  : (4, C, 1)    biases (dilate1, dilate2, dilate3, conv1x1).
    w4_ref : (C, C)       1x1 conv weight, [o, i].
    m_ref  : (3, 9, 1, H*W) 0/1 edge masks per (dilation, tap)."""
    HW = H * W
    f32 = jnp.float32

    x = x_ref[0].astype(f32)        # (C, HW) slab
    w4 = w4_ref[...].astype(f32)    # (C, C)

    def conv3x3(src, ci, di, d):
        """Dilated 3x3 'same' conv on a (C, HW) slab via lane rolls + masks."""
        wv = w_ref[ci]                              # (C, 9*C)
        acc = jnp.zeros((C, HW), f32)
        for ky in range(3):
            for kx in range(3):
                k = ky * 3 + kx
                shift = ((ky - 1) * W + (kx - 1)) * d   # flat tap offset
                if shift == 0:
                    tap = src                           # center tap: no roll/mask
                else:
                    # tap[j] = src[j + shift] with zero fill at the image edges
                    tap = pltpu.roll(src, (-shift) % HW, axis=1) * m_ref[di, k]
                for i in range(C):
                    j = k * C + i
                    # (C,1) weight column x (1,HW) input row -> all C_out at once
                    acc = acc + wv[:, j:j + 1] * tap[i:i + 1, :]
        return acc + b_ref[ci]

    def mix1x1_relu(z):
        s = jnp.zeros((C, HW), f32)
        for i in range(C):
            s = s + w4[:, i:i + 1] * z[i:i + 1, :]
        return jnp.maximum(s + b_ref[3], 0.0)

    out = x
    a = conv3x3(x, 0, 0, 1)                 # dilate1(x)   (pre-relu, feeds dilate2)
    out = out + jnp.maximum(a, 0.0)
    bb = conv3x3(x, 1, 1, 3)                # dilate2(x)
    out = out + mix1x1_relu(bb)
    c = conv3x3(a, 1, 1, 3)                 # dilate2(dilate1(x)) (pre-relu)
    out = out + mix1x1_relu(c)
    e = conv3x3(c, 2, 2, 5)                 # dilate3(dilate2(dilate1(x)))
    out = out + mix1x1_relu(e)

    o_ref[0] = out.astype(o_ref.dtype)      # single dense (C, HW) store


# ----------------------------------------------------------------------------
# Wrapper helpers
# ----------------------------------------------------------------------------
def _wcols_3x3(w_oihw):
    """OIHW (Cout, Cin, 3, 3) -> (Cout, 9*Cin) with column (ky*3+kx)*Cin + i."""
    c_out, c_in = w_oihw.shape[:2]
    return jnp.transpose(w_oihw, (0, 2, 3, 1)).reshape(c_out, 9 * c_in)


def _tap_masks(H, W, dilations):
    """0/1 edge masks: masks[di, ky*3+kx, 0, h*W+w] = 1 iff (h,w)+(dy,dx) in-bounds."""
    hh = jnp.arange(H * W) // W
    ww = jnp.arange(H * W) % W
    per_d = []
    for d in dilations:
        taps = []
        for ky in range(3):
            for kx in range(3):
                dy, dx = (ky - 1) * d, (kx - 1) * d
                valid = ((hh + dy >= 0) & (hh + dy < H) &
                         (ww + dx >= 0) & (ww + dx < W))
                taps.append(valid.astype(jnp.float32))
        per_d.append(jnp.stack(taps))
    return jnp.stack(per_d).reshape(len(dilations), 9, 1, H * W)


# ----------------------------------------------------------------------------
# Wrapper
# ----------------------------------------------------------------------------
def dacblock_forward(x_nchw, params):
    """x_nchw: (N, C, H, W).  params hold PyTorch-layout (OIHW) conv weights."""
    N, C, H, W = x_nchw.shape
    HW = H * W
    # VPU broadcast-MAC channel mix is only sensible for small C.  For CE-Net's
    # real C=512 the channel contraction must go to the MXU instead.
    assert C <= 8, "dacblock_forward: small-C kernel; use an MXU channel-mix for large C"

    w1, b1 = params["dilate1"]
    w2, b2 = params["dilate2"]
    w3, b3 = params["dilate3"]
    w4, b4 = params["conv1x1"]

    wstk = jnp.stack([_wcols_3x3(w1), _wcols_3x3(w2), _wcols_3x3(w3)])   # (3, C, 9C)
    bstk = jnp.stack([b1, b2, b3, b4]).reshape(4, C, 1)                  # (4, C, 1)
    w4v = w4[:, :, 0, 0]                                                 # (C, C)
    masks = _tap_masks(H, W, _DILATIONS)                                 # (3, 9, 1, HW)

    x2d = x_nchw.reshape(N, C, HW)      # free metadata reshape (row-major)

    kernel = functools.partial(_dac_kernel, C=C, H=H, W=W)
    out2d = pl.pallas_call(
        kernel,
        out_shape=jax.ShapeDtypeStruct((N, C, HW), x_nchw.dtype),
        grid=(N,),
        in_specs=[
            pl.BlockSpec((1, C, HW), lambda n: (n, 0, 0)),
            pl.BlockSpec((3, C, 9 * C), lambda n: (0, 0, 0)),      # constant -> fetched once
            pl.BlockSpec((4, C, 1), lambda n: (0, 0, 0)),
            pl.BlockSpec((C, C), lambda n: (0, 0)),
            pl.BlockSpec((3, 9, 1, HW), lambda n: (0, 0, 0, 0)),
        ],
        out_specs=pl.BlockSpec((1, C, HW), lambda n: (n, 0, 0)),
        compiler_params=pltpu.CompilerParams(
            dimension_semantics=("parallel",),    # batch splits across v7x's 2 TCs
        ),
    )(x2d, wstk, bstk, w4v, masks)
    return out2d.reshape(N, C, H, W)


# ----------------------------------------------------------------------------
# Pure-JAX reference (PyTorch OIHW layout end-to-end), for correctness check
# ----------------------------------------------------------------------------
def _conv_ref(x, w, b, d):
    y = jax.lax.conv_general_dilated(
        x, w, window_strides=(1, 1), padding=((d, d), (d, d)),
        rhs_dilation=(d, d), dimension_numbers=("NCHW", "OIHW", "NCHW"))
    return y + b[None, :, None, None]


def dacblock_ref(x, params):
    w1, b1 = params["dilate1"]
    w2, b2 = params["dilate2"]
    w3, b3 = params["dilate3"]
    w4, b4 = params["conv1x1"]

    def c1x1(z):
        y = jax.lax.conv_general_dilated(
            z, w4, window_strides=(1, 1), padding="VALID",
            dimension_numbers=("NCHW", "OIHW", "NCHW"))
        return y + b4[None, :, None, None]

    a = _conv_ref(x, w1, b1, 1)
    b = _conv_ref(x, w2, b2, 3)
    c = _conv_ref(a, w2, b2, 3)
    e = _conv_ref(c, w3, b3, 5)
    return (x + jax.nn.relu(a) + jax.nn.relu(c1x1(b))
            + jax.nn.relu(c1x1(c)) + jax.nn.relu(c1x1(e)))


# ----------------------------------------------------------------------------
# Main
# ----------------------------------------------------------------------------
if __name__ == "__main__":
    N, C, H, W = 2, 4, 16, 16
    key = jax.random.PRNGKey(0)
    kx_, k1, k2, k3, k4 = jax.random.split(key, 5)

    x = jax.random.normal(kx_, (N, C, H, W), jnp.float32)

    # PyTorch-layout weights: OIHW for the 3x3s, (O, I, 1, 1) for the 1x1.
    # Biases are zero, exactly as the module's __init__ enforces.
    s3 = 1.0 / jnp.sqrt(9.0 * C)
    s1 = 1.0 / jnp.sqrt(1.0 * C)
    params = {
        "dilate1": (jax.random.normal(k1, (C, C, 3, 3), jnp.float32) * s3,
                    jnp.zeros((C,), jnp.float32)),
        "dilate2": (jax.random.normal(k2, (C, C, 3, 3), jnp.float32) * s3,
                    jnp.zeros((C,), jnp.float32)),
        "dilate3": (jax.random.normal(k3, (C, C, 3, 3), jnp.float32) * s3,
                    jnp.zeros((C,), jnp.float32)),
        "conv1x1": (jax.random.normal(k4, (C, C, 1, 1), jnp.float32) * s1,
                    jnp.zeros((C,), jnp.float32)),
    }

    out = jax.block_until_ready(jax.jit(dacblock_forward)(x, params))
    ref = jax.block_until_ready(dacblock_ref(x, params))

    assert out.shape == (N, C, H, W)
    assert jnp.allclose(out, ref, atol=1e-4, rtol=1e-4), "mismatch vs reference"

    print("KERNEL_OK")
</pallas_src>

<mosaic_0001>
module attributes {stable_mosaic.version = 11 : i64} {
  func.func @_dac_kernel(%arg0: i32, %arg1: memref<1x4x256xf32, #tpu.memory_space<vmem>>, %arg2: memref<3x4x36xf32, #tpu.memory_space<vmem>>, %arg3: memref<4x4x1xf32, #tpu.memory_space<vmem>>, %arg4: memref<4x4xf32, #tpu.memory_space<vmem>>, %arg5: memref<3x9x1x256xf32, #tpu.memory_space<vmem>>, %arg6: memref<1x4x256xf32, #tpu.memory_space<vmem>>) attributes {dimension_semantics = [#tpu.dimension_semantics<parallel>], iteration_bounds = array<i64: 2>, scalar_prefetch = 0 : i64, scratch_operands = 0 : i64, tpu.core_type = #tpu.core_type<tc>, window_params = [{transform_indices = @transform_0, window_bounds = array<i64: 1, 4, 256>}, {pipeline_mode = #tpu.pipeline_mode<synchronous>, transform_indices = @transform_1, window_bounds = array<i64: 3, 4, 36>}, {pipeline_mode = #tpu.pipeline_mode<synchronous>, transform_indices = @transform_2, window_bounds = array<i64: 4, 4, 1>}, {pipeline_mode = #tpu.pipeline_mode<synchronous>, transform_indices = @transform_3, window_bounds = array<i64: 4, 4>}, {pipeline_mode = #tpu.pipeline_mode<synchronous>, transform_indices = @transform_4, window_bounds = array<i64: 3, 9, 1, 256>}, {transform_indices = @transform_5, window_bounds = array<i64: 1, 4, 256>}]} {
    %c0 = arith.constant 0 : index
    %c0_0 = arith.constant 0 : index
    %c0_1 = arith.constant 0 : index
    %0 = vector.load %arg1[%c0, %c0_0, %c0_1] : memref<1x4x256xf32, #tpu.memory_space<vmem>>, vector<1x4x256xf32>
    %1 = vector.shape_cast %0 : vector<1x4x256xf32> to vector<4x256xf32>
    %c0_2 = arith.constant 0 : index
    %c0_3 = arith.constant 0 : index
    %2 = vector.load %arg4[%c0_2, %c0_3] : memref<4x4xf32, #tpu.memory_space<vmem>>, vector<4x4xf32>
    %c0_4 = arith.constant 0 : index
    %c0_5 = arith.constant 0 : index
    %c0_6 = arith.constant 0 : index
    %3 = vector.load %arg2[%c0_4, %c0_5, %c0_6] : memref<3x4x36xf32, #tpu.memory_space<vmem>>, vector<1x4x36xf32>
    %4 = vector.shape_cast %3 : vector<1x4x36xf32> to vector<4x36xf32>
    %cst = arith.constant 0.000000e+00 : f32
    %5 = vector.broadcast %cst : f32 to vector<4x256xf32>
    %c17_i32 = arith.constant 17 : i32
    %6 = tpu.dynamic_rotate %1 by %c17_i32 dim 1 : vector<4x256xf32>, i32 -> vector<4x256xf32>
    %c0_7 = arith.constant 0 : index
    %c0_8 = arith.constant 0 : index
    %c0_9 = arith.constant 0 : index
    %c0_10 = arith.constant 0 : index
    %7 = vector.load %arg5[%c0_7, %c0_8, %c0_9, %c0_10] : memref<3x9x1x256xf32, #tpu.memory_space<vmem>>, vector<1x1x1x256xf32>
    %8 = vector.shape_cast %7 : vector<1x1x1x256xf32> to vector<1x256xf32>
    %9 = vector.broadcast %8 : vector<1x256xf32> to vector<4x256xf32>
    %10 = arith.mulf %6, %9 : vector<4x256xf32>
    %11 = vector.extract_strided_slice %4 {offsets = [0, 0], sizes = [4, 1], strides = [1, 1]} : vector<4x36xf32> to vector<4x1xf32>
    %12 = vector.extract_strided_slice %10 {offsets = [0, 0], sizes = [1, 256], strides = [1, 1]} : vector<4x256xf32> to vector<1x256xf32>
    %13 = vector.broadcast %11 : vector<4x1xf32> to vector<4x256xf32>
    %14 = vector.broadcast %12 : vector<1x256xf32> to vector<4x256xf32>
    %15 = arith.mulf %13, %14 : vector<4x256xf32>
    %16 = arith.addf %5, %15 : vector<4x256xf32>
    %17 = vector.extract_strided_slice %4 {offsets = [0, 1], sizes = [4, 1], strides = [1, 1]} : vector<4x36xf32> to vector<4x1xf32>
    %18 = vector.extract_strided_slice %10 {offsets = [1, 0], sizes = [1, 256], strides = [1, 1]} : vector<4x256xf32> to vector<1x256xf32>
    %19 = vector.broadcast %17 : vector<4x1xf32> to vector<4x256xf32>
    %20 = vector.broadcast %18 : vector<1x256xf32> to vector<4x256xf32>
    %21 = arith.mulf %19, %20 : vector<4x256xf32>
    %22 = arith.addf %16, %21 : vector<4x256xf32>
    %23 = vector.extract_strided_slice %4 {offsets = [0, 2], sizes = [4, 1], strides = [1, 1]} : vector<4x36xf32> to vector<4x1xf32>
    %24 = vector.extract_strided_slice %10 {offsets = [2, 0], sizes = [1, 256], strides = [1, 1]} : vector<4x256xf32> to vector<1x256xf32>
    %25 = vector.broadcast %23 : vector<4x1xf32> to vector<4x256xf32>
    %26 = vector.broadcast %24 : vector<1x256xf32> to vector<4x256xf32>
    %27 = arith.mulf %25, %26 : vector<4x256xf32>
    %28 = arith.addf %22, %27 : vector<4x256xf32>
    %29 = vector.extract_strided_slice %4 {offsets = [0, 3], sizes = [4, 1], strides = [1, 1]} : vector<4x36xf32> to vector<4x1xf32>
    %30 = vector.extract_strided_slice %10 {offsets = [3, 0], sizes = [1, 256], strides = [1, 1]} : vector<4x256xf32> to vector<1x256xf32>
    %31 = vector.broadcast %29 : vector<4x1xf32> to vector<4x256xf32>
    %32 = vector.broadcast %30 : vector<1x256xf32> to vector<4x256xf32>
    %33 = arith.mulf %31, %32 : vector<4x256xf32>
    %34 = arith.addf %28, %33 : vector<4x256xf32>
    %c16_i32 = arith.constant 16 : i32
    %35 = tpu.dynamic_rotate %1 by %c16_i32 dim 1 : vector<4x256xf32>, i32 -> vector<4x256xf32>
    %c0_11 = arith.constant 0 : index
    %c1 = arith.constant 1 : index
    %c0_12 = arith.constant 0 : index
    %c0_13 = arith.constant 0 : index
    %36 = vector.load %arg5[%c0_11, %c1, %c0_12, %c0_13] : memref<3x9x1x256xf32, #tpu.memory_space<vmem>>, vector<1x1x1x256xf32>
    %37 = vector.shape_cast %36 : vector<1x1x1x256xf32> to vector<1x256xf32>
    %38 = vector.broadcast %37 : vector<1x256xf32> to vector<4x256xf32>
    %39 = arith.mulf %35, %38 : vector<4x256xf32>
    %40 = vector.extract_strided_slice %4 {offsets = [0, 4], sizes = [4, 1], strides = [1, 1]} : vector<4x36xf32> to vector<4x1xf32>
    %41 = vector.extract_strided_slice %39 {offsets = [0, 0], sizes = [1, 256], strides = [1, 1]} : vector<4x256xf32> to vector<1x256xf32>
    %42 = vector.broadcast %40 : vector<4x1xf32> to vector<4x256xf32>
    %43 = vector.broadcast %41 : vector<1x256xf32> to vector<4x256xf32>
    %44 = arith.mulf %42, %43 : vector<4x256xf32>
    %45 = arith.addf %34, %44 : vector<4x256xf32>
    %46 = vector.extract_strided_slice %4 {offsets = [0, 5], sizes = [4, 1], strides = [1, 1]} : vector<4x36xf32> to vector<4x1xf32>
    %47 = vector.extract_strided_slice %39 {offsets = [1, 0], sizes = [1, 256], strides = [1, 1]} : vector<4x256xf32> to vector<1x256xf32>
    %48 = vector.broadcast %46 : vector<4x1xf32> to vector<4x256xf32>
    %49 = vector.broadcast %47 : vector<1x256xf32> to vector<4x256xf32>
    %50 = arith.mulf %48, %49 : vector<4x256xf32>
    %51 = arith.addf %45, %50 : vector<4x256xf32>
    %52 = vector.extract_strided_slice %4 {offsets = [0, 6], sizes = [4, 1], strides = [1, 1]} : vector<4x36xf32> to vector<4x1xf32>
    %53 = vector.extract_strided_slice %39 {offsets = [2, 0], sizes = [1, 256], strides = [1, 1]} : vector<4x256xf32> to vector<1x256xf32>
    %54 = vector.broadcast %52 : vector<4x1xf32> to vector<4x256xf32>
    %55 = vector.broadcast %53 : vector<1x256xf32> to vector<4x256xf32>
    %56 = arith.mulf %54, %55 : vector<4x256xf32>
    %57 = arith.addf %51, %56 : vector<4x256xf32>
    %58 = vector.extract_strided_slice %4 {offsets = [0, 7], sizes = [4, 1], strides = [1, 1]} : vector<4x36xf32> to vector<4x1xf32>
    %59 = vector.extract_strided_slice %39 {offsets = [3, 0], sizes = [1, 256], strides = [1, 1]} : vector<4x256xf32> to vector<1x256xf32>
    %60 = vector.broadcast %58 : vector<4x1xf32> to vector<4x256xf32>
    %61 = vector.broadcast %59 : vector<1x256xf32> to vector<4x256xf32>
    %62 = arith.mulf %60, %61 : vector<4x256xf32>
    %63 = arith.addf %57, %62 : vector<4x256xf32>
    %c15_i32 = arith.constant 15 : i32
    %64 = tpu.dynamic_rotate %1 by %c15_i32 dim 1 : vector<4x256xf32>, i32 -> vector<4x256xf32>
    %c0_14 = arith.constant 0 : index
    %c2 = arith.constant 2 : index
    %c0_15 = arith.constant 0 : index
    %c0_16 = arith.constant 0 : index
    %65 = vector.load %arg5[%c0_14, %c2, %c0_15, %c0_16] : memref<3x9x1x256xf32, #tpu.memory_space<vmem>>, vector<1x1x1x256xf32>
    %66 = vector.shape_cast %65 : vector<1x1x1x256xf32> to vector<1x256xf32>
    %67 = vector.broadcast %66 : vector<1x256xf32> to vector<4x256xf32>
    %68 = arith.mulf %64, %67 : vector<4x256xf32>
    %69 = vector.extract_strided_slice %4 {offsets = [0, 8], sizes = [4, 1], strides = [1, 1]} : vector<4x36xf32> to vector<4x1xf32>
    %70 = vector.extract_strided_slice %68 {offsets = [0, 0], sizes = [1, 256], strides = [1, 1]} : vector<4x256xf32> to vector<1x256xf32>
    %71 = vector.broadcast %69 : vector<4x1xf32> to vector<4x256xf32>
    %72 = vector.broadcast %70 : vector<1x256xf32> to vector<4x256xf32>
    %73 = arith.mulf %71, %72 : vector<4x256xf32>
    %74 = arith.addf %63, %73 : vector<4x256xf32>
    %75 = vector.extract_strided_slice %4 {offsets = [0, 9], sizes = [4, 1], strides = [1, 1]} : vector<4x36xf32> to vector<4x1xf32>
    %76 = vector.extract_strided_slice %68 {offsets = [1, 0], sizes = [1, 256], strides = [1, 1]} : vector<4x256xf32> to vector<1x256xf32>
    %77 = vector.broadcast %75 : vector<4x1xf32> to vector<4x256xf32>
    %78 = vector.broadcast %76 : vector<1x256xf32> to vector<4x256xf32>
    %79 = arith.mulf %77, %78 : vector<4x256xf32>
    %80 = arith.addf %74, %79 : vector<4x256xf32>
    %81 = vector.extract_strided_slice %4 {offsets = [0, 10], sizes = [4, 1], strides = [1, 1]} : vector<4x36xf32> to vector<4x1xf32>
    %82 = vector.extract_strided_slice %68 {offsets = [2, 0], sizes = [1, 256], strides = [1, 1]} : vector<4x256xf32> to vector<1x256xf32>
    %83 = vector.broadcast %81 : vector<4x1xf32> to vector<4x256xf32>
    %84 = vector.broadcast %82 : vector<1x256xf32> to vector<4x256xf32>
    %85 = arith.mulf %83, %84 : vector<4x256xf32>
    %86 = arith.addf %80, %85 : vector<4x256xf32>
    %87 = vector.extract_strided_slice %4 {offsets = [0, 11], sizes = [4, 1], strides = [1, 1]} : vector<4x36xf32> to vector<4x1xf32>
    %88 = vector.extract_strided_slice %68 {offsets = [3, 0], sizes = [1, 256], strides = [1, 1]} : vector<4x256xf32> to vector<1x256xf32>
    %89 = vector.broadcast %87 : vector<4x1xf32> to vector<4x256xf32>
    %90 = vector.broadcast %88 : vector<1x256xf32> to vector<4x256xf32>
    %91 = arith.mulf %89, %90 : vector<4x256xf32>
    %92 = arith.addf %86, %91 : vector<4x256xf32>
    %c1_i32 = arith.constant 1 : i32
    %93 = tpu.dynamic_rotate %1 by %c1_i32 dim 1 : vector<4x256xf32>, i32 -> vector<4x256xf32>
    %c0_17 = arith.constant 0 : index
    %c3 = arith.constant 3 : index
    %c0_18 = arith.constant 0 : index
    %c0_19 = arith.constant 0 : index
    %94 = vector.load %arg5[%c0_17, %c3, %c0_18, %c0_19] : memref<3x9x1x256xf32, #tpu.memory_space<vmem>>, vector<1x1x1x256xf32>
    %95 = vector.shape_cast %94 : vector<1x1x1x256xf32> to vector<1x256xf32>
    %96 = vector.broadcast %95 : vector<1x256xf32> to vector<4x256xf32>
    %97 = arith.mulf %93, %96 : vector<4x256xf32>
    %98 = vector.extract_strided_slice %4 {offsets = [0, 12], sizes = [4, 1], strides = [1, 1]} : vector<4x36xf32> to vector<4x1xf32>
    %99 = vector.extract_strided_slice %97 {offsets = [0, 0], sizes = [1, 256], strides = [1, 1]} : vector<4x256xf32> to vector<1x256xf32>
    %100 = vector.broadcast %98 : vector<4x1xf32> to vector<4x256xf32>
    %101 = vector.broadcast %99 : vector<1x256xf32> to vector<4x256xf32>
    %102 = arith.mulf %100, %101 : vector<4x256xf32>
    %103 = arith.addf %92, %102 : vector<4x256xf32>
    %104 = vector.extract_strided_slice %4 {offsets = [0, 13], sizes = [4, 1], strides = [1, 1]} : vector<4x36xf32> to vector<4x1xf32>
    %105 = vector.extract_strided_slice %97 {offsets = [1, 0], sizes = [1, 256], strides = [1, 1]} : vector<4x256xf32> to vector<1x256xf32>
    %106 = vector.broadcast %104 : vector<4x1xf32> to vector<4x256xf32>
    %107 = vector.broadcast %105 : vector<1x256xf32> to vector<4x256xf32>
    %108 = arith.mulf %106, %107 : vector<4x256xf32>
    %109 = arith.addf %103, %108 : vector<4x256xf32>
    %110 = vector.extract_strided_slice %4 {offsets = [0, 14], sizes = [4, 1], strides = [1, 1]} : vector<4x36xf32> to vector<4x1xf32>
    %111 = vector.extract_strided_slice %97 {offsets = [2, 0], sizes = [1, 256], strides = [1, 1]} : vector<4x256xf32> to vector<1x256xf32>
    %112 = vector.broadcast %110 : vector<4x1xf32> to vector<4x256xf32>
    %113 = vector.broadcast %111 : vector<1x256xf32> to vector<4x256xf32>
    %114 = arith.mulf %112, %113 : vector<4x256xf32>
    %115 = arith.addf %109, %114 : vector<4x256xf32>
    %116 = vector.extract_strided_slice %4 {offsets = [0, 15], sizes = [4, 1], strides = [1, 1]} : vector<4x36xf32> to vector<4x1xf32>
    %117 = vector.extract_strided_slice %97 {offsets = [3, 0], sizes = [1, 256], strides = [1, 1]} : vector<4x256xf32> to vector<1x256xf32>
    %118 = vector.broadcast %116 : vector<4x1xf32> to vector<4x256xf32>
    %119 = vector.broadcast %117 : vector<1x256xf32> to vector<4x256xf32>
    %120 = arith.mulf %118, %119 : vector<4x256xf32>
    %121 = arith.addf %115, %120 : vector<4x256xf32>
    %122 = vector.extract_strided_slice %4 {offsets = [0, 16], sizes = [4, 1], strides = [1, 1]} : vector<4x36xf32> to vector<4x1xf32>
    %123 = vector.extract_strided_slice %1 {offsets = [0, 0], sizes = [1, 256], strides = [1, 1]} : vector<4x256xf32> to vector<1x256xf32>
    %124 = vector.broadcast %122 : vector<4x1xf32> to vector<4x256xf32>
    %125 = vector.broadcast %123 : vector<1x256xf32> to vector<4x256xf32>
    %126 = arith.mulf %124, %125 : vector<4x256xf32>
    %127 = arith.addf %121, %126 : vector<4x256xf32>
    %128 = vector.extract_strided_slice %4 {offsets = [0, 17], sizes = [4, 1], strides = [1, 1]} : vector<4x36xf32> to vector<4x1xf32>
    %129 = vector.extract_strided_slice %1 {offsets = [1, 0], sizes = [1, 256], strides = [1, 1]} : vector<4x256xf32> to vector<1x256xf32>
    %130 = vector.broadcast %128 : vector<4x1xf32> to vector<4x256xf32>
    %131 = vector.broadcast %129 : vector<1x256xf32> to vector<4x256xf32>
    %132 = arith.mulf %130, %131 : vector<4x256xf32>
    %133 = arith.addf %127, %132 : vector<4x256xf32>
    %134 = vector.extract_strided_slice %4 {offsets = [0, 18], sizes = [4, 1], strides = [1, 1]} : vector<4x36xf32> to vector<4x1xf32>
    %135 = vector.extract_strided_slice %1 {offsets = [2, 0], sizes = [1, 256], strides = [1, 1]} : vector<4x256xf32> to vector<1x256xf32>
    %136 = vector.broadcast %134 : vector<4x1xf32> to vector<4x256xf32>
    %137 = vector.broadcast %135 : vector<1x256xf32> to vector<4x256xf32>
    %138 = arith.mulf %136, %137 : vector<4x256xf32>
    %139 = arith.addf %133, %138 : vector<4x256xf32>
    %140 = vector.extract_strided_slice %4 {offsets = [0, 19], sizes = [4, 1], strides = [1, 1]} : vector<4x36xf32> to vector<4x1xf32>
    %141 = vector.extract_strided_slice %1 {offsets = [3, 0], sizes = [1, 256], strides = [1, 1]} : vector<4x256xf32> to vector<1x256xf32>
    %142 = vector.broadcast %140 : vector<4x1xf32> to vector<4x256xf32>
    %143 = vector.broadcast %141 : vector<1x256xf32> to vector<4x256xf32>
    %144 = arith.mulf %142, %143 : vector<4x256xf32>
    %145 = arith.addf %139, %144 : vector<4x256xf32>
    %c255_i32 = arith.constant 255 : i32
    %146 = tpu.dynamic_rotate %1 by %c255_i32 dim 1 : vector<4x256xf32>, i32 -> vector<4x256xf32>
    %c0_20 = arith.constant 0 : index
    %c5 = arith.constant 5 : index
    %c0_21 = arith.constant 0 : index
    %c0_22 = arith.constant 0 : index
    %147 = vector.load %arg5[%c0_20, %c5, %c0_21, %c0_22] : memref<3x9x1x256xf32, #tpu.memory_space<vmem>>, vector<1x1x1x256xf32>
    %148 = vector.shape_cast %147 : vector<1x1x1x256xf32> to vector<1x256xf32>
    %149 = vector.broadcast %148 : vector<1x256xf32> to vector<4x256xf32>
    %150 = arith.mulf %146, %149 : vector<4x256xf32>
    %151 = vector.extract_strided_slice %4 {offsets = [0, 20], sizes = [4, 1], strides = [1, 1]} : vector<4x36xf32> to vector<4x1xf32>
    %152 = vector.extract_strided_slice %150 {offsets = [0, 0], sizes = [1, 256], strides = [1, 1]} : vector<4x256xf32> to vector<1x256xf32>
    %153 = vector.broadcast %151 : vector<4x1xf32> to vector<4x256xf32>
    %154 = vector.broadcast %152 : vector<1x256xf32> to vector<4x256xf32>
    %155 = arith.mulf %153, %154 : vector<4x256xf32>
    %156 = arith.addf %145, %155 : vector<4x256xf32>
    %157 = vector.extract_strided_slice %4 {offsets = [0, 21], sizes = [4, 1], strides = [1, 1]} : vector<4x36xf32> to vector<4x1xf32>
    %158 = vector.extract_strided_slice %150 {offsets = [1, 0], sizes = [1, 256], strides = [1, 1]} : vector<4x256xf32> to vector<1x256xf32>
    %159 = vector.broadcast %157 : vector<4x1xf32> to vector<4x256xf32>
    %160 = vector.broadcast %158 : vector<1x256xf32> to vector<4x256xf32>
    %161 = arith.mulf %159, %160 : vector<4x256xf32>
    %162 = arith.addf %156, %161 : vector<4x256xf32>
    %163 = vector.extract_strided_slice %4 {offsets = [0, 22], sizes = [4, 1], strides = [1, 1]} : vector<4x36xf32> to vector<4x1xf32>
    %164 = vector.extract_strided_slice %150 {offsets = [2, 0], sizes = [1, 256], strides = [1, 1]} : vector<4x256xf32> to vector<1x256xf32>
    %165 = vector.broadcast %163 : vector<4x1xf32> to vector<4x256xf32>
    %166 = vector.broadcast %164 : vector<1x256xf32> to vector<4x256xf32>
    %167 = arith.mulf %165, %166 : vector<4x256xf32>
    %168 = arith.addf %162, %167 : vector<4x256xf32>
    %169 = vector.extract_strided_slice %4 {offsets = [0, 23], sizes = [4, 1], strides = [1, 1]} : vector<4x36xf32> to vector<4x1xf32>
    %170 = vector.extract_strided_slice %150 {offsets = [3, 0], sizes = [1, 256], strides = [1, 1]} : vector<4x256xf32> to vector<1x256xf32>
    %171 = vector.broadcast %169 : vector<4x1xf32> to vector<4x256xf32>
    %172 = vector.broadcast %170 : vector<1x256xf32> to vector<4x256xf32>
    %173 = arith.mulf %171, %172 : vector<4x256xf32>
    %174 = arith.addf %168, %173 : vector<4x256xf32>
    %c241_i32 = arith.constant 241 : i32
    %175 = tpu.dynamic_rotate %1 by %c241_i32 dim 1 : vector<4x256xf32>, i32 -> vector<4x256xf32>
    %c0_23 = arith.constant 0 : index
    %c6 = arith.constant 6 : index
    %c0_24 = arith.constant 0 : index
    %c0_25 = arith.constant 0 : index
    %176 = vector.load %arg5[%c0_23, %c6, %c0_24, %c0_25] : memref<3x9x1x256xf32, #tpu.memory_space<vmem>>, vector<1x1x1x256xf32>
    %177 = vector.shape_cast %176 : vector<1x1x1x256xf32> to vector<1x256xf32>
    %178 = vector.broadcast %177 : vector<1x256xf32> to vector<4x256xf32>
    %179 = arith.mulf %175, %178 : vector<4x256xf32>
    %180 = vector.extract_strided_slice %4 {offsets = [0, 24], sizes = [4, 1], strides = [1, 1]} : vector<4x36xf32> to vector<4x1xf32>
    %181 = vector.extract_strided_slice %179 {offsets = [0, 0], sizes = [1, 256], strides = [1, 1]} : vector<4x256xf32> to vector<1x256xf32>
    %182 = vector.broadcast %180 : vector<4x1xf32> to vector<4x256xf32>
    %183 = vector.broadcast %181 : vector<1x256xf32> to vector<4x256xf32>
    %184 = arith.mulf %182, %183 : vector<4x256xf32>
    %185 = arith.addf %174, %184 : vector<4x256xf32>
    %186 = vector.extract_strided_slice %4 {offsets = [0, 25], sizes = [4, 1], strides = [1, 1]} : vector<4x36xf32> to vector<4x1xf32>
    %187 = vector.extract_strided_slice %179 {offsets = [1, 0], sizes = [1, 256], strides = [1, 1]} : vector<4x256xf32> to vector<1x256xf32>
    %188 = vector.broadcast %186 : vector<4x1xf32> to vector<4x256xf32>
    %189 = vector.broadcast %187 : vector<1x256xf32> to vector<4x256xf32>
    %190 = arith.mulf %188, %189 : vector<4x256xf32>
    %191 = arith.addf %185, %190 : vector<4x256xf32>
    %192 = vector.extract_strided_slice %4 {offsets = [0, 26], sizes = [4, 1], strides = [1, 1]} : vector<4x36xf32> to vector<4x1xf32>
    %193 = vector.extract_strided_slice %179 {offsets = [2, 0], sizes = [1, 256], strides = [1, 1]} : vector<4x256xf32> to vector<1x256xf32>
    %194 = vector.broadcast %192 : vector<4x1xf32> to vector<4x256xf32>
    %195 = vector.broadcast %193 : vector<1x256xf32> to vector<4x256xf32>
    %196 = arith.mulf %194, %195 : vector<4x256xf32>
    %197 = arith.addf %191, %196 : vector<4x256xf32>
    %198 = vector.extract_strided_slice %4 {offsets = [0, 27], sizes = [4, 1], strides = [1, 1]} : vector<4x36xf32> to vector<4x1xf32>
    %199 = vector.extract_strided_slice %179 {offsets = [3, 0], sizes = [1, 256], strides = [1, 1]} : vector<4x256xf32> to vector<1x256xf32>
    %200 = vector.broadcast %198 : vector<4x1xf32> to vector<4x256xf32>
    %201 = vector.broadcast %199 : vector<1x256xf32> to vector<4x256xf32>
    %202 = arith.mulf %200, %201 : vector<4x256xf32>
    %203 = arith.addf %197, %202 : vector<4x256xf32>
    %c240_i32 = arith.constant 240 : i32
    %204 = tpu.dynamic_rotate %1 by %c240_i32 dim 1 : vector<4x256xf32>, i32 -> vector<4x256xf32>
    %c0_26 = arith.constant 0 : index
    %c7 = arith.constant 7 : index
    %c0_27 = arith.constant 0 : index
    %c0_28 = arith.constant 0 : index
    %205 = vector.load %arg5[%c0_26, %c7, %c0_27, %c0_28] : memref<3x9x1x256xf32, #tpu.memory_space<vmem>>, vector<1x1x1x256xf32>
    %206 = vector.shape_cast %205 : vector<1x1x1x256xf32> to vector<1x256xf32>
    %207 = vector.broadcast %206 : vector<1x256xf32> to vector<4x256xf32>
    %208 = arith.mulf %204, %207 : vector<4x256xf32>
    %209 = vector.extract_strided_slice %4 {offsets = [0, 28], sizes = [4, 1], strides = [1, 1]} : vector<4x36xf32> to vector<4x1xf32>
    %210 = vector.extract_strided_slice %208 {offsets = [0, 0], sizes = [1, 256], strides = [1, 1]} : vector<4x256xf32> to vector<1x256xf32>
    %211 = vector.broadcast %209 : vector<4x1xf32> to vector<4x256xf32>
    %212 = vector.broadcast %210 : vector<1x256xf32> to vector<4x256xf32>
    %213 = arith.mulf %211, %212 : vector<4x256xf32>
    %214 = arith.addf %203, %213 : vector<4x256xf32>
    %215 = vector.extract_strided_slice %4 {offsets = [0, 29], sizes = [4, 1], strides = [1, 1]} : vector<4x36xf32> to vector<4x1xf32>
    %216 = vector.extract_strided_slice %208 {offsets = [1, 0], sizes = [1, 256], strides = [1, 1]} : vector<4x256xf32> to vector<1x256xf32>
    %217 = vector.broadcast %215 : vector<4x1xf32> to vector<4x256xf32>
    %218 = vector.broadcast %216 : vector<1x256xf32> to vector<4x256xf32>
    %219 = arith.mulf %217, %218 : vector<4x256xf32>
    %220 = arith.addf %214, %219 : vector<4x256xf32>
    %221 = vector.extract_strided_slice %4 {offsets = [0, 30], sizes = [4, 1], strides = [1, 1]} : vector<4x36xf32> to vector<4x1xf32>
    %222 = vector.extract_strided_slice %208 {offsets = [2, 0], sizes = [1, 256], strides = [1, 1]} : vector<4x256xf32> to vector<1x256xf32>
    %223 = vector.broadcast %221 : vector<4x1xf32> to vector<4x256xf32>
    %224 = vector.broadcast %222 : vector<1x256xf32> to vector<4x256xf32>
    %225 = arith.mulf %223, %224 : vector<4x256xf32>
    %226 = arith.addf %220, %225 : vector<4x256xf32>
    %227 = vector.extract_strided_slice %4 {offsets = [0, 31], sizes = [4, 1], strides = [1, 1]} : vector<4x36xf32> to vector<4x1xf32>
    %228 = vector.extract_strided_slice %208 {offsets = [3, 0], sizes = [1, 256], strides = [1, 1]} : vector<4x256xf32> to vector<1x256xf32>
    %229 = vector.broadcast %227 : vector<4x1xf32> to vector<4x256xf32>
    %230 = vector.broadcast %228 : vector<1x256xf32> to vector<4x256xf32>
    %231 = arith.mulf %229, %230 : vector<4x256xf32>
    %232 = arith.addf %226, %231 : vector<4x256xf32>
    %c239_i32 = arith.constant 239 : i32
    %233 = tpu.dynamic_rotate %1 by %c239_i32 dim 1 : vector<4x256xf32>, i32 -> vector<4x256xf32>
    %c0_29 = arith.constant 0 : index
    %c8 = arith.constant 8 : index
    %c0_30 = arith.constant 0 : index
    %c0_31 = arith.constant 0 : index
    %234 = vector.load %arg5[%c0_29, %c8, %c0_30, %c0_31] : memref<3x9x1x256xf32, #tpu.memory_space<vmem>>, vector<1x1x1x256xf32>
    %235 = vector.shape_cast %234 : vector<1x1x1x256xf32> to vector<1x256xf32>
    %236 = vector.broadcast %235 : vector<1x256xf32> to vector<4x256xf32>
    %237 = arith.mulf %233, %236 : vector<4x256xf32>
    %238 = vector.extract_strided_slice %4 {offsets = [0, 32], sizes = [4, 1], strides = [1, 1]} : vector<4x36xf32> to vector<4x1xf32>
    %239 = vector.extract_strided_slice %237 {offsets = [0, 0], sizes = [1, 256], strides = [1, 1]} : vector<4x256xf32> to vector<1x256xf32>
    %240 = vector.broadcast %238 : vector<4x1xf32> to vector<4x256xf32>
    %241 = vector.broadcast %239 : vector<1x256xf32> to vector<4x256xf32>
    %242 = arith.mulf %240, %241 : vector<4x256xf32>
    %243 = arith.addf %232, %242 : vector<4x256xf32>
    %244 = vector.extract_strided_slice %4 {offsets = [0, 33], sizes = [4, 1], strides = [1, 1]} : vector<4x36xf32> to vector<4x1xf32>
    %245 = vector.extract_strided_slice %237 {offsets = [1, 0], sizes = [1, 256], strides = [1, 1]} : vector<4x256xf32> to vector<1x256xf32>
    %246 = vector.broadcast %244 : vector<4x1xf32> to vector<4x256xf32>
    %247 = vector.broadcast %245 : vector<1x256xf32> to vector<4x256xf32>
    %248 = arith.mulf %246, %247 : vector<4x256xf32>
    %249 = arith.addf %243, %248 : vector<4x256xf32>
    %250 = vector.extract_strided_slice %4 {offsets = [0, 34], sizes = [4, 1], strides = [1, 1]} : vector<4x36xf32> to vector<4x1xf32>
    %251 = vector.extract_strided_slice %237 {offsets = [2, 0], sizes = [1, 256], strides = [1, 1]} : vector<4x256xf32> to vector<1x256xf32>
    %252 = vector.broadcast %250 : vector<4x1xf32> to vector<4x256xf32>
    %253 = vector.broadcast %251 : vector<1x256xf32> to vector<4x256xf32>
    %254 = arith.mulf %252, %253 : vector<4x256xf32>
    %255 = arith.addf %249, %254 : vector<4x256xf32>
    %256 = vector.extract_strided_slice %4 {offsets = [0, 35], sizes = [4, 1], strides = [1, 1]} : vector<4x36xf32> to vector<4x1xf32>
    %257 = vector.extract_strided_slice %237 {offsets = [3, 0], sizes = [1, 256], strides = [1, 1]} : vector<4x256xf32> to vector<1x256xf32>
    %258 = vector.broadcast %256 : vector<4x1xf32> to vector<4x256xf32>
    %259 = vector.broadcast %257 : vector<1x256xf32> to vector<4x256xf32>
    %260 = arith.mulf %258, %259 : vector<4x256xf32>
    %261 = arith.addf %255, %260 : vector<4x256xf32>
    %c0_32 = arith.constant 0 : index
    %c0_33 = arith.constant 0 : index
    %c0_34 = arith.constant 0 : index
    %262 = vector.load %arg3[%c0_32, %c0_33, %c0_34] : memref<4x4x1xf32, #tpu.memory_space<vmem>>, vector<1x4x1xf32>
    %263 = vector.shape_cast %262 : vector<1x4x1xf32> to vector<4x1xf32>
    %264 = vector.broadcast %263 : vector<4x1xf32> to vector<4x256xf32>
    %265 = arith.addf %261, %264 : vector<4x256xf32>
    %cst_35 = arith.constant 0.000000e+00 : f32
    %266 = vector.broadcast %cst_35 : f32 to vector<4x256xf32>
    %267 = arith.maximumf %265, %266 : vector<4x256xf32>
    %268 = arith.addf %1, %267 : vector<4x256xf32>
    %c1_36 = arith.constant 1 : index
    %c0_37 = arith.constant 0 : index
    %c0_38 = arith.constant 0 : index
    %269 = vector.load %arg2[%c1_36, %c0_37, %c0_38] : memref<3x4x36xf32, #tpu.memory_space<vmem>>, vector<1x4x36xf32>
    %270 = vector.shape_cast %269 : vector<1x4x36xf32> to vector<4x36xf32>
    %cst_39 = arith.constant 0.000000e+00 : f32
    %271 = vector.broadcast %cst_39 : f32 to vector<4x256xf32>
    %c51_i32 = arith.constant 51 : i32
    %272 = tpu.dynamic_rotate %1 by %c51_i32 dim 1 : vector<4x256xf32>, i32 -> vector<4x256xf32>
    %c1_40 = arith.constant 1 : index
    %c0_41 = arith.constant 0 : index
    %c0_42 = arith.constant 0 : index
    %c0_43 = arith.constant 0 : index
    %273 = vector.load %arg5[%c1_40, %c0_41, %c0_42, %c0_43] : memref<3x9x1x256xf32, #tpu.memory_space<vmem>>, vector<1x1x1x256xf32>
    %274 = vector.shape_cast %273 : vector<1x1x1x256xf32> to vector<1x256xf32>
    %275 = vector.broadcast %274 : vector<1x256xf32> to vector<4x256xf32>
    %276 = arith.mulf %272, %275 : vector<4x256xf32>
    %277 = vector.extract_strided_slice %270 {offsets = [0, 0], sizes = [4, 1], strides = [1, 1]} : vector<4x36xf32> to vector<4x1xf32>
    %278 = vector.extract_strided_slice %276 {offsets = [0, 0], sizes = [1, 256], strides = [1, 1]} : vector<4x256xf32> to vector<1x256xf32>
    %279 = vector.broadcast %277 : vector<4x1xf32> to vector<4x256xf32>
    %280 = vector.broadcast %278 : vector<1x256xf32> to vector<4x256xf32>
    %281 = arith.mulf %279, %280 : vector<4x256xf32>
    %282 = arith.addf %271, %281 : vector<4x256xf32>
    %283 = vector.extract_strided_slice %270 {offsets = [0, 1], sizes = [4, 1], strides = [1, 1]} : vector<4x36xf32> to vector<4x1xf32>
    %284 = vector.extract_strided_slice %276 {offsets = [1, 0], sizes = [1, 256], strides = [1, 1]} : vector<4x256xf32> to vector<1x256xf32>
    %285 = vector.broadcast %283 : vector<4x1xf32> to vector<4x256xf32>
    %286 = vector.broadcast %284 : vector<1x256xf32> to vector<4x256xf32>
    %287 = arith.mulf %285, %286 : vector<4x256xf32>
    %288 = arith.addf %282, %287 : vector<4x256xf32>
    %289 = vector.extract_strided_slice %270 {offsets = [0, 2], sizes = [4, 1], strides = [1, 1]} : vector<4x36xf32> to vector<4x1xf32>
    %290 = vector.extract_strided_slice %276 {offsets = [2, 0], sizes = [1, 256], strides = [1, 1]} : vector<4x256xf32> to vector<1x256xf32>
    %291 = vector.broadcast %289 : vector<4x1xf32> to vector<4x256xf32>
    %292 = vector.broadcast %290 : vector<1x256xf32> to vector<4x256xf32>
    %293 = arith.mulf %291, %292 : vector<4x256xf32>
    %294 = arith.addf %288, %293 : vector<4x256xf32>
    %295 = vector.extract_strided_slice %270 {offsets = [0, 3], sizes = [4, 1], strides = [1, 1]} : vector<4x36xf32> to vector<4x1xf32>
    %296 = vector.extract_strided_slice %276 {offsets = [3, 0], sizes = [1, 256], strides = [1, 1]} : vector<4x256xf32> to vector<1x256xf32>
    %297 = vector.broadcast %295 : vector<4x1xf32> to vector<4x256xf32>
    %298 = vector.broadcast %296 : vector<1x256xf32> to vector<4x256xf32>
    %299 = arith.mulf %297, %298 : vector<4x256xf32>
    %300 = arith.addf %294, %299 : vector<4x256xf32>
    %c48_i32 = arith.constant 48 : i32
    %301 = tpu.dynamic_rotate %1 by %c48_i32 dim 1 : vector<4x256xf32>, i32 -> vector<4x256xf32>
    %c1_44 = arith.constant 1 : index
    %c1_45 = arith.constant 1 : index
    %c0_46 = arith.constant 0 : index
    %c0_47 = arith.constant 0 : index
    %302 = vector.load %arg5[%c1_44, %c1_45, %c0_46, %c0_47] : memref<3x9x1x256xf32, #tpu.memory_space<vmem>>, vector<1x1x1x256xf32>
    %303 = vector.shape_cast %302 : vector<1x1x1x256xf32> to vector<1x256xf32>
    %304 = vector.broadcast %303 : vector<1x256xf32> to vector<4x256xf32>
    %305 = arith.mulf %301, %304 : vector<4x256xf32>
    %306 = vector.extract_strided_slice %270 {offsets = [0, 4], sizes = [4, 1], strides = [1, 1]} : vector<4x36xf32> to vector<4x1xf32>
    %307 = vector.extract_strided_slice %305 {offsets = [0, 0], sizes = [1, 256], strides = [1, 1]} : vector<4x256xf32> to vector<1x256xf32>
    %308 = vector.broadcast %306 : vector<4x1xf32> to vector<4x256xf32>
    %309 = vector.broadcast %307 : vector<1x256xf32> to vector<4x256xf32>
    %310 = arith.mulf %308, %309 : vector<4x256xf32>
    %311 = arith.addf %300, %310 : vector<4x256xf32>
    %312 = vector.extract_strided_slice %270 {offsets = [0, 5], sizes = [4, 1], strides = [1, 1]} : vector<4x36xf32> to vector<4x1xf32>
    %313 = vector.extract_strided_slice %305 {offsets = [1, 0], sizes = [1, 256], strides = [1, 1]} : vector<4x256xf32> to vector<1x256xf32>
    %314 = vector.broadcast %312 : vector<4x1xf32> to vector<4x256xf32>
    %315 = vector.broadcast %313 : vector<1x256xf32> to vector<4x256xf32>
    %316 = arith.mulf %314, %315 : vector<4x256xf32>
    %317 = arith.addf %311, %316 : vector<4x256xf32>
    %318 = vector.extract_strided_slice %270 {offsets = [0, 6], sizes = [4, 1], strides = [1, 1]} : vector<4x36xf32> to vector<4x1xf32>
    %319 = vector.extract_strided_slice %305 {offsets = [2, 0], sizes = [1, 256], strides = [1, 1]} : vector<4x256xf32> to vector<1x256xf32>
    %320 = vector.broadcast %318 : vector<4x1xf32> to vector<4x256xf32>
    %321 = vector.broadcast %319 : vector<1x256xf32> to vector<4x256xf32>
    %322 = arith.mulf %320, %321 : vector<4x256xf32>
    %323 = arith.addf %317, %322 : vector<4x256xf32>
    %324 = vector.extract_strided_slice %270 {offsets = [0, 7], sizes = [4, 1], strides = [1, 1]} : vector<4x36xf32> to vector<4x1xf32>
    %325 = vector.extract_strided_slice %305 {offsets = [3, 0], sizes = [1, 256], strides = [1, 1]} : vector<4x256xf32> to vector<1x256xf32>
    %326 = vector.broadcast %324 : vector<4x1xf32> to vector<4x256xf32>
    %327 = vector.broadcast %325 : vector<1x256xf32> to vector<4x256xf32>
    %328 = arith.mulf %326, %327 : vector<4x256xf32>
    %329 = arith.addf %323, %328 : vector<4x256xf32>
    %c45_i32 = arith.constant 45 : i32
    %330 = tpu.dynamic_rotate %1 by %c45_i32 dim 1 : vector<4x256xf32>, i32 -> vector<4x256xf32>
    %c1_48 = arith.constant 1 : index
    %c2_49 = arith.constant 2 : index
    %c0_50 = arith.constant 0 : index
    %c0_51 = arith.constant 0 : index
    %331 = vector.load %arg5[%c1_48, %c2_49, %c0_50, %c0_51] : memref<3x9x1x256xf32, #tpu.memory_space<vmem>>, vector<1x1x1x256xf32>
    %332 = vector.shape_cast %331 : vector<1x1x1x256xf32> to vector<1x256xf32>
    %333 = vector.broadcast %332 : vector<1x256xf32> to vector<4x256xf32>
    %334 = arith.mulf %330, %333 : vector<4x256xf32>
    %335 = vector.extract_strided_slice %270 {offsets = [0, 8], sizes = [4, 1], strides = [1, 1]} : vector<4x36xf32> to vector<4x1xf32>
    %336 = vector.extract_strided_slice %334 {offsets = [0, 0], sizes = [1, 256], strides = [1, 1]} : vector<4x256xf32> to vector<1x256xf32>
    %337 = vector.broadcast %335 : vector<4x1xf32> to vector<4x256xf32>
    %338 = vector.broadcast %336 : vector<1x256xf32> to vector<4x256xf32>
    %339 = arith.mulf %337, %338 : vector<4x256xf32>
    %340 = arith.addf %329, %339 : vector<4x256xf32>
    %341 = vector.extract_strided_slice %270 {offsets = [0, 9], sizes = [4, 1], strides = [1, 1]} : vector<4x36xf32> to vector<4x1xf32>
    %342 = vector.extract_strided_slice %334 {offsets = [1, 0], sizes = [1, 256], strides = [1, 1]} : vector<4x256xf32> to vector<1x256xf32>
    %343 = vector.broadcast %341 : vector<4x1xf32> to vector<4x256xf32>
    %344 = vector.broadcast %342 : vector<1x256xf32> to vector<4x256xf32>
    %345 = arith.mulf %343, %344 : vector<4x256xf32>
    %346 = arith.addf %340, %345 : vector<4x256xf32>
    %347 = vector.extract_strided_slice %270 {offsets = [0, 10], sizes = [4, 1], strides = [1, 1]} : vector<4x36xf32> to vector<4x1xf32>
    %348 = vector.extract_strided_slice %334 {offsets = [2, 0], sizes = [1, 256], strides = [1, 1]} : vector<4x256xf32> to vector<1x256xf32>
    %349 = vector.broadcast %347 : vector<4x1xf32> to vector<4x256xf32>
    %350 = vector.broadcast %348 : vector<1x256xf32> to vector<4x256xf32>
    %351 = arith.mulf %349, %350 : vector<4x256xf32>
    %352 = arith.addf %346, %351 : vector<4x256xf32>
    %353 = vector.extract_strided_slice %270 {offsets = [0, 11], sizes = [4, 1], strides = [1, 1]} : vector<4x36xf32> to vector<4x1xf32>
    %354 = vector.extract_strided_slice %334 {offsets = [3, 0], sizes = [1, 256], strides = [1, 1]} : vector<4x256xf32> to vector<1x256xf32>
    %355 = vector.broadcast %353 : vector<4x1xf32> to vector<4x256xf32>
    %356 = vector.broadcast %354 : vector<1x256xf32> to vector<4x256xf32>
    %357 = arith.mulf %355, %356 : vector<4x256xf32>
    %358 = arith.addf %352, %357 : vector<4x256xf32>
    %c3_i32 = arith.constant 3 : i32
    %359 = tpu.dynamic_rotate %1 by %c3_i32 dim 1 : vector<4x256xf32>, i32 -> vector<4x256xf32>
    %c1_52 = arith.constant 1 : index
    %c3_53 = arith.constant 3 : index
    %c0_54 = arith.constant 0 : index
    %c0_55 = arith.constant 0 : index
    %360 = vector.load %arg5[%c1_52, %c3_53, %c0_54, %c0_55] : memref<3x9x1x256xf32, #tpu.memory_space<vmem>>, vector<1x1x1x256xf32>
    %361 = vector.shape_cast %360 : vector<1x1x1x256xf32> to vector<1x256xf32>
    %362 = vector.broadcast %361 : vector<1x256xf32> to vector<4x256xf32>
    %363 = arith.mulf %359, %362 : vector<4x256xf32>
    %364 = vector.extract_strided_slice %270 {offsets = [0, 12], sizes = [4, 1], strides = [1, 1]} : vector<4x36xf32> to vector<4x1xf32>
    %365 = vector.extract_strided_slice %363 {offsets = [0, 0], sizes = [1, 256], strides = [1, 1]} : vector<4x256xf32> to vector<1x256xf32>
    %366 = vector.broadcast %364 : vector<4x1xf32> to vector<4x256xf32>
    %367 = vector.broadcast %365 : vector<1x256xf32> to vector<4x256xf32>
    %368 = arith.mulf %366, %367 : vector<4x256xf32>
    %369 = arith.addf %358, %368 : vector<4x256xf32>
    %370 = vector.extract_strided_slice %270 {offsets = [0, 13], sizes = [4, 1], strides = [1, 1]} : vector<4x36xf32> to vector<4x1xf32>
    %371 = vector.extract_strided_slice %363 {offsets = [1, 0], sizes = [1, 256], strides = [1, 1]} : vector<4x256xf32> to vector<1x256xf32>
    %372 = vector.broadcast %370 : vector<4x1xf32> to vector<4x256xf32>
    %373 = vector.broadcast %371 : vector<1x256xf32> to vector<4x256xf32>
    %374 = arith.mulf %372, %373 : vector<4x256xf32>
    %375 = arith.addf %369, %374 : vector<4x256xf32>
    %376 = vector.extract_strided_slice %270 {offsets = [0, 14], sizes = [4, 1], strides = [1, 1]} : vector<4x36xf32> to vector<4x1xf32>
    %377 = vector.extract_strided_slice %363 {offsets = [2, 0], sizes = [1, 256], strides = [1, 1]} : vector<4x256xf32> to vector<1x256xf32>
    %378 = vector.broadcast %376 : vector<4x1xf32> to vector<4x256xf32>
    %379 = vector.broadcast %377 : vector<1x256xf32> to vector<4x256xf32>
    %380 = arith.mulf %378, %379 : vector<4x256xf32>
    %381 = arith.addf %375, %380 : vector<4x256xf32>
    %382 = vector.extract_strided_slice %270 {offsets = [0, 15], sizes = [4, 1], strides = [1, 1]} : vector<4x36xf32> to vector<4x1xf32>
    %383 = vector.extract_strided_slice %363 {offsets = [3, 0], sizes = [1, 256], strides = [1, 1]} : vector<4x256xf32> to vector<1x256xf32>
    %384 = vector.broadcast %382 : vector<4x1xf32> to vector<4x256xf32>
    %385 = vector.broadcast %383 : vector<1x256xf32> to vector<4x256xf32>
    %386 = arith.mulf %384, %385 : vector<4x256xf32>
    %387 = arith.addf %381, %386 : vector<4x256xf32>
    %388 = vector.extract_strided_slice %270 {offsets = [0, 16], sizes = [4, 1], strides = [1, 1]} : vector<4x36xf32> to vector<4x1xf32>
    %389 = vector.extract_strided_slice %1 {offsets = [0, 0], sizes = [1, 256], strides = [1, 1]} : vector<4x256xf32> to vector<1x256xf32>
    %390 = vector.broadcast %388 : vector<4x1xf32> to vector<4x256xf32>
    %391 = vector.broadcast %389 : vector<1x256xf32> to vector<4x256xf32>
    %392 = arith.mulf %390, %391 : vector<4x256xf32>
    %393 = arith.addf %387, %392 : vector<4x256xf32>
    %394 = vector.extract_strided_slice %270 {offsets = [0, 17], sizes = [4, 1], strides = [1, 1]} : vector<4x36xf32> to vector<4x1xf32>
    %395 = vector.extract_strided_slice %1 {offsets = [1, 0], sizes = [1, 256], strides = [1, 1]} : vector<4x256xf32> to vector<1x256xf32>
    %396 = vector.broadcast %394 : vector<4x1xf32> to vector<4x256xf32>
    %397 = vector.broadcast %395 : vector<1x256xf32> to vector<4x256xf32>
    %398 = arith.mulf %396, %397 : vector<4x256xf32>
    %399 = arith.addf %393, %398 : vector<4x256xf32>
    %400 = vector.extract_strided_slice %270 {offsets = [0, 18], sizes = [4, 1], strides = [1, 1]} : vector<4x36xf32> to vector<4x1xf32>
    %401 = vector.extract_strided_slice %1 {offsets = [2, 0], sizes = [1, 256], strides = [1, 1]} : vector<4x256xf32> to vector<1x256xf32>
    %402 = vector.broadcast %400 : vector<4x1xf32> to vector<4x256xf32>
    %403 = vector.broadcast %401 : vector<1x256xf32> to vector<4x256xf32>
    %404 = arith.mulf %402, %403 : vector<4x256xf32>
    %405 = arith.addf %399, %404 : vector<4x256xf32>
    %406 = vector.extract_strided_slice %270 {offsets = [0, 19], sizes = [4, 1], strides = [1, 1]} : vector<4x36xf32> to vector<4x1xf32>
    %407 = vector.extract_strided_slice %1 {offsets = [3, 0], sizes = [1, 256], strides = [1, 1]} : vector<4x256xf32> to vector<1x256xf32>
    %408 = vector.broadcast %406 : vector<4x1xf32> to vector<4x256xf32>
    %409 = vector.broadcast %407 : vector<1x256xf32> to vector<4x256xf32>
    %410 = arith.mulf %408, %409 : vector<4x256xf32>
    %411 = arith.addf %405, %410 : vector<4x256xf32>
    %c253_i32 = arith.constant 253 : i32
    %412 = tpu.dynamic_rotate %1 by %c253_i32 dim 1 : vector<4x256xf32>, i32 -> vector<4x256xf32>
    %c1_56 = arith.constant 1 : index
    %c5_57 = arith.constant 5 : index
    %c0_58 = arith.constant 0 : index
    %c0_59 = arith.constant 0 : index
    %413 = vector.load %arg5[%c1_56, %c5_57, %c0_58, %c0_59] : memref<3x9x1x256xf32, #tpu.memory_space<vmem>>, vector<1x1x1x256xf32>
    %414 = vector.shape_cast %413 : vector<1x1x1x256xf32> to vector<1x256xf32>
    %415 = vector.broadcast %414 : vector<1x256xf32> to vector<4x256xf32>
    %416 = arith.mulf %412, %415 : vector<4x256xf32>
    %417 = vector.extract_strided_slice %270 {offsets = [0, 20], sizes = [4, 1], strides = [1, 1]} : vector<4x36xf32> to vector<4x1xf32>
    %418 = vector.extract_strided_slice %416 {offsets = [0, 0], sizes = [1, 256], strides = [1, 1]} : vector<4x256xf32> to vector<1x256xf32>
    %419 = vector.broadcast %417 : vector<4x1xf32> to vector<4x256xf32>
    %420 = vector.broadcast %418 : vector<1x256xf32> to vector<4x256xf32>
    %421 = arith.mulf %419, %420 : vector<4x256xf32>
    %422 = arith.addf %411, %421 : vector<4x256xf32>
    %423 = vector.extract_strided_slice %270 {offsets = [0, 21], sizes = [4, 1], strides = [1, 1]} : vector<4x36xf32> to vector<4x1xf32>
    %424 = vector.extract_strided_slice %416 {offsets = [1, 0], sizes = [1, 256], strides = [1, 1]} : vector<4x256xf32> to vector<1x256xf32>
    %425 = vector.broadcast %423 : vector<4x1xf32> to vector<4x256xf32>
    %426 = vector.broadcast %424 : vector<1x256xf32> to vector<4x256xf32>
    %427 = arith.mulf %425, %426 : vector<4x256xf32>
    %428 = arith.addf %422, %427 : vector<4x256xf32>
    %429 = vector.extract_strided_slice %270 {offsets = [0, 22], sizes = [4, 1], strides = [1, 1]} : vector<4x36xf32> to vector<4x1xf32>
    %430 = vector.extract_strided_slice %416 {offsets = [2, 0], sizes = [1, 256], strides = [1, 1]} : vector<4x256xf32> to vector<1x256xf32>
    %431 = vector.broadcast %429 : vector<4x1xf32> to vector<4x256xf32>
    %432 = vector.broadcast %430 : vector<1x256xf32> to vector<4x256xf32>
    %433 = arith.mulf %431, %432 : vector<4x256xf32>
    %434 = arith.addf %428, %433 : vector<4x256xf32>
    %435 = vector.extract_strided_slice %270 {offsets = [0, 23], sizes = [4, 1], strides = [1, 1]} : vector<4x36xf32> to vector<4x1xf32>
    %436 = vector.extract_strided_slice %416 {offsets = [3, 0], sizes = [1, 256], strides = [1, 1]} : vector<4x256xf32> to vector<1x256xf32>
    %437 = vector.broadcast %435 : vector<4x1xf32> to vector<4x256xf32>
    %438 = vector.broadcast %436 : vector<1x256xf32> to vector<4x256xf32>
    %439 = arith.mulf %437, %438 : vector<4x256xf32>
    %440 = arith.addf %434, %439 : vector<4x256xf32>
    %c211_i32 = arith.constant 211 : i32
    %441 = tpu.dynamic_rotate %1 by %c211_i32 dim 1 : vector<4x256xf32>, i32 -> vector<4x256xf32>
    %c1_60 = arith.constant 1 : index
    %c6_61 = arith.constant 6 : index
    %c0_62 = arith.constant 0 : index
    %c0_63 = arith.constant 0 : index
    %442 = vector.load %arg5[%c1_60, %c6_61, %c0_62, %c0_63] : memref<3x9x1x256xf32, #tpu.memory_space<vmem>>, vector<1x1x1x256xf32>
    %443 = vector.shape_cast %442 : vector<1x1x1x256xf32> to vector<1x256xf32>
    %444 = vector.broadcast %443 : vector<1x256xf32> to vector<4x256xf32>
    %445 = arith.mulf %441, %444 : vector<4x256xf32>
    %446 = vector.extract_strided_slice %270 {offsets = [0, 24], sizes = [4, 1], strides = [1, 1]} : vector<4x36xf32> to vector<4x1xf32>
    %447 = vector.extract_strided_slice %445 {offsets = [0, 0], sizes = [1, 256], strides = [1, 1]} : vector<4x256xf32> to vector<1x256xf32>
    %448 = vector.broadcast %446 : vector<4x1xf32> to vector<4x256xf32>
    %449 = vector.broadcast %447 : vector<1x256xf32> to vector<4x256xf32>
    %450 = arith.mulf %448, %449 : vector<4x256xf32>
    %451 = arith.addf %440, %450 : vector<4x256xf32>
    %452 = vector.extract_strided_slice %270 {offsets = [0, 25], sizes = [4, 1], strides = [1, 1]} : vector<4x36xf32> to vector<4x1xf32>
    %453 = vector.extract_strided_slice %445 {offsets = [1, 0], sizes = [1, 256], strides = [1, 1]} : vector<4x256xf32> to vector<1x256xf32>
    %454 = vector.broadcast %452 : vector<4x1xf32> to vector<4x256xf32>
    %455 = vector.broadcast %453 : vector<1x256xf32> to vector<4x256xf32>
    %456 = arith.mulf %454, %455 : vector<4x256xf32>
    %457 = arith.addf %451, %456 : vector<4x256xf32>
    %458 = vector.extract_strided_slice %270 {offsets = [0, 26], sizes = [4, 1], strides = [1, 1]} : vector<4x36xf32> to vector<4x1xf32>
    %459 = vector.extract_strided_slice %445 {offsets = [2, 0], sizes = [1, 256], strides = [1, 1]} : vector<4x256xf32> to vector<1x256xf32>
    %460 = vector.broadcast %458 : vector<4x1xf32> to vector<4x256xf32>
    %461 = vector.broadcast %459 : vector<1x256xf32> to vector<4x256xf32>
    %462 = arith.mulf %460, %461 : vector<4x256xf32>
    %463 = arith.addf %457, %462 : vector<4x256xf32>
    %464 = vector.extract_strided_slice %270 {offsets = [0, 27], sizes = [4, 1], strides = [1, 1]} : vector<4x36xf32> to vector<4x1xf32>
    %465 = vector.extract_strided_slice %445 {offsets = [3, 0], sizes = [1, 256], strides = [1, 1]} : vector<4x256xf32> to vector<1x256xf32>
    %466 = vector.broadcast %464 : vector<4x1xf32> to vector<4x256xf32>
    %467 = vector.broadcast %465 : vector<1x256xf32> to vector<4x256xf32>
    %468 = arith.mulf %466, %467 : vector<4x256xf32>
    %469 = arith.addf %463, %468 : vector<4x256xf32>
    %c208_i32 = arith.constant 208 : i32
    %470 = tpu.dynamic_rotate %1 by %c208_i32 dim 1 : vector<4x256xf32>, i32 -> vector<4x256xf32>
    %c1_64 = arith.constant 1 : index
    %c7_65 = arith.constant 7 : index
    %c0_66 = arith.constant 0 : index
    %c0_67 = arith.constant 0 : index
    %471 = vector.load %arg5[%c1_64, %c7_65, %c0_66, %c0_67] : memref<3x9x1x256xf32, #tpu.memory_space<vmem>>, vector<1x1x1x256xf32>
    %472 = vector.shape_cast %471 : vector<1x1x1x256xf32> to vector<1x256xf32>
    %473 = vector.broadcast %472 : vector<1x256xf32> to vector<4x256xf32>
    %474 = arith.mulf %470, %473 : vector<4x256xf32>
    %475 = vector.extract_strided_slice %270 {offsets = [0, 28], sizes = [4, 1], strides = [1, 1]} : vector<4x36xf32> to vector<4x1xf32>
    %476 = vector.extract_strided_slice %474 {offsets = [0, 0], sizes = [1, 256], strides = [1, 1]} : vector<4x256xf32> to vector<1x256xf32>
    %477 = vector.broadcast %475 : vector<4x1xf32> to vector<4x256xf32>
    %478 = vector.broadcast %476 : vector<1x256xf32> to vector<4x256xf32>
    %479 = arith.mulf %477, %478 : vector<4x256xf32>
    %480 = arith.addf %469, %479 : vector<4x256xf32>
    %481 = vector.extract_strided_slice %270 {offsets = [0, 29], sizes = [4, 1], strides = [1, 1]} : vector<4x36xf32> to vector<4x1xf32>
    %482 = vector.extract_strided_slice %474 {offsets = [1, 0], sizes = [1, 256], strides = [1, 1]} : vector<4x256xf32> to vector<1x256xf32>
    %483 = vector.broadcast %481 : vector<4x1xf32> to vector<4x256xf32>
    %484 = vector.broadcast %482 : vector<1x256xf32> to vector<4x256xf32>
    %485 = arith.mulf %483, %484 : vector<4x256xf32>
    %486 = arith.addf %480, %485 : vector<4x256xf32>
    %487 = vector.extract_strided_slice %270 {offsets = [0, 30], sizes = [4, 1], strides = [1, 1]} : vector<4x36xf32> to vector<4x1xf32>
    %488 = vector.extract_strided_slice %474 {offsets = [2, 0], sizes = [1, 256], strides = [1, 1]} : vector<4x256xf32> to vector<1x256xf32>
    %489 = vector.broadcast %487 : vector<4x1xf32> to vector<4x256xf32>
    %490 = vector.broadcast %488 : vector<1x256xf32> to vector<4x256xf32>
    %491 = arith.mulf %489, %490 : vector<4x256xf32>
    %492 = arith.addf %486, %491 : vector<4x256xf32>
    %493 = vector.extract_strided_slice %270 {offsets = [0, 31], sizes = [4, 1], strides = [1, 1]} : vector<4x36xf32> to vector<4x1xf32>
    %494 = vector.extract_strided_slice %474 {offsets = [3, 0], sizes = [1, 256], strides = [1, 1]} : vector<4x256xf32> to vector<1x256xf32>
    %495 = vector.broadcast %493 : vector<4x1xf32> to vector<4x256xf32>
    %496 = vector.broadcast %494 : vector<1x256xf32> to vector<4x256xf32>
    %497 = arith.mulf %495, %496 : vector<4x256xf32>
    %498 = arith.addf %492, %497 : vector<4x256xf32>
    %c205_i32 = arith.constant 205 : i32
    %499 = tpu.dynamic_rotate %1 by %c205_i32 dim 1 : vector<4x256xf32>, i32 -> vector<4x256xf32>
    %c1_68 = arith.constant 1 : index
    %c8_69 = arith.constant 8 : index
    %c0_70 = arith.constant 0 : index
    %c0_71 = arith.constant 0 : index
    %500 = vector.load %arg5[%c1_68, %c8_69, %c0_70, %c0_71] : memref<3x9x1x256xf32, #tpu.memory_space<vmem>>, vector<1x1x1x256xf32>
    %501 = vector.shape_cast %500 : vector<1x1x1x256xf32> to vector<1x256xf32>
    %502 = vector.broadcast %501 : vector<1x256xf32> to vector<4x256xf32>
    %503 = arith.mulf %499, %502 : vector<4x256xf32>
    %504 = vector.extract_strided_slice %270 {offsets = [0, 32], sizes = [4, 1], strides = [1, 1]} : vector<4x36xf32> to vector<4x1xf32>
    %505 = vector.extract_strided_slice %503 {offsets = [0, 0], sizes = [1, 256], strides = [1, 1]} : vector<4x256xf32> to vector<1x256xf32>
    %506 = vector.broadcast %504 : vector<4x1xf32> to vector<4x256xf32>
    %507 = vector.broadcast %505 : vector<1x256xf32> to vector<4x256xf32>
    %508 = arith.mulf %506, %507 : vector<4x256xf32>
    %509 = arith.addf %498, %508 : vector<4x256xf32>
    %510 = vector.extract_strided_slice %270 {offsets = [0, 33], sizes = [4, 1], strides = [1, 1]} : vector<4x36xf32> to vector<4x1xf32>
    %511 = vector.extract_strided_slice %503 {offsets = [1, 0], sizes = [1, 256], strides = [1, 1]} : vector<4x256xf32> to vector<1x256xf32>
    %512 = vector.broadcast %510 : vector<4x1xf32> to vector<4x256xf32>
    %513 = vector.broadcast %511 : vector<1x256xf32> to vector<4x256xf32>
    %514 = arith.mulf %512, %513 : vector<4x256xf32>
    %515 = arith.addf %509, %514 : vector<4x256xf32>
    %516 = vector.extract_strided_slice %270 {offsets = [0, 34], sizes = [4, 1], strides = [1, 1]} : vector<4x36xf32> to vector<4x1xf32>
    %517 = vector.extract_strided_slice %503 {offsets = [2, 0], sizes = [1, 256], strides = [1, 1]} : vector<4x256xf32> to vector<1x256xf32>
    %518 = vector.broadcast %516 : vector<4x1xf32> to vector<4x256xf32>
    %519 = vector.broadcast %517 : vector<1x256xf32> to vector<4x256xf32>
    %520 = arith.mulf %518, %519 : vector<4x256xf32>
    %521 = arith.addf %515, %520 : vector<4x256xf32>
    %522 = vector.extract_strided_slice %270 {offsets = [0, 35], sizes = [4, 1], strides = [1, 1]} : vector<4x36xf32> to vector<4x1xf32>
    %523 = vector.extract_strided_slice %503 {offsets = [3, 0], sizes = [1, 256], strides = [1, 1]} : vector<4x256xf32> to vector<1x256xf32>
    %524 = vector.broadcast %522 : vector<4x1xf32> to vector<4x256xf32>
    %525 = vector.broadcast %523 : vector<1x256xf32> to vector<4x256xf32>
    %526 = arith.mulf %524, %525 : vector<4x256xf32>
    %527 = arith.addf %521, %526 : vector<4x256xf32>
    %c1_72 = arith.constant 1 : index
    %c0_73 = arith.constant 0 : index
    %c0_74 = arith.constant 0 : index
    %528 = vector.load %arg3[%c1_72, %c0_73, %c0_74] : memref<4x4x1xf32, #tpu.memory_space<vmem>>, vector<1x4x1xf32>
    %529 = vector.shape_cast %528 : vector<1x4x1xf32> to vector<4x1xf32>
    %530 = vector.broadcast %529 : vector<4x1xf32> to vector<4x256xf32>
    %531 = arith.addf %527, %530 : vector<4x256xf32>
    %cst_75 = arith.constant 0.000000e+00 : f32
    %532 = vector.broadcast %cst_75 : f32 to vector<4x256xf32>
    %533 = vector.extract_strided_slice %2 {offsets = [0, 0], sizes = [4, 1], strides = [1, 1]} : vector<4x4xf32> to vector<4x1xf32>
    %534 = vector.extract_strided_slice %531 {offsets = [0, 0], sizes = [1, 256], strides = [1, 1]} : vector<4x256xf32> to vector<1x256xf32>
    %535 = vector.broadcast %533 : vector<4x1xf32> to vector<4x256xf32>
    %536 = vector.broadcast %534 : vector<1x256xf32> to vector<4x256xf32>
    %537 = arith.mulf %535, %536 : vector<4x256xf32>
    %538 = arith.addf %532, %537 : vector<4x256xf32>
    %539 = vector.extract_strided_slice %2 {offsets = [0, 1], sizes = [4, 1], strides = [1, 1]} : vector<4x4xf32> to vector<4x1xf32>
    %540 = vector.extract_strided_slice %531 {offsets = [1, 0], sizes = [1, 256], strides = [1, 1]} : vector<4x256xf32> to vector<1x256xf32>
    %541 = vector.broadcast %539 : vector<4x1xf32> to vector<4x256xf32>
    %542 = vector.broadcast %540 : vector<1x256xf32> to vector<4x256xf32>
    %543 = arith.mulf %541, %542 : vector<4x256xf32>
    %544 = arith.addf %538, %543 : vector<4x256xf32>
    %545 = vector.extract_strided_slice %2 {offsets = [0, 2], sizes = [4, 1], strides = [1, 1]} : vector<4x4xf32> to vector<4x1xf32>
    %546 = vector.extract_strided_slice %531 {offsets = [2, 0], sizes = [1, 256], strides = [1, 1]} : vector<4x256xf32> to vector<1x256xf32>
    %547 = vector.broadcast %545 : vector<4x1xf32> to vector<4x256xf32>
    %548 = vector.broadcast %546 : vector<1x256xf32> to vector<4x256xf32>
    %549 = arith.mulf %547, %548 : vector<4x256xf32>
    %550 = arith.addf %544, %549 : vector<4x256xf32>
    %551 = vector.extract_strided_slice %2 {offsets = [0, 3], sizes = [4, 1], strides = [1, 1]} : vector<4x4xf32> to vector<4x1xf32>
    %552 = vector.extract_strided_slice %531 {offsets = [3, 0], sizes = [1, 256], strides = [1, 1]} : vector<4x256xf32> to vector<1x256xf32>
    %553 = vector.broadcast %551 : vector<4x1xf32> to vector<4x256xf32>
    %554 = vector.broadcast %552 : vector<1x256xf32> to vector<4x256xf32>
    %555 = arith.mulf %553, %554 : vector<4x256xf32>
    %556 = arith.addf %550, %555 : vector<4x256xf32>
    %c3_76 = arith.constant 3 : index
    %c0_77 = arith.constant 0 : index
    %c0_78 = arith.constant 0 : index
    %557 = vector.load %arg3[%c3_76, %c0_77, %c0_78] : memref<4x4x1xf32, #tpu.memory_space<vmem>>, vector<1x4x1xf32>
    %558 = vector.shape_cast %557 : vector<1x4x1xf32> to vector<4x1xf32>
    %559 = vector.broadcast %558 : vector<4x1xf32> to vector<4x256xf32>
    %560 = arith.addf %556, %559 : vector<4x256xf32>
    %cst_79 = arith.constant 0.000000e+00 : f32
    %561 = vector.broadcast %cst_79 : f32 to vector<4x256xf32>
    %562 = arith.maximumf %560, %561 : vector<4x256xf32>
    %563 = arith.addf %268, %562 : vector<4x256xf32>
    %c1_80 = arith.constant 1 : index
    %c0_81 = arith.constant 0 : index
    %c0_82 = arith.constant 0 : index
    %564 = vector.load %arg2[%c1_80, %c0_81, %c0_82] : memref<3x4x36xf32, #tpu.memory_space<vmem>>, vector<1x4x36xf32>
    %565 = vector.shape_cast %564 : vector<1x4x36xf32> to vector<4x36xf32>
    %cst_83 = arith.constant 0.000000e+00 : f32
    %566 = vector.broadcast %cst_83 : f32 to vector<4x256xf32>
    %c51_i32_84 = arith.constant 51 : i32
    %567 = tpu.dynamic_rotate %265 by %c51_i32_84 dim 1 : vector<4x256xf32>, i32 -> vector<4x256xf32>
    %c1_85 = arith.constant 1 : index
    %c0_86 = arith.constant 0 : index
    %c0_87 = arith.constant 0 : index
    %c0_88 = arith.constant 0 : index
    %568 = vector.load %arg5[%c1_85, %c0_86, %c0_87, %c0_88] : memref<3x9x1x256xf32, #tpu.memory_space<vmem>>, vector<1x1x1x256xf32>
    %569 = vector.shape_cast %568 : vector<1x1x1x256xf32> to vector<1x256xf32>
    %570 = vector.broadcast %569 : vector<1x256xf32> to vector<4x256xf32>
    %571 = arith.mulf %567, %570 : vector<4x256xf32>
    %572 = vector.extract_strided_slice %565 {offsets = [0, 0], sizes = [4, 1], strides = [1, 1]} : vector<4x36xf32> to vector<4x1xf32>
    %573 = vector.extract_strided_slice %571 {offsets = [0, 0], sizes = [1, 256], strides = [1, 1]} : vector<4x256xf32> to vector<1x256xf32>
    %574 = vector.broadcast %572 : vector<4x1xf32> to vector<4x256xf32>
    %575 = vector.broadcast %573 : vector<1x256xf32> to vector<4x256xf32>
    %576 = arith.mulf %574, %575 : vector<4x256xf32>
    %577 = arith.addf %566, %576 : vector<4x256xf32>
    %578 = vector.extract_strided_slice %565 {offsets = [0, 1], sizes = [4, 1], strides = [1, 1]} : vector<4x36xf32> to vector<4x1xf32>
    %579 = vector.extract_strided_slice %571 {offsets = [1, 0], sizes = [1, 256], strides = [1, 1]} : vector<4x256xf32> to vector<1x256xf32>
    %580 = vector.broadcast %578 : vector<4x1xf32> to vector<4x256xf32>
    %581 = vector.broadcast %579 : vector<1x256xf32> to vector<4x256xf32>
    %582 = arith.mulf %580, %581 : vector<4x256xf32>
    %583 = arith.addf %577, %582 : vector<4x256xf32>
    %584 = vector.extract_strided_slice %565 {offsets = [0, 2], sizes = [4, 1], strides = [1, 1]} : vector<4x36xf32> to vector<4x1xf32>
    %585 = vector.extract_strided_slice %571 {offsets = [2, 0], sizes = [1, 256], strides = [1, 1]} : vector<4x256xf32> to vector<1x256xf32>
    %586 = vector.broadcast %584 : vector<4x1xf32> to vector<4x256xf32>
    %587 = vector.broadcast %585 : vector<1x256xf32> to vector<4x256xf32>
    %588 = arith.mulf %586, %587 : vector<4x256xf32>
    %589 = arith.addf %583, %588 : vector<4x256xf32>
    %590 = vector.extract_strided_slice %565 {offsets = [0, 3], sizes = [4, 1], strides = [1, 1]} : vector<4x36xf32> to vector<4x1xf32>
    %591 = vector.extract_strided_slice %571 {offsets = [3, 0], sizes = [1, 256], strides = [1, 1]} : vector<4x256xf32> to vector<1x256xf32>
    %592 = vector.broadcast %590 : vector<4x1xf32> to vector<4x256xf32>
    %593 = vector.broadcast %591 : vector<1x256xf32> to vector<4x256xf32>
    %594 = arith.mulf %592, %593 : vector<4x256xf32>
    %595 = arith.addf %589, %594 : vector<4x256xf32>
    %c48_i32_89 = arith.constant 48 : i32
    %596 = tpu.dynamic_rotate %265 by %c48_i32_89 dim 1 : vector<4x256xf32>, i32 -> vector<4x256xf32>
    %c1_90 = arith.constant 1 : index
    %c1_91 = arith.constant 1 : index
    %c0_92 = arith.constant 0 : index
    %c0_93 = arith.constant 0 : index
    %597 = vector.load %arg5[%c1_90, %c1_91, %c0_92, %c0_93] : memref<3x9x1x256xf32, #tpu.memory_space<vmem>>, vector<1x1x1x256xf32>
    %598 = vector.shape_cast %597 : vector<1x1x1x256xf32> to vector<1x256xf32>
    %599 = vector.broadcast %598 : vector<1x256xf32> to vector<4x256xf32>
    %600 = arith.mulf %596, %599 : vector<4x256xf32>
    %601 = vector.extract_strided_slice %565 {offsets = [0, 4], sizes = [4, 1], strides = [1, 1]} : vector<4x36xf32> to vector<4x1xf32>
    %602 = vector.extract_strided_slice %600 {offsets = [0, 0], sizes = [1, 256], strides = [1, 1]} : vector<4x256xf32> to vector<1x256xf32>
    %603 = vector.broadcast %601 : vector<4x1xf32> to vector<4x256xf32>
    %604 = vector.broadcast %602 : vector<1x256xf32> to vector<4x256xf32>
    %605 = arith.mulf %603, %604 : vector<4x256xf32>
    %606 = arith.addf %595, %605 : vector<4x256xf32>
    %607 = vector.extract_strided_slice %565 {offsets = [0, 5], sizes = [4, 1], strides = [1, 1]} : vector<4x36xf32> to vector<4x1xf32>
    %608 = vector.extract_strided_slice %600 {offsets = [1, 0], sizes = [1, 256], strides = [1, 1]} : vector<4x256xf32> to vector<1x256xf32>
    %609 = vector.broadcast %607 : vector<4x1xf32> to vector<4x256xf32>
    %610 = vector.broadcast %608 : vector<1x256xf32> to vector<4x256xf32>
    %611 = arith.mulf %609, %610 : vector<4x256xf32>
    %612 = arith.addf %606, %611 : vector<4x256xf32>
    %613 = vector.extract_strided_slice %565 {offsets = [0, 6], sizes = [4, 1], strides = [1, 1]} : vector<4x36xf32> to vector<4x1xf32>
    %614 = vector.extract_strided_slice %600 {offsets = [2, 0], sizes = [1, 256], strides = [1, 1]} : vector<4x256xf32> to vector<1x256xf32>
    %615 = vector.broadcast %613 : vector<4x1xf32> to vector<4x256xf32>
    %616 = vector.broadcast %614 : vector<1x256xf32> to vector<4x256xf32>
    %617 = arith.mulf %615, %616 : vector<4x256xf32>
    %618 = arith.addf %612, %617 : vector<4x256xf32>
    %619 = vector.extract_strided_slice %565 {offsets = [0, 7], sizes = [4, 1], strides = [1, 1]} : vector<4x36xf32> to vector<4x1xf32>
    %620 = vector.extract_strided_slice %600 {offsets = [3, 0], sizes = [1, 256], strides = [1, 1]} : vector<4x256xf32> to vector<1x256xf32>
    %621 = vector.broadcast %619 : vector<4x1xf32> to vector<4x256xf32>
    %622 = vector.broadcast %620 : vector<1x256xf32> to vector<4x256xf32>
    %623 = arith.mulf %621, %622 : vector<4x256xf32>
    %624 = arith.addf %618, %623 : vector<4x256xf32>
    %c45_i32_94 = arith.constant 45 : i32
    %625 = tpu.dynamic_rotate %265 by %c45_i32_94 dim 1 : vector<4x256xf32>, i32 -> vector<4x256xf32>
    %c1_95 = arith.constant 1 : index
    %c2_96 = arith.constant 2 : index
    %c0_97 = arith.constant 0 : index
    %c0_98 = arith.constant 0 : index
    %626 = vector.load %arg5[%c1_95, %c2_96, %c0_97, %c0_98] : memref<3x9x1x256xf32, #tpu.memory_space<vmem>>, vector<1x1x1x256xf32>
    %627 = vector.shape_cast %626 : vector<1x1x1x256xf32> to vector<1x256xf32>
    %628 = vector.broadcast %627 : vector<1x256xf32> to vector<4x256xf32>
    %629 = arith.mulf %625, %628 : vector<4x256xf32>
    %630 = vector.extract_strided_slice %565 {offsets = [0, 8], sizes = [4, 1], strides = [1, 1]} : vector<4x36xf32> to vector<4x1xf32>
    %631 = vector.extract_strided_slice %629 {offsets = [0, 0], sizes = [1, 256], strides = [1, 1]} : vector<4x256xf32> to vector<1x256xf32>
    %632 = vector.broadcast %630 : vector<4x1xf32> to vector<4x256xf32>
    %633 = vector.broadcast %631 : vector<1x256xf32> to vector<4x256xf32>
    %634 = arith.mulf %632, %633 : vector<4x256xf32>
    %635 = arith.addf %624, %634 : vector<4x256xf32>
    %636 = vector.extract_strided_slice %565 {offsets = [0, 9], sizes = [4, 1], strides = [1, 1]} : vector<4x36xf32> to vector<4x1xf32>
    %637 = vector.extract_strided_slice %629 {offsets = [1, 0], sizes = [1, 256], strides = [1, 1]} : vector<4x256xf32> to vector<1x256xf32>
    %638 = vector.broadcast %636 : vector<4x1xf32> to vector<4x256xf32>
    %639 = vector.broadcast %637 : vector<1x256xf32> to vector<4x256xf32>
    %640 = arith.mulf %638, %639 : vector<4x256xf32>
    %641 = arith.addf %635, %640 : vector<4x256xf32>
    %642 = vector.extract_strided_slice %565 {offsets = [0, 10], sizes = [4, 1], strides = [1, 1]} : vector<4x36xf32> to vector<4x1xf32>
    %643 = vector.extract_strided_slice %629 {offsets = [2, 0], sizes = [1, 256], strides = [1, 1]} : vector<4x256xf32> to vector<1x256xf32>
    %644 = vector.broadcast %642 : vector<4x1xf32> to vector<4x256xf32>
    %645 = vector.broadcast %643 : vector<1x256xf32> to vector<4x256xf32>
    %646 = arith.mulf %644, %645 : vector<4x256xf32>
    %647 = arith.addf %641, %646 : vector<4x256xf32>
    %648 = vector.extract_strided_slice %565 {offsets = [0, 11], sizes = [4, 1], strides = [1, 1]} : vector<4x36xf32> to vector<4x1xf32>
    %649 = vector.extract_strided_slice %629 {offsets = [3, 0], sizes = [1, 256], strides = [1, 1]} : vector<4x256xf32> to vector<1x256xf32>
    %650 = vector.broadcast %648 : vector<4x1xf32> to vector<4x256xf32>
    %651 = vector.broadcast %649 : vector<1x256xf32> to vector<4x256xf32>
    %652 = arith.mulf %650, %651 : vector<4x256xf32>
    %653 = arith.addf %647, %652 : vector<4x256xf32>
    %c3_i32_99 = arith.constant 3 : i32
    %654 = tpu.dynamic_rotate %265 by %c3_i32_99 dim 1 : vector<4x256xf32>, i32 -> vector<4x256xf32>
    %c1_100 = arith.constant 1 : index
    %c3_101 = arith.constant 3 : index
    %c0_102 = arith.constant 0 : index
    %c0_103 = arith.constant 0 : index
    %655 = vector.load %arg5[%c1_100, %c3_101, %c0_102, %c0_103] : memref<3x9x1x256xf32, #tpu.memory_space<vmem>>, vector<1x1x1x256xf32>
    %656 = vector.shape_cast %655 : vector<1x1x1x256xf32> to vector<1x256xf32>
    %657 = vector.broadcast %656 : vector<1x256xf32> to vector<4x256xf32>
    %658 = arith.mulf %654, %657 : vector<4x256xf32>
    %659 = vector.extract_strided_slice %565 {offsets = [0, 12], sizes = [4, 1], strides = [1, 1]} : vector<4x36xf32> to vector<4x1xf32>
    %660 = vector.extract_strided_slice %658 {offsets = [0, 0], sizes = [1, 256], strides = [1, 1]} : vector<4x256xf32> to vector<1x256xf32>
    %661 = vector.broadcast %659 : vector<4x1xf32> to vector<4x256xf32>
    %662 = vector.broadcast %660 : vector<1x256xf32> to vector<4x256xf32>
    %663 = arith.mulf %661, %662 : vector<4x256xf32>
    %664 = arith.addf %653, %663 : vector<4x256xf32>
    %665 = vector.extract_strided_slice %565 {offsets = [0, 13], sizes = [4, 1], strides = [1, 1]} : vector<4x36xf32> to vector<4x1xf32>
    %666 = vector.extract_strided_slice %658 {offsets = [1, 0], sizes = [1, 256], strides = [1, 1]} : vector<4x256xf32> to vector<1x256xf32>
    %667 = vector.broadcast %665 : vector<4x1xf32> to vector<4x256xf32>
    %668 = vector.broadcast %666 : vector<1x256xf32> to vector<4x256xf32>
    %669 = arith.mulf %667, %668 : vector<4x256xf32>
    %670 = arith.addf %664, %669 : vector<4x256xf32>
    %671 = vector.extract_strided_slice %565 {offsets = [0, 14], sizes = [4, 1], strides = [1, 1]} : vector<4x36xf32> to vector<4x1xf32>
    %672 = vector.extract_strided_slice %658 {offsets = [2, 0], sizes = [1, 256], strides = [1, 1]} : vector<4x256xf32> to vector<1x256xf32>
    %673 = vector.broadcast %671 : vector<4x1xf32> to vector<4x256xf32>
    %674 = vector.broadcast %672 : vector<1x256xf32> to vector<4x256xf32>
    %675 = arith.mulf %673, %674 : vector<4x256xf32>
    %676 = arith.addf %670, %675 : vector<4x256xf32>
    %677 = vector.extract_strided_slice %565 {offsets = [0, 15], sizes = [4, 1], strides = [1, 1]} : vector<4x36xf32> to vector<4x1xf32>
    %678 = vector.extract_strided_slice %658 {offsets = [3, 0], sizes = [1, 256], strides = [1, 1]} : vector<4x256xf32> to vector<1x256xf32>
    %679 = vector.broadcast %677 : vector<4x1xf32> to vector<4x256xf32>
    %680 = vector.broadcast %678 : vector<1x256xf32> to vector<4x256xf32>
    %681 = arith.mulf %679, %680 : vector<4x256xf32>
    %682 = arith.addf %676, %681 : vector<4x256xf32>
    %683 = vector.extract_strided_slice %565 {offsets = [0, 16], sizes = [4, 1], strides = [1, 1]} : vector<4x36xf32> to vector<4x1xf32>
    %684 = vector.extract_strided_slice %265 {offsets = [0, 0], sizes = [1, 256], strides = [1, 1]} : vector<4x256xf32> to vector<1x256xf32>
    %685 = vector.broadcast %683 : vector<4x1xf32> to vector<4x256xf32>
    %686 = vector.broadcast %684 : vector<1x256xf32> to vector<4x256xf32>
    %687 = arith.mulf %685, %686 : vector<4x256xf32>
    %688 = arith.addf %682, %687 : vector<4x256xf32>
    %689 = vector.extract_strided_slice %565 {offsets = [0, 17], sizes = [4, 1], strides = [1, 1]} : vector<4x36xf32> to vector<4x1xf32>
    %690 = vector.extract_strided_slice %265 {offsets = [1, 0], sizes = [1, 256], strides = [1, 1]} : vector<4x256xf32> to vector<1x256xf32>
    %691 = vector.broadcast %689 : vector<4x1xf32> to vector<4x256xf32>
    %692 = vector.broadcast %690 : vector<1x256xf32> to vector<4x256xf32>
    %693 = arith.mulf %691, %692 : vector<4x256xf32>
    %694 = arith.addf %688, %693 : vector<4x256xf32>
    %695 = vector.extract_strided_slice %565 {offsets = [0, 18], sizes = [4, 1], strides = [1, 1]} : vector<4x36xf32> to vector<4x1xf32>
    %696 = vector.extract_strided_slice %265 {offsets = [2, 0], sizes = [1, 256], strides = [1, 1]} : vector<4x256xf32> to vector<1x256xf32>
    %697 = vector.broadcast %695 : vector<4x1xf32> to vector<4x256xf32>
    %698 = vector.broadcast %696 : vector<1x256xf32> to vector<4x256xf32>
    %699 = arith.mulf %697, %698 : vector<4x256xf32>
    %700 = arith.addf %694, %699 : vector<4x256xf32>
    %701 = vector.extract_strided_slice %565 {offsets = [0, 19], sizes = [4, 1], strides = [1, 1]} : vector<4x36xf32> to vector<4x1xf32>
    %702 = vector.extract_strided_slice %265 {offsets = [3, 0], sizes = [1, 256], strides = [1, 1]} : vector<4x256xf32> to vector<1x256xf32>
    %703 = vector.broadcast %701 : vector<4x1xf32> to vector<4x256xf32>
    %704 = vector.broadcast %702 : vector<1x256xf32> to vector<4x256xf32>
    %705 = arith.mulf %703, %704 : vector<4x256xf32>
    %706 = arith.addf %700, %705 : vector<4x256xf32>
    %c253_i32_104 = arith.constant 253 : i32
    %707 = tpu.dynamic_rotate %265 by %c253_i32_104 dim 1 : vector<4x256xf32>, i32 -> vector<4x256xf32>
    %c1_105 = arith.constant 1 : index
    %c5_106 = arith.constant 5 : index
    %c0_107 = arith.constant 0 : index
    %c0_108 = arith.constant 0 : index
    %708 = vector.load %arg5[%c1_105, %c5_106, %c0_107, %c0_108] : memref<3x9x1x256xf32, #tpu.memory_space<vmem>>, vector<1x1x1x256xf32>
    %709 = vector.shape_cast %708 : vector<1x1x1x256xf32> to vector<1x256xf32>
    %710 = vector.broadcast %709 : vector<1x256xf32> to vector<4x256xf32>
    %711 = arith.mulf %707, %710 : vector<4x256xf32>
    %712 = vector.extract_strided_slice %565 {offsets = [0, 20], sizes = [4, 1], strides = [1, 1]} : vector<4x36xf32> to vector<4x1xf32>
    %713 = vector.extract_strided_slice %711 {offsets = [0, 0], sizes = [1, 256], strides = [1, 1]} : vector<4x256xf32> to vector<1x256xf32>
    %714 = vector.broadcast %712 : vector<4x1xf32> to vector<4x256xf32>
    %715 = vector.broadcast %713 : vector<1x256xf32> to vector<4x256xf32>
    %716 = arith.mulf %714, %715 : vector<4x256xf32>
    %717 = arith.addf %706, %716 : vector<4x256xf32>
    %718 = vector.extract_strided_slice %565 {offsets = [0, 21], sizes = [4, 1], strides = [1, 1]} : vector<4x36xf32> to vector<4x1xf32>
    %719 = vector.extract_strided_slice %711 {offsets = [1, 0], sizes = [1, 256], strides = [1, 1]} : vector<4x256xf32> to vector<1x256xf32>
    %720 = vector.broadcast %718 : vector<4x1xf32> to vector<4x256xf32>
    %721 = vector.broadcast %719 : vector<1x256xf32> to vector<4x256xf32>
    %722 = arith.mulf %720, %721 : vector<4x256xf32>
    %723 = arith.addf %717, %722 : vector<4x256xf32>
    %724 = vector.extract_strided_slice %565 {offsets = [0, 22], sizes = [4, 1], strides = [1, 1]} : vector<4x36xf32> to vector<4x1xf32>
    %725 = vector.extract_strided_slice %711 {offsets = [2, 0], sizes = [1, 256], strides = [1, 1]} : vector<4x256xf32> to vector<1x256xf32>
    %726 = vector.broadcast %724 : vector<4x1xf32> to vector<4x256xf32>
    %727 = vector.broadcast %725 : vector<1x256xf32> to vector<4x256xf32>
    %728 = arith.mulf %726, %727 : vector<4x256xf32>
    %729 = arith.addf %723, %728 : vector<4x256xf32>
    %730 = vector.extract_strided_slice %565 {offsets = [0, 23], sizes = [4, 1], strides = [1, 1]} : vector<4x36xf32> to vector<4x1xf32>
    %731 = vector.extract_strided_slice %711 {offsets = [3, 0], sizes = [1, 256], strides = [1, 1]} : vector<4x256xf32> to vector<1x256xf32>
    %732 = vector.broadcast %730 : vector<4x1xf32> to vector<4x256xf32>
    %733 = vector.broadcast %731 : vector<1x256xf32> to vector<4x256xf32>
    %734 = arith.mulf %732, %733 : vector<4x256xf32>
    %735 = arith.addf %729, %734 : vector<4x256xf32>
    %c211_i32_109 = arith.constant 211 : i32
    %736 = tpu.dynamic_rotate %265 by %c211_i32_109 dim 1 : vector<4x256xf32>, i32 -> vector<4x256xf32>
    %c1_110 = arith.constant 1 : index
    %c6_111 = arith.constant 6 : index
    %c0_112 = arith.constant 0 : index
    %c0_113 = arith.constant 0 : index
    %737 = vector.load %arg5[%c1_110, %c6_111, %c0_112, %c0_113] : memref<3x9x1x256xf32, #tpu.memory_space<vmem>>, vector<1x1x1x256xf32>
    %738 = vector.shape_cast %737 : vector<1x1x1x256xf32> to vector<1x256xf32>
    %739 = vector.broadcast %738 : vector<1x256xf32> to vector<4x256xf32>
    %740 = arith.mulf %736, %739 : vector<4x256xf32>
    %741 = vector.extract_strided_slice %565 {offsets = [0, 24], sizes = [4, 1], strides = [1, 1]} : vector<4x36xf32> to vector<4x1xf32>
    %742 = vector.extract_strided_slice %740 {offsets = [0, 0], sizes = [1, 256], strides = [1, 1]} : vector<4x256xf32> to vector<1x256xf32>
    %743 = vector.broadcast %741 : vector<4x1xf32> to vector<4x256xf32>
    %744 = vector.broadcast %742 : vector<1x256xf32> to vector<4x256xf32>
    %745 = arith.mulf %743, %744 : vector<4x256xf32>
    %746 = arith.addf %735, %745 : vector<4x256xf32>
    %747 = vector.extract_strided_slice %565 {offsets = [0, 25], sizes = [4, 1], strides = [1, 1]} : vector<4x36xf32> to vector<4x1xf32>
    %748 = vector.extract_strided_slice %740 {offsets = [1, 0], sizes = [1, 256], strides = [1, 1]} : vector<4x256xf32> to vector<1x256xf32>
    %749 = vector.broadcast %747 : vector<4x1xf32> to vector<4x256xf32>
    %750 = vector.broadcast %748 : vector<1x256xf32> to vector<4x256xf32>
    %751 = arith.mulf %749, %750 : vector<4x256xf32>
    %752 = arith.addf %746, %751 : vector<4x256xf32>
    %753 = vector.extract_strided_slice %565 {offsets = [0, 26], sizes = [4, 1], strides = [1, 1]} : vector<4x36xf32> to vector<4x1xf32>
    %754 = vector.extract_strided_slice %740 {offsets = [2, 0], sizes = [1, 256], strides = [1, 1]} : vector<4x256xf32> to vector<1x256xf32>
    %755 = vector.broadcast %753 : vector<4x1xf32> to vector<4x256xf32>
    %756 = vector.broadcast %754 : vector<1x256xf32> to vector<4x256xf32>
    %757 = arith.mulf %755, %756 : vector<4x256xf32>
    %758 = arith.addf %752, %757 : vector<4x256xf32>
    %759 = vector.extract_strided_slice %565 {offsets = [0, 27], sizes = [4, 1], strides = [1, 1]} : vector<4x36xf32> to vector<4x1xf32>
    %760 = vector.extract_strided_slice %740 {offsets = [3, 0], sizes = [1, 256], strides = [1, 1]} : vector<4x256xf32> to vector<1x256xf32>
    %761 = vector.broadcast %759 : vector<4x1xf32> to vector<4x256xf32>
    %762 = vector.broadcast %760 : vector<1x256xf32> to vector<4x256xf32>
    %763 = arith.mulf %761, %762 : vector<4x256xf32>
    %764 = arith.addf %758, %763 : vector<4x256xf32>
    %c208_i32_114 = arith.constant 208 : i32
    %765 = tpu.dynamic_rotate %265 by %c208_i32_114 dim 1 : vector<4x256xf32>, i32 -> vector<4x256xf32>
    %c1_115 = arith.constant 1 : index
    %c7_116 = arith.constant 7 : index
    %c0_117 = arith.constant 0 : index
    %c0_118 = arith.constant 0 : index
    %766 = vector.load %arg5[%c1_115, %c7_116, %c0_117, %c0_118] : memref<3x9x1x256xf32, #tpu.memory_space<vmem>>, vector<1x1x1x256xf32>
    %767 = vector.shape_cast %766 : vector<1x1x1x256xf32> to vector<1x256xf32>
    %768 = vector.broadcast %767 : vector<1x256xf32> to vector<4x256xf32>
    %769 = arith.mulf %765, %768 : vector<4x256xf32>
    %770 = vector.extract_strided_slice %565 {offsets = [0, 28], sizes = [4, 1], strides = [1, 1]} : vector<4x36xf32> to vector<4x1xf32>
    %771 = vector.extract_strided_slice %769 {offsets = [0, 0], sizes = [1, 256], strides = [1, 1]} : vector<4x256xf32> to vector<1x256xf32>
    %772 = vector.broadcast %770 : vector<4x1xf32> to vector<4x256xf32>
    %773 = vector.broadcast %771 : vector<1x256xf32> to vector<4x256xf32>
    %774 = arith.mulf %772, %773 : vector<4x256xf32>
    %775 = arith.addf %764, %774 : vector<4x256xf32>
    %776 = vector.extract_strided_slice %565 {offsets = [0, 29], sizes = [4, 1], strides = [1, 1]} : vector<4x36xf32> to vector<4x1xf32>
    %777 = vector.extract_strided_slice %769 {offsets = [1, 0], sizes = [1, 256], strides = [1, 1]} : vector<4x256xf32> to vector<1x256xf32>
    %778 = vector.broadcast %776 : vector<4x1xf32> to vector<4x256xf32>
    %779 = vector.broadcast %777 : vector<1x256xf32> to vector<4x256xf32>
    %780 = arith.mulf %778, %779 : vector<4x256xf32>
    %781 = arith.addf %775, %780 : vector<4x256xf32>
    %782 = vector.extract_strided_slice %565 {offsets = [0, 30], sizes = [4, 1], strides = [1, 1]} : vector<4x36xf32> to vector<4x1xf32>
    %783 = vector.extract_strided_slice %769 {offsets = [2, 0], sizes = [1, 256], strides = [1, 1]} : vector<4x256xf32> to vector<1x256xf32>
    %784 = vector.broadcast %782 : vector<4x1xf32> to vector<4x256xf32>
    %785 = vector.broadcast %783 : vector<1x256xf32> to vector<4x256xf32>
    %786 = arith.mulf %784, %785 : vector<4x256xf32>
    %787 = arith.addf %781, %786 : vector<4x256xf32>
    %788 = vector.extract_strided_slice %565 {offsets = [0, 31], sizes = [4, 1], strides = [1, 1]} : vector<4x36xf32> to vector<4x1xf32>
    %789 = vector.extract_strided_slice %769 {offsets = [3, 0], sizes = [1, 256], strides = [1, 1]} : vector<4x256xf32> to vector<1x256xf32>
    %790 = vector.broadcast %788 : vector<4x1xf32> to vector<4x256xf32>
    %791 = vector.broadcast %789 : vector<1x256xf32> to vector<4x256xf32>
    %792 = arith.mulf %790, %791 : vector<4x256xf32>
    %793 = arith.addf %787, %792 : vector<4x256xf32>
    %c205_i32_119 = arith.constant 205 : i32
    %794 = tpu.dynamic_rotate %265 by %c205_i32_119 dim 1 : vector<4x256xf32>, i32 -> vector<4x256xf32>
    %c1_120 = arith.constant 1 : index
    %c8_121 = arith.constant 8 : index
    %c0_122 = arith.constant 0 : index
    %c0_123 = arith.constant 0 : index
    %795 = vector.load %arg5[%c1_120, %c8_121, %c0_122, %c0_123] : memref<3x9x1x256xf32, #tpu.memory_space<vmem>>, vector<1x1x1x256xf32>
    %796 = vector.shape_cast %795 : vector<1x1x1x256xf32> to vector<1x256xf32>
    %797 = vector.broadcast %796 : vector<1x256xf32> to vector<4x256xf32>
    %798 = arith.mulf %794, %797 : vector<4x256xf32>
    %799 = vector.extract_strided_slice %565 {offsets = [0, 32], sizes = [4, 1], strides = [1, 1]} : vector<4x36xf32> to vector<4x1xf32>
    %800 = vector.extract_strided_slice %798 {offsets = [0, 0], sizes = [1, 256], strides = [1, 1]} : vector<4x256xf32> to vector<1x256xf32>
    %801 = vector.broadcast %799 : vector<4x1xf32> to vector<4x256xf32>
    %802 = vector.broadcast %800 : vector<1x256xf32> to vector<4x256xf32>
    %803 = arith.mulf %801, %802 : vector<4x256xf32>
    %804 = arith.addf %793, %803 : vector<4x256xf32>
    %805 = vector.extract_strided_slice %565 {offsets = [0, 33], sizes = [4, 1], strides = [1, 1]} : vector<4x36xf32> to vector<4x1xf32>
    %806 = vector.extract_strided_slice %798 {offsets = [1, 0], sizes = [1, 256], strides = [1, 1]} : vector<4x256xf32> to vector<1x256xf32>
    %807 = vector.broadcast %805 : vector<4x1xf32> to vector<4x256xf32>
    %808 = vector.broadcast %806 : vector<1x256xf32> to vector<4x256xf32>
    %809 = arith.mulf %807, %808 : vector<4x256xf32>
    %810 = arith.addf %804, %809 : vector<4x256xf32>
    %811 = vector.extract_strided_slice %565 {offsets = [0, 34], sizes = [4, 1], strides = [1, 1]} : vector<4x36xf32> to vector<4x1xf32>
    %812 = vector.extract_strided_slice %798 {offsets = [2, 0], sizes = [1, 256], strides = [1, 1]} : vector<4x256xf32> to vector<1x256xf32>
    %813 = vector.broadcast %811 : vector<4x1xf32> to vector<4x256xf32>
    %814 = vector.broadcast %812 : vector<1x256xf32> to vector<4x256xf32>
    %815 = arith.mulf %813, %814 : vector<4x256xf32>
    %816 = arith.addf %810, %815 : vector<4x256xf32>
    %817 = vector.extract_strided_slice %565 {offsets = [0, 35], sizes = [4, 1], strides = [1, 1]} : vector<4x36xf32> to vector<4x1xf32>
    %818 = vector.extract_strided_slice %798 {offsets = [3, 0], sizes = [1, 256], strides = [1, 1]} : vector<4x256xf32> to vector<1x256xf32>
    %819 = vector.broadcast %817 : vector<4x1xf32> to vector<4x256xf32>
    %820 = vector.broadcast %818 : vector<1x256xf32> to vector<4x256xf32>
    %821 = arith.mulf %819, %820 : vector<4x256xf32>
    %822 = arith.addf %816, %821 : vector<4x256xf32>
    %c1_124 = arith.constant 1 : index
    %c0_125 = arith.constant 0 : index
    %c0_126 = arith.constant 0 : index
    %823 = vector.load %arg3[%c1_124, %c0_125, %c0_126] : memref<4x4x1xf32, #tpu.memory_space<vmem>>, vector<1x4x1xf32>
    %824 = vector.shape_cast %823 : vector<1x4x1xf32> to vector<4x1xf32>
    %825 = vector.broadcast %824 : vector<4x1xf32> to vector<4x256xf32>
    %826 = arith.addf %822, %825 : vector<4x256xf32>
    %cst_127 = arith.constant 0.000000e+00 : f32
    %827 = vector.broadcast %cst_127 : f32 to vector<4x256xf32>
    %828 = vector.extract_strided_slice %2 {offsets = [0, 0], sizes = [4, 1], strides = [1, 1]} : vector<4x4xf32> to vector<4x1xf32>
    %829 = vector.extract_strided_slice %826 {offsets = [0, 0], sizes = [1, 256], strides = [1, 1]} : vector<4x256xf32> to vector<1x256xf32>
    %830 = vector.broadcast %828 : vector<4x1xf32> to vector<4x256xf32>
    %831 = vector.broadcast %829 : vector<1x256xf32> to vector<4x256xf32>
    %832 = arith.mulf %830, %831 : vector<4x256xf32>
    %833 = arith.addf %827, %832 : vector<4x256xf32>
    %834 = vector.extract_strided_slice %2 {offsets = [0, 1], sizes = [4, 1], strides = [1, 1]} : vector<4x4xf32> to vector<4x1xf32>
    %835 = vector.extract_strided_slice %826 {offsets = [1, 0], sizes = [1, 256], strides = [1, 1]} : vector<4x256xf32> to vector<1x256xf32>
    %836 = vector.broadcast %834 : vector<4x1xf32> to vector<4x256xf32>
    %837 = vector.broadcast %835 : vector<1x256xf32> to vector<4x256xf32>
    %838 = arith.mulf %836, %837 : vector<4x256xf32>
    %839 = arith.addf %833, %838 : vector<4x256xf32>
    %840 = vector.extract_strided_slice %2 {offsets = [0, 2], sizes = [4, 1], strides = [1, 1]} : vector<4x4xf32> to vector<4x1xf32>
    %841 = vector.extract_strided_slice %826 {offsets = [2, 0], sizes = [1, 256], strides = [1, 1]} : vector<4x256xf32> to vector<1x256xf32>
    %842 = vector.broadcast %840 : vector<4x1xf32> to vector<4x256xf32>
    %843 = vector.broadcast %841 : vector<1x256xf32> to vector<4x256xf32>
    %844 = arith.mulf %842, %843 : vector<4x256xf32>
    %845 = arith.addf %839, %844 : vector<4x256xf32>
    %846 = vector.extract_strided_slice %2 {offsets = [0, 3], sizes = [4, 1], strides = [1, 1]} : vector<4x4xf32> to vector<4x1xf32>
    %847 = vector.extract_strided_slice %826 {offsets = [3, 0], sizes = [1, 256], strides = [1, 1]} : vector<4x256xf32> to vector<1x256xf32>
    %848 = vector.broadcast %846 : vector<4x1xf32> to vector<4x256xf32>
    %849 = vector.broadcast %847 : vector<1x256xf32> to vector<4x256xf32>
    %850 = arith.mulf %848, %849 : vector<4x256xf32>
    %851 = arith.addf %845, %850 : vector<4x256xf32>
    %c3_128 = arith.constant 3 : index
    %c0_129 = arith.constant 0 : index
    %c0_130 = arith.constant 0 : index
    %852 = vector.load %arg3[%c3_128, %c0_129, %c0_130] : memref<4x4x1xf32, #tpu.memory_space<vmem>>, vector<1x4x1xf32>
    %853 = vector.shape_cast %852 : vector<1x4x1xf32> to vector<4x1xf32>
    %854 = vector.broadcast %853 : vector<4x1xf32> to vector<4x256xf32>
    %855 = arith.addf %851, %854 : vector<4x256xf32>
    %cst_131 = arith.constant 0.000000e+00 : f32
    %856 = vector.broadcast %cst_131 : f32 to vector<4x256xf32>
    %857 = arith.maximumf %855, %856 : vector<4x256xf32>
    %858 = arith.addf %563, %857 : vector<4x256xf32>
    %c2_132 = arith.constant 2 : index
    %c0_133 = arith.constant 0 : index
    %c0_134 = arith.constant 0 : index
    %859 = vector.load %arg2[%c2_132, %c0_133, %c0_134] : memref<3x4x36xf32, #tpu.memory_space<vmem>>, vector<1x4x36xf32>
    %860 = vector.shape_cast %859 : vector<1x4x36xf32> to vector<4x36xf32>
    %cst_135 = arith.constant 0.000000e+00 : f32
    %861 = vector.broadcast %cst_135 : f32 to vector<4x256xf32>
    %c85_i32 = arith.constant 85 : i32
    %862 = tpu.dynamic_rotate %826 by %c85_i32 dim 1 : vector<4x256xf32>, i32 -> vector<4x256xf32>
    %c2_136 = arith.constant 2 : index
    %c0_137 = arith.constant 0 : index
    %c0_138 = arith.constant 0 : index
    %c0_139 = arith.constant 0 : index
    %863 = vector.load %arg5[%c2_136, %c0_137, %c0_138, %c0_139] : memref<3x9x1x256xf32, #tpu.memory_space<vmem>>, vector<1x1x1x256xf32>
    %864 = vector.shape_cast %863 : vector<1x1x1x256xf32> to vector<1x256xf32>
    %865 = vector.broadcast %864 : vector<1x256xf32> to vector<4x256xf32>
    %866 = arith.mulf %862, %865 : vector<4x256xf32>
    %867 = vector.extract_strided_slice %860 {offsets = [0, 0], sizes = [4, 1], strides = [1, 1]} : vector<4x36xf32> to vector<4x1xf32>
    %868 = vector.extract_strided_slice %866 {offsets = [0, 0], sizes = [1, 256], strides = [1, 1]} : vector<4x256xf32> to vector<1x256xf32>
    %869 = vector.broadcast %867 : vector<4x1xf32> to vector<4x256xf32>
    %870 = vector.broadcast %868 : vector<1x256xf32> to vector<4x256xf32>
    %871 = arith.mulf %869, %870 : vector<4x256xf32>
    %872 = arith.addf %861, %871 : vector<4x256xf32>
    %873 = vector.extract_strided_slice %860 {offsets = [0, 1], sizes = [4, 1], strides = [1, 1]} : vector<4x36xf32> to vector<4x1xf32>
    %874 = vector.extract_strided_slice %866 {offsets = [1, 0], sizes = [1, 256], strides = [1, 1]} : vector<4x256xf32> to vector<1x256xf32>
    %875 = vector.broadcast %873 : vector<4x1xf32> to vector<4x256xf32>
    %876 = vector.broadcast %874 : vector<1x256xf32> to vector<4x256xf32>
    %877 = arith.mulf %875, %876 : vector<4x256xf32>
    %878 = arith.addf %872, %877 : vector<4x256xf32>
    %879 = vector.extract_strided_slice %860 {offsets = [0, 2], sizes = [4, 1], strides = [1, 1]} : vector<4x36xf32> to vector<4x1xf32>
    %880 = vector.extract_strided_slice %866 {offsets = [2, 0], sizes = [1, 256], strides = [1, 1]} : vector<4x256xf32> to vector<1x256xf32>
    %881 = vector.broadcast %879 : vector<4x1xf32> to vector<4x256xf32>
    %882 = vector.broadcast %880 : vector<1x256xf32> to vector<4x256xf32>
    %883 = arith.mulf %881, %882 : vector<4x256xf32>
    %884 = arith.addf %878, %883 : vector<4x256xf32>
    %885 = vector.extract_strided_slice %860 {offsets = [0, 3], sizes = [4, 1], strides = [1, 1]} : vector<4x36xf32> to vector<4x1xf32>
    %886 = vector.extract_strided_slice %866 {offsets = [3, 0], sizes = [1, 256], strides = [1, 1]} : vector<4x256xf32> to vector<1x256xf32>
    %887 = vector.broadcast %885 : vector<4x1xf32> to vector<4x256xf32>
    %888 = vector.broadcast %886 : vector<1x256xf32> to vector<4x256xf32>
    %889 = arith.mulf %887, %888 : vector<4x256xf32>
    %890 = arith.addf %884, %889 : vector<4x256xf32>
    %c80_i32 = arith.constant 80 : i32
    %891 = tpu.dynamic_rotate %826 by %c80_i32 dim 1 : vector<4x256xf32>, i32 -> vector<4x256xf32>
    %c2_140 = arith.constant 2 : index
    %c1_141 = arith.constant 1 : index
    %c0_142 = arith.constant 0 : index
    %c0_143 = arith.constant 0 : index
    %892 = vector.load %arg5[%c2_140, %c1_141, %c0_142, %c0_143] : memref<3x9x1x256xf32, #tpu.memory_space<vmem>>, vector<1x1x1x256xf32>
    %893 = vector.shape_cast %892 : vector<1x1x1x256xf32> to vector<1x256xf32>
    %894 = vector.broadcast %893 : vector<1x256xf32> to vector<4x256xf32>
    %895 = arith.mulf %891, %894 : vector<4x256xf32>
    %896 = vector.extract_strided_slice %860 {offsets = [0, 4], sizes = [4, 1], strides = [1, 1]} : vector<4x36xf32> to vector<4x1xf32>
    %897 = vector.extract_strided_slice %895 {offsets = [0, 0], sizes = [1, 256], strides = [1, 1]} : vector<4x256xf32> to vector<1x256xf32>
    %898 = vector.broadcast %896 : vector<4x1xf32> to vector<4x256xf32>
    %899 = vector.broadcast %897 : vector<1x256xf32> to vector<4x256xf32>
    %900 = arith.mulf %898, %899 : vector<4x256xf32>
    %901 = arith.addf %890, %900 : vector<4x256xf32>
    %902 = vector.extract_strided_slice %860 {offsets = [0, 5], sizes = [4, 1], strides = [1, 1]} : vector<4x36xf32> to vector<4x1xf32>
    %903 = vector.extract_strided_slice %895 {offsets = [1, 0], sizes = [1, 256], strides = [1, 1]} : vector<4x256xf32> to vector<1x256xf32>
    %904 = vector.broadcast %902 : vector<4x1xf32> to vector<4x256xf32>
    %905 = vector.broadcast %903 : vector<1x256xf32> to vector<4x256xf32>
    %906 = arith.mulf %904, %905 : vector<4x256xf32>
    %907 = arith.addf %901, %906 : vector<4x256xf32>
    %908 = vector.extract_strided_slice %860 {offsets = [0, 6], sizes = [4, 1], strides = [1, 1]} : vector<4x36xf32> to vector<4x1xf32>
    %909 = vector.extract_strided_slice %895 {offsets = [2, 0], sizes = [1, 256], strides = [1, 1]} : vector<4x256xf32> to vector<1x256xf32>
    %910 = vector.broadcast %908 : vector<4x1xf32> to vector<4x256xf32>
    %911 = vector.broadcast %909 : vector<1x256xf32> to vector<4x256xf32>
    %912 = arith.mulf %910, %911 : vector<4x256xf32>
    %913 = arith.addf %907, %912 : vector<4x256xf32>
    %914 = vector.extract_strided_slice %860 {offsets = [0, 7], sizes = [4, 1], strides = [1, 1]} : vector<4x36xf32> to vector<4x1xf32>
    %915 = vector.extract_strided_slice %895 {offsets = [3, 0], sizes = [1, 256], strides = [1, 1]} : vector<4x256xf32> to vector<1x256xf32>
    %916 = vector.broadcast %914 : vector<4x1xf32> to vector<4x256xf32>
    %917 = vector.broadcast %915 : vector<1x256xf32> to vector<4x256xf32>
    %918 = arith.mulf %916, %917 : vector<4x256xf32>
    %919 = arith.addf %913, %918 : vector<4x256xf32>
    %c75_i32 = arith.constant 75 : i32
    %920 = tpu.dynamic_rotate %826 by %c75_i32 dim 1 : vector<4x256xf32>, i32 -> vector<4x256xf32>
    %c2_144 = arith.constant 2 : index
    %c2_145 = arith.constant 2 : index
    %c0_146 = arith.constant 0 : index
    %c0_147 = arith.constant 0 : index
    %921 = vector.load %arg5[%c2_144, %c2_145, %c0_146, %c0_147] : memref<3x9x1x256xf32, #tpu.memory_space<vmem>>, vector<1x1x1x256xf32>
    %922 = vector.shape_cast %921 : vector<1x1x1x256xf32> to vector<1x256xf32>
    %923 = vector.broadcast %922 : vector<1x256xf32> to vector<4x256xf32>
    %924 = arith.mulf %920, %923 : vector<4x256xf32>
    %925 = vector.extract_strided_slice %860 {offsets = [0, 8], sizes = [4, 1], strides = [1, 1]} : vector<4x36xf32> to vector<4x1xf32>
    %926 = vector.extract_strided_slice %924 {offsets = [0, 0], sizes = [1, 256], strides = [1, 1]} : vector<4x256xf32> to vector<1x256xf32>
    %927 = vector.broadcast %925 : vector<4x1xf32> to vector<4x256xf32>
    %928 = vector.broadcast %926 : vector<1x256xf32> to vector<4x256xf32>
    %929 = arith.mulf %927, %928 : vector<4x256xf32>
    %930 = arith.addf %919, %929 : vector<4x256xf32>
    %931 = vector.extract_strided_slice %860 {offsets = [0, 9], sizes = [4, 1], strides = [1, 1]} : vector<4x36xf32> to vector<4x1xf32>
    %932 = vector.extract_strided_slice %924 {offsets = [1, 0], sizes = [1, 256], strides = [1, 1]} : vector<4x256xf32> to vector<1x256xf32>
    %933 = vector.broadcast %931 : vector<4x1xf32> to vector<4x256xf32>
    %934 = vector.broadcast %932 : vector<1x256xf32> to vector<4x256xf32>
    %935 = arith.mulf %933, %934 : vector<4x256xf32>
    %936 = arith.addf %930, %935 : vector<4x256xf32>
    %937 = vector.extract_strided_slice %860 {offsets = [0, 10], sizes = [4, 1], strides = [1, 1]} : vector<4x36xf32> to vector<4x1xf32>
    %938 = vector.extract_strided_slice %924 {offsets = [2, 0], sizes = [1, 256], strides = [1, 1]} : vector<4x256xf32> to vector<1x256xf32>
    %939 = vector.broadcast %937 : vector<4x1xf32> to vector<4x256xf32>
    %940 = vector.broadcast %938 : vector<1x256xf32> to vector<4x256xf32>
    %941 = arith.mulf %939, %940 : vector<4x256xf32>
    %942 = arith.addf %936, %941 : vector<4x256xf32>
    %943 = vector.extract_strided_slice %860 {offsets = [0, 11], sizes = [4, 1], strides = [1, 1]} : vector<4x36xf32> to vector<4x1xf32>
    %944 = vector.extract_strided_slice %924 {offsets = [3, 0], sizes = [1, 256], strides = [1, 1]} : vector<4x256xf32> to vector<1x256xf32>
    %945 = vector.broadcast %943 : vector<4x1xf32> to vector<4x256xf32>
    %946 = vector.broadcast %944 : vector<1x256xf32> to vector<4x256xf32>
    %947 = arith.mulf %945, %946 : vector<4x256xf32>
    %948 = arith.addf %942, %947 : vector<4x256xf32>
    %c5_i32 = arith.constant 5 : i32
    %949 = tpu.dynamic_rotate %826 by %c5_i32 dim 1 : vector<4x256xf32>, i32 -> vector<4x256xf32>
    %c2_148 = arith.constant 2 : index
    %c3_149 = arith.constant 3 : index
    %c0_150 = arith.constant 0 : index
    %c0_151 = arith.constant 0 : index
    %950 = vector.load %arg5[%c2_148, %c3_149, %c0_150, %c0_151] : memref<3x9x1x256xf32, #tpu.memory_space<vmem>>, vector<1x1x1x256xf32>
    %951 = vector.shape_cast %950 : vector<1x1x1x256xf32> to vector<1x256xf32>
    %952 = vector.broadcast %951 : vector<1x256xf32> to vector<4x256xf32>
    %953 = arith.mulf %949, %952 : vector<4x256xf32>
    %954 = vector.extract_strided_slice %860 {offsets = [0, 12], sizes = [4, 1], strides = [1, 1]} : vector<4x36xf32> to vector<4x1xf32>
    %955 = vector.extract_strided_slice %953 {offsets = [0, 0], sizes = [1, 256], strides = [1, 1]} : vector<4x256xf32> to vector<1x256xf32>
    %956 = vector.broadcast %954 : vector<4x1xf32> to vector<4x256xf32>
    %957 = vector.broadcast %955 : vector<1x256xf32> to vector<4x256xf32>
    %958 = arith.mulf %956, %957 : vector<4x256xf32>
    %959 = arith.addf %948, %958 : vector<4x256xf32>
    %960 = vector.extract_strided_slice %860 {offsets = [0, 13], sizes = [4, 1], strides = [1, 1]} : vector<4x36xf32> to vector<4x1xf32>
    %961 = vector.extract_strided_slice %953 {offsets = [1, 0], sizes = [1, 256], strides = [1, 1]} : vector<4x256xf32> to vector<1x256xf32>
    %962 = vector.broadcast %960 : vector<4x1xf32> to vector<4x256xf32>
    %963 = vector.broadcast %961 : vector<1x256xf32> to vector<4x256xf32>
    %964 = arith.mulf %962, %963 : vector<4x256xf32>
    %965 = arith.addf %959, %964 : vector<4x256xf32>
    %966 = vector.extract_strided_slice %860 {offsets = [0, 14], sizes = [4, 1], strides = [1, 1]} : vector<4x36xf32> to vector<4x1xf32>
    %967 = vector.extract_strided_slice %953 {offsets = [2, 0], sizes = [1, 256], strides = [1, 1]} : vector<4x256xf32> to vector<1x256xf32>
    %968 = vector.broadcast %966 : vector<4x1xf32> to vector<4x256xf32>
    %969 = vector.broadcast %967 : vector<1x256xf32> to vector<4x256xf32>
    %970 = arith.mulf %968, %969 : vector<4x256xf32>
    %971 = arith.addf %965, %970 : vector<4x256xf32>
    %972 = vector.extract_strided_slice %860 {offsets = [0, 15], sizes = [4, 1], strides = [1, 1]} : vector<4x36xf32> to vector<4x1xf32>
    %973 = vector.extract_strided_slice %953 {offsets = [3, 0], sizes = [1, 256], strides = [1, 1]} : vector<4x256xf32> to vector<1x256xf32>
    %974 = vector.broadcast %972 : vector<4x1xf32> to vector<4x256xf32>
    %975 = vector.broadcast %973 : vector<1x256xf32> to vector<4x256xf32>
    %976 = arith.mulf %974, %975 : vector<4x256xf32>
    %977 = arith.addf %971, %976 : vector<4x256xf32>
    %978 = vector.extract_strided_slice %860 {offsets = [0, 16], sizes = [4, 1], strides = [1, 1]} : vector<4x36xf32> to vector<4x1xf32>
    %979 = vector.extract_strided_slice %826 {offsets = [0, 0], sizes = [1, 256], strides = [1, 1]} : vector<4x256xf32> to vector<1x256xf32>
    %980 = vector.broadcast %978 : vector<4x1xf32> to vector<4x256xf32>
    %981 = vector.broadcast %979 : vector<1x256xf32> to vector<4x256xf32>
    %982 = arith.mulf %980, %981 : vector<4x256xf32>
    %983 = arith.addf %977, %982 : vector<4x256xf32>
    %984 = vector.extract_strided_slice %860 {offsets = [0, 17], sizes = [4, 1], strides = [1, 1]} : vector<4x36xf32> to vector<4x1xf32>
    %985 = vector.extract_strided_slice %826 {offsets = [1, 0], sizes = [1, 256], strides = [1, 1]} : vector<4x256xf32> to vector<1x256xf32>
    %986 = vector.broadcast %984 : vector<4x1xf32> to vector<4x256xf32>
    %987 = vector.broadcast %985 : vector<1x256xf32> to vector<4x256xf32>
    %988 = arith.mulf %986, %987 : vector<4x256xf32>
    %989 = arith.addf %983, %988 : vector<4x256xf32>
    %990 = vector.extract_strided_slice %860 {offsets = [0, 18], sizes = [4, 1], strides = [1, 1]} : vector<4x36xf32> to vector<4x1xf32>
    %991 = vector.extract_strided_slice %826 {offsets = [2, 0], sizes = [1, 256], strides = [1, 1]} : vector<4x256xf32> to vector<1x256xf32>
    %992 = vector.broadcast %990 : vector<4x1xf32> to vector<4x256xf32>
    %993 = vector.broadcast %991 : vector<1x256xf32> to vector<4x256xf32>
    %994 = arith.mulf %992, %993 : vector<4x256xf32>
    %995 = arith.addf %989, %994 : vector<4x256xf32>
    %996 = vector.extract_strided_slice %860 {offsets = [0, 19], sizes = [4, 1], strides = [1, 1]} : vector<4x36xf32> to vector<4x1xf32>
    %997 = vector.extract_strided_slice %826 {offsets = [3, 0], sizes = [1, 256], strides = [1, 1]} : vector<4x256xf32> to vector<1x256xf32>
    %998 = vector.broadcast %996 : vector<4x1xf32> to vector<4x256xf32>
    %999 = vector.broadcast %997 : vector<1x256xf32> to vector<4x256xf32>
    %1000 = arith.mulf %998, %999 : vector<4x256xf32>
    %1001 = arith.addf %995, %1000 : vector<4x256xf32>
    %c251_i32 = arith.constant 251 : i32
    %1002 = tpu.dynamic_rotate %826 by %c251_i32 dim 1 : vector<4x256xf32>, i32 -> vector<4x256xf32>
    %c2_152 = arith.constant 2 : index
    %c5_153 = arith.constant 5 : index
    %c0_154 = arith.constant 0 : index
    %c0_155 = arith.constant 0 : index
    %1003 = vector.load %arg5[%c2_152, %c5_153, %c0_154, %c0_155] : memref<3x9x1x256xf32, #tpu.memory_space<vmem>>, vector<1x1x1x256xf32>
    %1004 = vector.shape_cast %1003 : vector<1x1x1x256xf32> to vector<1x256xf32>
    %1005 = vector.broadcast %1004 : vector<1x256xf32> to vector<4x256xf32>
    %1006 = arith.mulf %1002, %1005 : vector<4x256xf32>
    %1007 = vector.extract_strided_slice %860 {offsets = [0, 20], sizes = [4, 1], strides = [1, 1]} : vector<4x36xf32> to vector<4x1xf32>
    %1008 = vector.extract_strided_slice %1006 {offsets = [0, 0], sizes = [1, 256], strides = [1, 1]} : vector<4x256xf32> to vector<1x256xf32>
    %1009 = vector.broadcast %1007 : vector<4x1xf32> to vector<4x256xf32>
    %1010 = vector.broadcast %1008 : vector<1x256xf32> to vector<4x256xf32>
    %1011 = arith.mulf %1009, %1010 : vector<4x256xf32>
    %1012 = arith.addf %1001, %1011 : vector<4x256xf32>
    %1013 = vector.extract_strided_slice %860 {offsets = [0, 21], sizes = [4, 1], strides = [1, 1]} : vector<4x36xf32> to vector<4x1xf32>
    %1014 = vector.extract_strided_slice %1006 {offsets = [1, 0], sizes = [1, 256], strides = [1, 1]} : vector<4x256xf32> to vector<1x256xf32>
    %1015 = vector.broadcast %1013 : vector<4x1xf32> to vector<4x256xf32>
    %1016 = vector.broadcast %1014 : vector<1x256xf32> to vector<4x256xf32>
    %1017 = arith.mulf %1015, %1016 : vector<4x256xf32>
    %1018 = arith.addf %1012, %1017 : vector<4x256xf32>
    %1019 = vector.extract_strided_slice %860 {offsets = [0, 22], sizes = [4, 1], strides = [1, 1]} : vector<4x36xf32> to vector<4x1xf32>
    %1020 = vector.extract_strided_slice %1006 {offsets = [2, 0], sizes = [1, 256], strides = [1, 1]} : vector<4x256xf32> to vector<1x256xf32>
    %1021 = vector.broadcast %1019 : vector<4x1xf32> to vector<4x256xf32>
    %1022 = vector.broadcast %1020 : vector<1x256xf32> to vector<4x256xf32>
    %1023 = arith.mulf %1021, %1022 : vector<4x256xf32>
    %1024 = arith.addf %1018, %1023 : vector<4x256xf32>
    %1025 = vector.extract_strided_slice %860 {offsets = [0, 23], sizes = [4, 1], strides = [1, 1]} : vector<4x36xf32> to vector<4x1xf32>
    %1026 = vector.extract_strided_slice %1006 {offsets = [3, 0], sizes = [1, 256], strides = [1, 1]} : vector<4x256xf32> to vector<1x256xf32>
    %1027 = vector.broadcast %1025 : vector<4x1xf32> to vector<4x256xf32>
    %1028 = vector.broadcast %1026 : vector<1x256xf32> to vector<4x256xf32>
    %1029 = arith.mulf %1027, %1028 : vector<4x256xf32>
    %1030 = arith.addf %1024, %1029 : vector<4x256xf32>
    %c181_i32 = arith.constant 181 : i32
    %1031 = tpu.dynamic_rotate %826 by %c181_i32 dim 1 : vector<4x256xf32>, i32 -> vector<4x256xf32>
    %c2_156 = arith.constant 2 : index
    %c6_157 = arith.constant 6 : index
    %c0_158 = arith.constant 0 : index
    %c0_159 = arith.constant 0 : index
    %1032 = vector.load %arg5[%c2_156, %c6_157, %c0_158, %c0_159] : memref<3x9x1x256xf32, #tpu.memory_space<vmem>>, vector<1x1x1x256xf32>
    %1033 = vector.shape_cast %1032 : vector<1x1x1x256xf32> to vector<1x256xf32>
    %1034 = vector.broadcast %1033 : vector<1x256xf32> to vector<4x256xf32>
    %1035 = arith.mulf %1031, %1034 : vector<4x256xf32>
    %1036 = vector.extract_strided_slice %860 {offsets = [0, 24], sizes = [4, 1], strides = [1, 1]} : vector<4x36xf32> to vector<4x1xf32>
    %1037 = vector.extract_strided_slice %1035 {offsets = [0, 0], sizes = [1, 256], strides = [1, 1]} : vector<4x256xf32> to vector<1x256xf32>
    %1038 = vector.broadcast %1036 : vector<4x1xf32> to vector<4x256xf32>
    %1039 = vector.broadcast %1037 : vector<1x256xf32> to vector<4x256xf32>
    %1040 = arith.mulf %1038, %1039 : vector<4x256xf32>
    %1041 = arith.addf %1030, %1040 : vector<4x256xf32>
    %1042 = vector.extract_strided_slice %860 {offsets = [0, 25], sizes = [4, 1], strides = [1, 1]} : vector<4x36xf32> to vector<4x1xf32>
    %1043 = vector.extract_strided_slice %1035 {offsets = [1, 0], sizes = [1, 256], strides = [1, 1]} : vector<4x256xf32> to vector<1x256xf32>
    %1044 = vector.broadcast %1042 : vector<4x1xf32> to vector<4x256xf32>
    %1045 = vector.broadcast %1043 : vector<1x256xf32> to vector<4x256xf32>
    %1046 = arith.mulf %1044, %1045 : vector<4x256xf32>
    %1047 = arith.addf %1041, %1046 : vector<4x256xf32>
    %1048 = vector.extract_strided_slice %860 {offsets = [0, 26], sizes = [4, 1], strides = [1, 1]} : vector<4x36xf32> to vector<4x1xf32>
    %1049 = vector.extract_strided_slice %1035 {offsets = [2, 0], sizes = [1, 256], strides = [1, 1]} : vector<4x256xf32> to vector<1x256xf32>
    %1050 = vector.broadcast %1048 : vector<4x1xf32> to vector<4x256xf32>
    %1051 = vector.broadcast %1049 : vector<1x256xf32> to vector<4x256xf32>
    %1052 = arith.mulf %1050, %1051 : vector<4x256xf32>
    %1053 = arith.addf %1047, %1052 : vector<4x256xf32>
    %1054 = vector.extract_strided_slice %860 {offsets = [0, 27], sizes = [4, 1], strides = [1, 1]} : vector<4x36xf32> to vector<4x1xf32>
    %1055 = vector.extract_strided_slice %1035 {offsets = [3, 0], sizes = [1, 256], strides = [1, 1]} : vector<4x256xf32> to vector<1x256xf32>
    %1056 = vector.broadcast %1054 : vector<4x1xf32> to vector<4x256xf32>
    %1057 = vector.broadcast %1055 : vector<1x256xf32> to vector<4x256xf32>
    %1058 = arith.mulf %1056, %1057 : vector<4x256xf32>
    %1059 = arith.addf %1053, %1058 : vector<4x256xf32>
    %c176_i32 = arith.constant 176 : i32
    %1060 = tpu.dynamic_rotate %826 by %c176_i32 dim 1 : vector<4x256xf32>, i32 -> vector<4x256xf32>
    %c2_160 = arith.constant 2 : index
    %c7_161 = arith.constant 7 : index
    %c0_162 = arith.constant 0 : index
    %c0_163 = arith.constant 0 : index
    %1061 = vector.load %arg5[%c2_160, %c7_161, %c0_162, %c0_163] : memref<3x9x1x256xf32, #tpu.memory_space<vmem>>, vector<1x1x1x256xf32>
    %1062 = vector.shape_cast %1061 : vector<1x1x1x256xf32> to vector<1x256xf32>
    %1063 = vector.broadcast %1062 : vector<1x256xf32> to vector<4x256xf32>
    %1064 = arith.mulf %1060, %1063 : vector<4x256xf32>
    %1065 = vector.extract_strided_slice %860 {offsets = [0, 28], sizes = [4, 1], strides = [1, 1]} : vector<4x36xf32> to vector<4x1xf32>
    %1066 = vector.extract_strided_slice %1064 {offsets = [0, 0], sizes = [1, 256], strides = [1, 1]} : vector<4x256xf32> to vector<1x256xf32>
    %1067 = vector.broadcast %1065 : vector<4x1xf32> to vector<4x256xf32>
    %1068 = vector.broadcast %1066 : vector<1x256xf32> to vector<4x256xf32>
    %1069 = arith.mulf %1067, %1068 : vector<4x256xf32>
    %1070 = arith.addf %1059, %1069 : vector<4x256xf32>
    %1071 = vector.extract_strided_slice %860 {offsets = [0, 29], sizes = [4, 1], strides = [1, 1]} : vector<4x36xf32> to vector<4x1xf32>
    %1072 = vector.extract_strided_slice %1064 {offsets = [1, 0], sizes = [1, 256], strides = [1, 1]} : vector<4x256xf32> to vector<1x256xf32>
    %1073 = vector.broadcast %1071 : vector<4x1xf32> to vector<4x256xf32>
    %1074 = vector.broadcast %1072 : vector<1x256xf32> to vector<4x256xf32>
    %1075 = arith.mulf %1073, %1074 : vector<4x256xf32>
    %1076 = arith.addf %1070, %1075 : vector<4x256xf32>
    %1077 = vector.extract_strided_slice %860 {offsets = [0, 30], sizes = [4, 1], strides = [1, 1]} : vector<4x36xf32> to vector<4x1xf32>
    %1078 = vector.extract_strided_slice %1064 {offsets = [2, 0], sizes = [1, 256], strides = [1, 1]} : vector<4x256xf32> to vector<1x256xf32>
    %1079 = vector.broadcast %1077 : vector<4x1xf32> to vector<4x256xf32>
    %1080 = vector.broadcast %1078 : vector<1x256xf32> to vector<4x256xf32>
    %1081 = arith.mulf %1079, %1080 : vector<4x256xf32>
    %1082 = arith.addf %1076, %1081 : vector<4x256xf32>
    %1083 = vector.extract_strided_slice %860 {offsets = [0, 31], sizes = [4, 1], strides = [1, 1]} : vector<4x36xf32> to vector<4x1xf32>
    %1084 = vector.extract_strided_slice %1064 {offsets = [3, 0], sizes = [1, 256], strides = [1, 1]} : vector<4x256xf32> to vector<1x256xf32>
    %1085 = vector.broadcast %1083 : vector<4x1xf32> to vector<4x256xf32>
    %1086 = vector.broadcast %1084 : vector<1x256xf32> to vector<4x256xf32>
    %1087 = arith.mulf %1085, %1086 : vector<4x256xf32>
    %1088 = arith.addf %1082, %1087 : vector<4x256xf32>
    %c171_i32 = arith.constant 171 : i32
    %1089 = tpu.dynamic_rotate %826 by %c171_i32 dim 1 : vector<4x256xf32>, i32 -> vector<4x256xf32>
    %c2_164 = arith.constant 2 : index
    %c8_165 = arith.constant 8 : index
    %c0_166 = arith.constant 0 : index
    %c0_167 = arith.constant 0 : index
    %1090 = vector.load %arg5[%c2_164, %c8_165, %c0_166, %c0_167] : memref<3x9x1x256xf32, #tpu.memory_space<vmem>>, vector<1x1x1x256xf32>
    %1091 = vector.shape_cast %1090 : vector<1x1x1x256xf32> to vector<1x256xf32>
    %1092 = vector.broadcast %1091 : vector<1x256xf32> to vector<4x256xf32>
    %1093 = arith.mulf %1089, %1092 : vector<4x256xf32>
    %1094 = vector.extract_strided_slice %860 {offsets = [0, 32], sizes = [4, 1], strides = [1, 1]} : vector<4x36xf32> to vector<4x1xf32>
    %1095 = vector.extract_strided_slice %1093 {offsets = [0, 0], sizes = [1, 256], strides = [1, 1]} : vector<4x256xf32> to vector<1x256xf32>
    %1096 = vector.broadcast %1094 : vector<4x1xf32> to vector<4x256xf32>
    %1097 = vector.broadcast %1095 : vector<1x256xf32> to vector<4x256xf32>
    %1098 = arith.mulf %1096, %1097 : vector<4x256xf32>
    %1099 = arith.addf %1088, %1098 : vector<4x256xf32>
    %1100 = vector.extract_strided_slice %860 {offsets = [0, 33], sizes = [4, 1], strides = [1, 1]} : vector<4x36xf32> to vector<4x1xf32>
    %1101 = vector.extract_strided_slice %1093 {offsets = [1, 0], sizes = [1, 256], strides = [1, 1]} : vector<4x256xf32> to vector<1x256xf32>
    %1102 = vector.broadcast %1100 : vector<4x1xf32> to vector<4x256xf32>
    %1103 = vector.broadcast %1101 : vector<1x256xf32> to vector<4x256xf32>
    %1104 = arith.mulf %1102, %1103 : vector<4x256xf32>
    %1105 = arith.addf %1099, %1104 : vector<4x256xf32>
    %1106 = vector.extract_strided_slice %860 {offsets = [0, 34], sizes = [4, 1], strides = [1, 1]} : vector<4x36xf32> to vector<4x1xf32>
    %1107 = vector.extract_strided_slice %1093 {offsets = [2, 0], sizes = [1, 256], strides = [1, 1]} : vector<4x256xf32> to vector<1x256xf32>
    %1108 = vector.broadcast %1106 : vector<4x1xf32> to vector<4x256xf32>
    %1109 = vector.broadcast %1107 : vector<1x256xf32> to vector<4x256xf32>
    %1110 = arith.mulf %1108, %1109 : vector<4x256xf32>
    %1111 = arith.addf %1105, %1110 : vector<4x256xf32>
    %1112 = vector.extract_strided_slice %860 {offsets = [0, 35], sizes = [4, 1], strides = [1, 1]} : vector<4x36xf32> to vector<4x1xf32>
    %1113 = vector.extract_strided_slice %1093 {offsets = [3, 0], sizes = [1, 256], strides = [1, 1]} : vector<4x256xf32> to vector<1x256xf32>
    %1114 = vector.broadcast %1112 : vector<4x1xf32> to vector<4x256xf32>
    %1115 = vector.broadcast %1113 : vector<1x256xf32> to vector<4x256xf32>
    %1116 = arith.mulf %1114, %1115 : vector<4x256xf32>
    %1117 = arith.addf %1111, %1116 : vector<4x256xf32>
    %c2_168 = arith.constant 2 : index
    %c0_169 = arith.constant 0 : index
    %c0_170 = arith.constant 0 : index
    %1118 = vector.load %arg3[%c2_168, %c0_169, %c0_170] : memref<4x4x1xf32, #tpu.memory_space<vmem>>, vector<1x4x1xf32>
    %1119 = vector.shape_cast %1118 : vector<1x4x1xf32> to vector<4x1xf32>
    %1120 = vector.broadcast %1119 : vector<4x1xf32> to vector<4x256xf32>
    %1121 = arith.addf %1117, %1120 : vector<4x256xf32>
    %cst_171 = arith.constant 0.000000e+00 : f32
    %1122 = vector.broadcast %cst_171 : f32 to vector<4x256xf32>
    %1123 = vector.extract_strided_slice %2 {offsets = [0, 0], sizes = [4, 1], strides = [1, 1]} : vector<4x4xf32> to vector<4x1xf32>
    %1124 = vector.extract_strided_slice %1121 {offsets = [0, 0], sizes = [1, 256], strides = [1, 1]} : vector<4x256xf32> to vector<1x256xf32>
    %1125 = vector.broadcast %1123 : vector<4x1xf32> to vector<4x256xf32>
    %1126 = vector.broadcast %1124 : vector<1x256xf32> to vector<4x256xf32>
    %1127 = arith.mulf %1125, %1126 : vector<4x256xf32>
    %1128 = arith.addf %1122, %1127 : vector<4x256xf32>
    %1129 = vector.extract_strided_slice %2 {offsets = [0, 1], sizes = [4, 1], strides = [1, 1]} : vector<4x4xf32> to vector<4x1xf32>
    %1130 = vector.extract_strided_slice %1121 {offsets = [1, 0], sizes = [1, 256], strides = [1, 1]} : vector<4x256xf32> to vector<1x256xf32>
    %1131 = vector.broadcast %1129 : vector<4x1xf32> to vector<4x256xf32>
    %1132 = vector.broadcast %1130 : vector<1x256xf32> to vector<4x256xf32>
    %1133 = arith.mulf %1131, %1132 : vector<4x256xf32>
    %1134 = arith.addf %1128, %1133 : vector<4x256xf32>
    %1135 = vector.extract_strided_slice %2 {offsets = [0, 2], sizes = [4, 1], strides = [1, 1]} : vector<4x4xf32> to vector<4x1xf32>
    %1136 = vector.extract_strided_slice %1121 {offsets = [2, 0], sizes = [1, 256], strides = [1, 1]} : vector<4x256xf32> to vector<1x256xf32>
    %1137 = vector.broadcast %1135 : vector<4x1xf32> to vector<4x256xf32>
    %1138 = vector.broadcast %1136 : vector<1x256xf32> to vector<4x256xf32>
    %1139 = arith.mulf %1137, %1138 : vector<4x256xf32>
    %1140 = arith.addf %1134, %1139 : vector<4x256xf32>
    %1141 = vector.extract_strided_slice %2 {offsets = [0, 3], sizes = [4, 1], strides = [1, 1]} : vector<4x4xf32> to vector<4x1xf32>
    %1142 = vector.extract_strided_slice %1121 {offsets = [3, 0], sizes = [1, 256], strides = [1, 1]} : vector<4x256xf32> to vector<1x256xf32>
    %1143 = vector.broadcast %1141 : vector<4x1xf32> to vector<4x256xf32>
    %1144 = vector.broadcast %1142 : vector<1x256xf32> to vector<4x256xf32>
    %1145 = arith.mulf %1143, %1144 : vector<4x256xf32>
    %1146 = arith.addf %1140, %1145 : vector<4x256xf32>
    %c3_172 = arith.constant 3 : index
    %c0_173 = arith.constant 0 : index
    %c0_174 = arith.constant 0 : index
    %1147 = vector.load %arg3[%c3_172, %c0_173, %c0_174] : memref<4x4x1xf32, #tpu.memory_space<vmem>>, vector<1x4x1xf32>
    %1148 = vector.shape_cast %1147 : vector<1x4x1xf32> to vector<4x1xf32>
    %1149 = vector.broadcast %1148 : vector<4x1xf32> to vector<4x256xf32>
    %1150 = arith.addf %1146, %1149 : vector<4x256xf32>
    %cst_175 = arith.constant 0.000000e+00 : f32
    %1151 = vector.broadcast %cst_175 : f32 to vector<4x256xf32>
    %1152 = arith.maximumf %1150, %1151 : vector<4x256xf32>
    %1153 = arith.addf %858, %1152 : vector<4x256xf32>
    %c0_176 = arith.constant 0 : index
    %c0_177 = arith.constant 0 : index
    %c0_178 = arith.constant 0 : index
    %1154 = vector.load %arg6[%c0_176, %c0_177, %c0_178] : memref<1x4x256xf32, #tpu.memory_space<vmem>>, vector<1x4x256xf32>
    %1155 = vector.shape_cast %1154 : vector<1x4x256xf32> to vector<4x256xf32>
    %1156 = vector.shape_cast %1153 : vector<4x256xf32> to vector<1x4x256xf32>
    tpu.vector_store %arg6[%c0_176, %c0_177, %c0_178], %1156 {strides = array<i32>} : memref<1x4x256xf32, #tpu.memory_space<vmem>>, vector<1x4x256xf32>,
    return
  }
  func.func @transform_0(%arg0: i32) -> (i32, i32, i32) {
    %c0_i32 = arith.constant 0 : i32
    %c0_i32_0 = arith.constant 0 : i32
    %c0_i32_1 = arith.constant 0 : i32
    return %arg0, %c0_i32, %c0_i32_0 : i32, i32, i32
  }
  func.func @transform_1(%arg0: i32) -> (i32, i32, i32) {
    %c0_i32 = arith.constant 0 : i32
    %c0_i32_0 = arith.constant 0 : i32
    %c0_i32_1 = arith.constant 0 : i32
    %c0_i32_2 = arith.constant 0 : i32
    return %c0_i32, %c0_i32_0, %c0_i32_1 : i32, i32, i32
  }
  func.func @transform_2(%arg0: i32) -> (i32, i32, i32) {
    %c0_i32 = arith.constant 0 : i32
    %c0_i32_0 = arith.constant 0 : i32
    %c0_i32_1 = arith.constant 0 : i32
    %c0_i32_2 = arith.constant 0 : i32
    return %c0_i32, %c0_i32_0, %c0_i32_1 : i32, i32, i32
  }
  func.func @transform_3(%arg0: i32) -> (i32, i32) {
    %c0_i32 = arith.constant 0 : i32
    %c0_i32_0 = arith.constant 0 : i32
    %c0_i32_1 = arith.constant 0 : i32
    return %c0_i32, %c0_i32_0 : i32, i32
  }
  func.func @transform_4(%arg0: i32) -> (i32, i32, i32, i32) {
    %c0_i32 = arith.constant 0 : i32
    %c0_i32_0 = arith.constant 0 : i32
    %c0_i32_1 = arith.constant 0 : i32
    %c0_i32_2 = arith.constant 0 : i32
    %c0_i32_3 = arith.constant 0 : i32
    return %c0_i32, %c0_i32_0, %c0_i32_1, %c0_i32_2 : i32, i32, i32, i32
  }
  func.func @transform_5(%arg0: i32) -> (i32, i32, i32) {
    %c0_i32 = arith.constant 0 : i32
    %c0_i32_0 = arith.constant 0 : i32
    %c0_i32_1 = arith.constant 0 : i32
    return %arg0, %c0_i32, %c0_i32_0 : i32, i32, i32
  }
}

</mosaic_0001>

<llo_original>
// kernel: dacblock_forward.1
$region0: #{dacblock_forward.1}
  #allocation0 [shape = 'u32[]', space=smem, size = 0x4, offset = 0x4, fixed_abs, tag = 'smem constant byte address 0x4 - core index']
  #allocation1 [shape = 'u32[144,128]{1,0:T(1,128)}', space=vmem, size = 0x12000, scoped, tag = 'internal scratch']
  %s0 = inlined_call_operand.vmem [shape: f32[2,4,256], index: 0, kind: input, shape index: {}]
  %s1 = inlined_call_operand.vmem [shape: f32[3,4,36], index: 1, kind: input, shape index: {}]
  %s2 = inlined_call_operand.vmem [shape: f32[4,4,1], index: 2, kind: input, shape index: {}]
  %s3 = inlined_call_operand.vmem [shape: f32[4,4], index: 3, kind: input, shape index: {}]
  %s4 = inlined_call_operand.vmem [shape: f32[3,9,1,256], index: 4, kind: input, shape index: {}]
  %s5 = inlined_call_operand.vmem [shape: f32[2,4,256], index: 5, kind: output, shape index: {}]
  %s6 = sld [smem:[#allocation0]]
  $region53: #{dacblock_forward.1} parent=0
    _
  %s8 = ssub.s32 1, %s6
  %s9 = scalar_select 0, %s8, %s6
  loop: start=0, step=1, limit=4
  $region2: #{dacblock_forward.1} parent=0 // loop_pre_header
    _
  $region3: #{dacblock_forward.1} parent=0 // loop_header
    %s11 = sphi 0, %s15
    %p12 = scmp.ge.s32.totalorder %s11, 4
    %s21 = sphi 0, %s23
    %s24 = sphi 0, %s21
    %s25 = sphi 0, %s24
    %s41 = sphi 0, %s25
    %s45 = sphi 0, %s45
    %s47 = sphi 0, %s45
    %s48 = sphi 0, %s47
    %s62 = sphi 0, %s48
    %s66 = sphi 0, %s66
    %s68 = sphi 0, %s66
    %s69 = sphi 0, %s68
    %s83 = sphi 0, %s69
    %s87 = sphi 0, %s87
    %s89 = sphi 0, %s87
    %s90 = sphi 0, %s89
    %s104 = sphi 0, %s90
    %s108 = sphi 0, %s108
    %s110 = sphi 0, %s108
    %s111 = sphi 0, %s110
    %s125 = sphi 0, %s111
    %s131 = sphi 0, %s133
    %s134 = sphi 0, %s131
    %s135 = sphi 0, %s134
    %s151 = sphi 0, %s135
  $region4: #{dacblock_forward.1} parent=0 // loop_header_branch
    %14 = sbr.rel (%p12) target = $region8
  $region5: #{dacblock_forward.1} parent=0 // loop_body
    %s16 = ssub.s32 %s11, 1
    %s17 = ssub.s32 %s11, 2
    %s18 = sadd.s32 %s11, 1
    %s19 = ssub.s32 %s11, %s18
    %p20 = scmp.eq.s32.totalorder %s19, 0
    %s22 = sadd.s32 %s21, 1
    %s23 = scalar_select %p20, %s21, %s22
    %p26 = pneg %p20
    %p27 = scmp.eq.s32.totalorder %s11, 1
    %p28 = por %p26, %p27
    %p29 = scmp.ne.s32.totalorder %s21, %s24
    %p30 = scmp.eq.s32.totalorder %s11, 0
    %p31 = por %p29, %p30
    %p32 = scmp.ne.s32.totalorder %s21, %s24
    %p33 = scmp.eq.s32.totalorder %s16, 1
    %p34 = por %p32, %p33
    %p35 = scmp.ne.s32.totalorder %s24, %s25
    %p36 = scmp.eq.s32.totalorder %s16, 0
    %p37 = por %p35, %p36
    %p38 = scmp.ne.s32.totalorder %s24, %s25
    %p39 = scmp.eq.s32.totalorder %s17, 1
    %p40 = por %p38, %p39
    %p42 = scmp.ne.s32.totalorder %s25, %s41
    %p43 = scmp.eq.s32.totalorder %s17, 0
    %p44 = por %p42, %p43
    %s46 = sadd.s32 %s45, 1
    %p49 = scmp.eq.s32.totalorder %s11, 1
    %p50 = scmp.ne.s32.totalorder %s45, %s47
    %p51 = scmp.eq.s32.totalorder %s11, 0
    %p52 = por %p50, %p51
    %p53 = scmp.ne.s32.totalorder %s45, %s47
    %p54 = scmp.eq.s32.totalorder %s16, 1
    %p55 = por %p53, %p54
    %p56 = scmp.ne.s32.totalorder %s47, %s48
    %p57 = scmp.eq.s32.totalorder %s16, 0
    %p58 = por %p56, %p57
    %p59 = scmp.ne.s32.totalorder %s47, %s48
    %p60 = scmp.eq.s32.totalorder %s17, 1
    %p61 = por %p59, %p60
    %p63 = scmp.ne.s32.totalorder %s48, %s62
    %p64 = scmp.eq.s32.totalorder %s17, 0
    %p65 = por %p63, %p64
    %s67 = sadd.s32 %s66, 1
    %p70 = scmp.eq.s32.totalorder %s11, 1
    %p71 = scmp.ne.s32.totalorder %s66, %s68
    %p72 = scmp.eq.s32.totalorder %s11, 0
    %p73 = por %p71, %p72
    %p74 = scmp.ne.s32.totalorder %s66, %s68
    %p75 = scmp.eq.s32.totalorder %s16, 1
    %p76 = por %p74, %p75
    %p77 = scmp.ne.s32.totalorder %s68, %s69
    %p78 = scmp.eq.s32.totalorder %s16, 0
    %p79 = por %p77, %p78
    %p80 = scmp.ne.s32.totalorder %s68, %s69
    %p81 = scmp.eq.s32.totalorder %s17, 1
    %p82 = por %p80, %p81
    %p84 = scmp.ne.s32.totalorder %s69, %s83
    %p85 = scmp.eq.s32.totalorder %s17, 0
    %p86 = por %p84, %p85
    %s88 = sadd.s32 %s87, 1
    %p91 = scmp.eq.s32.totalorder %s11, 1
    %p92 = scmp.ne.s32.totalorder %s87, %s89
    %p93 = scmp.eq.s32.totalorder %s11, 0
    %p94 = por %p92, %p93
    %p95 = scmp.ne.s32.totalorder %s87, %s89
    %p96 = scmp.eq.s32.totalorder %s16, 1
    %p97 = por %p95, %p96
    %p98 = scmp.ne.s32.totalorder %s89, %s90
    %p99 = scmp.eq.s32.totalorder %s16, 0
    %p100 = por %p98, %p99
    %p101 = scmp.ne.s32.totalorder %s89, %s90
    %p102 = scmp.eq.s32.totalorder %s17, 1
    %p103 = por %p101, %p102
    %p105 = scmp.ne.s32.totalorder %s90, %s104
    %p106 = scmp.eq.s32.totalorder %s17, 0
    %p107 = por %p105, %p106
    %s109 = sadd.s32 %s108, 1
    %p112 = scmp.eq.s32.totalorder %s11, 1
    %p113 = scmp.ne.s32.totalorder %s108, %s110
    %p114 = scmp.eq.s32.totalorder %s11, 0
    %p115 = por %p113, %p114
    %p116 = scmp.ne.s32.totalorder %s108, %s110
    %p117 = scmp.eq.s32.totalorder %s16, 1
    %p118 = por %p116, %p117
    %p119 = scmp.ne.s32.totalorder %s110, %s111
    %p120 = scmp.eq.s32.totalorder %s16, 0
    %p121 = por %p119, %p120
    %p122 = scmp.ne.s32.totalorder %s110, %s111
    %p123 = scmp.eq.s32.totalorder %s17, 1
    %p124 = por %p122, %p123
    %p126 = scmp.ne.s32.totalorder %s111, %s125
    %p127 = scmp.eq.s32.totalorder %s17, 0
    %p128 = por %p126, %p127
    %s129 = ssub.s32 %s11, %s18
    %p130 = scmp.eq.s32.totalorder %s129, 0
    %s132 = sadd.s32 %s131, 1
    %s133 = scalar_select %p130, %s131, %s132
    %p136 = pneg %p130
    %p137 = scmp.eq.s32.totalorder %s11, 1
    %p138 = por %p136, %p137
    %p139 = scmp.ne.s32.totalorder %s131, %s134
    %p140 = scmp.eq.s32.totalorder %s11, 0
    %p141 = por %p139, %p140
    %p142 = scmp.ne.s32.totalorder %s131, %s134
    %p143 = scmp.eq.s32.totalorder %s16, 1
    %p144 = por %p142, %p143
    %p145 = scmp.ne.s32.totalorder %s134, %s135
    %p146 = scmp.eq.s32.totalorder %s16, 0
    %p147 = por %p145, %p146
    %p148 = scmp.ne.s32.totalorder %s134, %s135
    %p149 = scmp.eq.s32.totalorder %s17, 1
    %p150 = por %p148, %p149
    %p152 = scmp.ne.s32.totalorder %s135, %s151
    %p153 = scmp.eq.s32.totalorder %s17, 0
    %p154 = por %p152, %p153
    %p155 = scmp.le.s32.totalorder 1, %s11
    %p156 = scmp.lt.s32.totalorder %s11, 3
    %p157 = pnand %p155, %p156
    %p158 = pneg %p157
    // Predicated region
    $region9: #{dacblock_forward.1} parent=5 // pred_check
      _
    $region10: #{dacblock_forward.1} parent=5 // pred_check_branch
      %160 = sbr.rel (%p157) target = $region12
    $region11: #{dacblock_forward.1} parent=5 // pred_region
      %s161 = ssub.s32 %s11, 1
      // Predicated region
      $region13: #{dacblock_forward.1} parent=11 // pred_check
        %p162 = pneg %p58
      $region14: #{dacblock_forward.1} parent=11 // pred_check_branch
        %164 = sbr.rel (%p162) target = $region16
      $region15: #{dacblock_forward.1} parent=11 // pred_region
        _
      $region16: #{dacblock_forward.1} parent=11 // pred_fallthru
        _
      // Predicated region
      $region17: #{dacblock_forward.1} parent=11 // pred_check
        %p165 = pneg %p79
      $region18: #{dacblock_forward.1} parent=11 // pred_check_branch
        %167 = sbr.rel (%p165) target = $region20
      $region19: #{dacblock_forward.1} parent=11 // pred_region
        _
      $region20: #{dacblock_forward.1} parent=11 // pred_fallthru
        _
      // Predicated region
      $region21: #{dacblock_forward.1} parent=11 // pred_check
        %p168 = pneg %p100
      $region22: #{dacblock_forward.1} parent=11 // pred_check_branch
        %170 = sbr.rel (%p168) target = $region24
      $region23: #{dacblock_forward.1} parent=11 // pred_region
        _
      $region24: #{dacblock_forward.1} parent=11 // pred_fallthru
        _
      // Predicated region
      $region25: #{dacblock_forward.1} parent=11 // pred_check
        %p171 = pneg %p121
      $region26: #{dacblock_forward.1} parent=11 // pred_check_branch
        %173 = sbr.rel (%p171) target = $region28
      $region27: #{dacblock_forward.1} parent=11 // pred_region
        _
      $region28: #{dacblock_forward.1} parent=11 // pred_fallthru
        _
    $region12: #{dacblock_forward.1} parent=5 // pred_fallthru
      _
    %p174 = scmp.lt.s32.totalorder %s11, 2
    // Predicated region
    $region29: #{dacblock_forward.1} parent=5 // pred_check
      %p175 = pneg %p174
    $region30: #{dacblock_forward.1} parent=5 // pred_check_branch
      %177 = sbr.rel (%p175) target = $region32
    $region31: #{dacblock_forward.1} parent=5 // pred_region
      // Predicated region
      $region33: #{dacblock_forward.1} parent=31 // pred_check
        %p178 = pneg %p31
      $region34: #{dacblock_forward.1} parent=31 // pred_check_branch
        %180 = sbr.rel (%p178) target = $region36
      $region35: #{dacblock_forward.1} parent=31 // pred_region
        %p181 = scmp.lt.s32.totalorder %s11, 1
        %s182 = scalar_select %p181, %s11, 1
        %s183 = smul.addr %s182, 2
        %s184 = smul.addr %s183, 4
        %s185 = scalar_lea.vmem %s0, %s184
      $region36: #{dacblock_forward.1} parent=31 // pred_fallthru
        _
    $region32: #{dacblock_forward.1} parent=5 // pred_fallthru
      _
    %p186 = scmp.le.s32.totalorder 1, %s11
    %p187 = scmp.lt.s32.totalorder %s11, 3
    %p188 = pnand %p186, %p187
    %p189 = pneg %p188
    // Predicated region
    $region37: #{dacblock_forward.1} parent=5 // pred_check
      _
    $region38: #{dacblock_forward.1} parent=5 // pred_check_branch
      %191 = sbr.rel (%p188) target = $region40
    $region39: #{dacblock_forward.1} parent=5 // pred_region
      %s192 = ssub.s32 %s11, 1
      %p193 = scmp.lt.s32.totalorder %s16, 1
      %s194 = scalar_select %p193, %s16, 1
      %s195 = smul.addr %s194, 2
      %s196 = smul.addr %s195, 4
      %s197 = scalar_lea.vmem %s0, %s196
      %p198 = pneg %p37
      %p199 = pneg %p34
      %p200 = pneg %p58
      %p201 = pneg %p55
      %p202 = pneg %p79
      %p203 = pneg %p76
      %p204 = pneg %p100
      %p205 = pneg %p97
      %p206 = pneg %p121
      %p207 = pneg %p118
      %p208 = pneg %p147
      %p209 = pneg %p144
      %p210 = scmp.lt.s32.totalorder %s16, 1
      %s211 = scalar_select %p210, %s16, 1
      %s212 = smul.addr %s211, 2
      %s213 = smul.addr %s212, 4
      %s214 = scalar_lea.vmem %s5, %s213
      %p215 = scmp.lt.s32.totalorder %s16, 1
      %s216 = scalar_select %p215, %s16, 1
      %s217 = smul.addr %s216, 2
      %s218 = smul.addr %s217, 4
      %s219 = scalar_lea.vmem %s0, %s218
      %p220 = scmp.lt.s32.totalorder %s16, 1
      %s221 = scalar_select %p220, %s16, 1
      %s222 = smul.addr %s221, 2
      %s223 = smul.addr %s222, 4
      %s224 = scalar_lea.vmem %s5, %s223
      %v225 = vld [vmem:[%s219] sm:$0xff]
      %v226 = vld [vmem:[%s3] sm:$0xf]
      %v227 = vld [vmem:[%s1] sm:$0xf]
      %v229 = vcombine.high %v225, %v225
      %231 = vrot.lane.b32.xlu0 %v225, 17
      %v232 = vpop.permute.xlu0 %231
      %233 = vrot.lane.b32.xlu0 %v229, 17
      %v234 = vpop.permute.xlu0 %233
      %v235 = vlaneseq
      %v236 = vand.u32 %v235, 127
      %vm237 = vcmp.lt.s32.totalorder %v236, 17
      %v238 = vsel %vm237, %v232, %v234
      %v239 = vsel %vm237, %v234, %v232
      %v240 = vld [vmem:[%s4] sm:$0x3]
      %v242 = vlaneseq
      %v243 = vshrl.u32 %v242, 7
      %v244 = vsub.s32 0, %v243
      %v245 = vrot.slane %v240, %v244
      %v246 = vlaneseq
      %v247 = vshrl.u32 %v246, 7
      %v248 = vsub.s32 1, %v247
      %v249 = vrot.slane %v240, %v248
      %v252 = vmul.f32 %v239, %v245
      %v253 = vmul.f32 %v238, %v249
      %255 = vset.pattern.permute.xlu0 0
      %256 = vperm.xlu0 %255, %v227
      %v257 = vpop.permute.xlu0 %256
      %v259 = vlaneseq
      %v260 = vshrl.u32 %v259, 7
      %v261 = vsub.s32 0, %v260
      %v262 = vrot.slane %v252, %v261
      %v263 = vlaneseq
      %v264 = vshrl.u32 %v263, 7
      %v265 = vsub.s32 0, %v264
      %v266 = vrot.slane %v253, %v265
      %v267 = vmul.f32 %v257, %v262
      %v268 = vmul.f32 %v257, %v266
      %v269 = vadd.f32 %v267, 0.0
      %v270 = vadd.f32 %v268, 0.0
      %271 = vset.pattern.permute.xlu0 1
      %272 = vperm.xlu0 %271, %v227
      %v273 = vpop.permute.xlu0 %272
      %v275 = vlaneseq
      %v276 = vshrl.u32 %v275, 7
      %v277 = vsub.s32 1, %v276
      %v278 = vrot.slane %v252, %v277
      %v279 = vlaneseq
      %v280 = vshrl.u32 %v279, 7
      %v281 = vsub.s32 1, %v280
      %v282 = vrot.slane %v253, %v281
      %v283 = vmul.f32 %v273, %v278
      %v284 = vmul.f32 %v273, %v282
      %v285 = vadd.f32 %v269, %v283
      %v286 = vadd.f32 %v270, %v284
      %287 = vset.pattern.permute.xlu0 2
      %288 = vperm.xlu0 %287, %v227
      %v289 = vpop.permute.xlu0 %288
      %v291 = vlaneseq
      %v292 = vshrl.u32 %v291, 7
      %v293 = vsub.s32 2, %v292
      %v294 = vrot.slane %v252, %v293
      %v295 = vlaneseq
      %v296 = vshrl.u32 %v295, 7
      %v297 = vsub.s32 2, %v296
      %v298 = vrot.slane %v253, %v297
      %v299 = vmul.f32 %v289, %v294
      %v300 = vmul.f32 %v289, %v298
      %v301 = vadd.f32 %v285, %v299
      %v302 = vadd.f32 %v286, %v300
      %303 = vset.pattern.permute.xlu0 3
      %304 = vperm.xlu0 %303, %v227
      %v305 = vpop.permute.xlu0 %304
      %v307 = vlaneseq
      %v308 = vshrl.u32 %v307, 7
      %v309 = vsub.s32 3, %v308
      %v310 = vrot.slane %v252, %v309
      %v311 = vlaneseq
      %v312 = vshrl.u32 %v311, 7
      %v313 = vsub.s32 3, %v312
      %v314 = vrot.slane %v253, %v313
      %v315 = vmul.f32 %v305, %v310
      %v316 = vmul.f32 %v305, %v314
      %v317 = vadd.f32 %v301, %v315
      %v318 = vadd.f32 %v302, %v316
      %319 = vrot.lane.b32.xlu0 %v225, 16
      %v320 = vpop.permute.xlu0 %319
      %321 = vrot.lane.b32.xlu0 %v229, 16
      %v322 = vpop.permute.xlu0 %321
      %vm323 = vcmp.lt.s32.totalorder %v236, 16
      %v324 = vsel %vm323, %v320, %v322
      %v325 = vsel %vm323, %v322, %v320
      %s326 = scalar_lea.vmem %s4, 2
      %v327 = vld [vmem:[%s326] sm:$0x3]
      %v329 = vlaneseq
      %v330 = vshrl.u32 %v329, 7
      %v331 = vsub.s32 0, %v330
      %v332 = vrot.slane %v327, %v331
      %v333 = vlaneseq
      %v334 = vshrl.u32 %v333, 7
      %v335 = vsub.s32 1, %v334
      %v336 = vrot.slane %v327, %v335
      %v339 = vmul.f32 %v325, %v332
      %v340 = vmul.f32 %v324, %v336
      %341 = vset.pattern.permute.xlu0 4
      %342 = vperm.xlu0 %341, %v227
      %v343 = vpop.permute.xlu0 %342
      %v345 = vlaneseq
      %v346 = vshrl.u32 %v345, 7
      %v347 = vsub.s32 0, %v346
      %v348 = vrot.slane %v339, %v347
      %v349 = vlaneseq
      %v350 = vshrl.u32 %v349, 7
      %v351 = vsub.s32 0, %v350
      %v352 = vrot.slane %v340, %v351
      %v353 = vmul.f32 %v343, %v348
      %v354 = vmul.f32 %v343, %v352
      %v355 = vadd.f32 %v317, %v353
      %v356 = vadd.f32 %v318, %v354
      %357 = vset.pattern.permute.xlu0 5
      %358 = vperm.xlu0 %357, %v227
      %v359 = vpop.permute.xlu0 %358
      %v361 = vlaneseq
      %v362 = vshrl.u32 %v361, 7
      %v363 = vsub.s32 1, %v362
      %v364 = vrot.slane %v339, %v363
      %v365 = vlaneseq
      %v366 = vshrl.u32 %v365, 7
      %v367 = vsub.s32 1, %v366
      %v368 = vrot.slane %v340, %v367
      %v369 = vmul.f32 %v359, %v364
      %v370 = vmul.f32 %v359, %v368
      %v371 = vadd.f32 %v355, %v369
      %v372 = vadd.f32 %v356, %v370
      %373 = vset.pattern.permute.xlu0 6
      %374 = vperm.xlu0 %373, %v227
      %v375 = vpop.permute.xlu0 %374
      %v377 = vlaneseq
      %v378 = vshrl.u32 %v377, 7
      %v379 = vsub.s32 2, %v378
      %v380 = vrot.slane %v339, %v379
      %v381 = vlaneseq
      %v382 = vshrl.u32 %v381, 7
      %v383 = vsub.s32 2, %v382
      %v384 = vrot.slane %v340, %v383
      %v385 = vmul.f32 %v375, %v380
      %v386 = vmul.f32 %v375, %v384
      %v387 = vadd.f32 %v371, %v385
      %v388 = vadd.f32 %v372, %v386
      %389 = vset.pattern.permute.xlu0 7
      %390 = vperm.xlu0 %389, %v227
      %v391 = vpop.permute.xlu0 %390
      %v393 = vlaneseq
      %v394 = vshrl.u32 %v393, 7
      %v395 = vsub.s32 3, %v394
      %v396 = vrot.slane %v339, %v395
      %v397 = vlaneseq
      %v398 = vshrl.u32 %v397, 7
      %v399 = vsub.s32 3, %v398
      %v400 = vrot.slane %v340, %v399
      %v401 = vmul.f32 %v391, %v396
      %v402 = vmul.f32 %v391, %v400
      %v403 = vadd.f32 %v387, %v401
      %v404 = vadd.f32 %v388, %v402
      %405 = vrot.lane.b32.xlu0 %v225, 15
      %v406 = vpop.permute.xlu0 %405
      %407 = vrot.lane.b32.xlu0 %v229, 15
      %v408 = vpop.permute.xlu0 %407
      %vm409 = vcmp.lt.s32.totalorder %v236, 15
      %v410 = vsel %vm409, %v406, %v408
      %v411 = vsel %vm409, %v408, %v406
      %s412 = scalar_lea.vmem %s4, 4
      %v413 = vld [vmem:[%s412] sm:$0x3]
      %v415 = vlaneseq
      %v416 = vshrl.u32 %v415, 7
      %v417 = vsub.s32 0, %v416
      %v418 = vrot.slane %v413, %v417
      %v419 = vlaneseq
      %v420 = vshrl.u32 %v419, 7
      %v421 = vsub.s32 1, %v420
      %v422 = vrot.slane %v413, %v421
      %v425 = vmul.f32 %v411, %v418
      %v426 = vmul.f32 %v410, %v422
      %427 = vset.pattern.permute.xlu0 8
      %428 = vperm.xlu0 %427, %v227
      %v429 = vpop.permute.xlu0 %428
      %v431 = vlaneseq
      %v432 = vshrl.u32 %v431, 7
      %v433 = vsub.s32 0, %v432
      %v434 = vrot.slane %v425, %v433
      %v435 = vlaneseq
      %v436 = vshrl.u32 %v435, 7
      %v437 = vsub.s32 0, %v436
      %v438 = vrot.slane %v426, %v437
      %v439 = vmul.f32 %v429, %v434
      %v440 = vmul.f32 %v429, %v438
      %v441 = vadd.f32 %v403, %v439
      %v442 = vadd.f32 %v404, %v440
      %443 = vset.pattern.permute.xlu0 9
      %444 = vperm.xlu0 %443, %v227
      %v445 = vpop.permute.xlu0 %444
      %v447 = vlaneseq
      %v448 = vshrl.u32 %v447, 7
      %v449 = vsub.s32 1, %v448
      %v450 = vrot.slane %v425, %v449
      %v451 = vlaneseq
      %v452 = vshrl.u32 %v451, 7
      %v453 = vsub.s32 1, %v452
      %v454 = vrot.slane %v426, %v453
      %v455 = vmul.f32 %v445, %v450
      %v456 = vmul.f32 %v445, %v454
      %v457 = vadd.f32 %v441, %v455
      %v458 = vadd.f32 %v442, %v456
      %459 = vset.pattern.permute.xlu0 10
      %460 = vperm.xlu0 %459, %v227
      %v461 = vpop.permute.xlu0 %460
      %v463 = vlaneseq
      %v464 = vshrl.u32 %v463, 7
      %v465 = vsub.s32 2, %v464
      %v466 = vrot.slane %v425, %v465
      %v467 = vlaneseq
      %v468 = vshrl.u32 %v467, 7
      %v469 = vsub.s32 2, %v468
      %v470 = vrot.slane %v426, %v469
      %v471 = vmul.f32 %v461, %v466
      %v472 = vmul.f32 %v461, %v470
      %v473 = vadd.f32 %v457, %v471
      %v474 = vadd.f32 %v458, %v472
      %475 = vset.pattern.permute.xlu0 11
      %476 = vperm.xlu0 %475, %v227
      %v477 = vpop.permute.xlu0 %476
      %v479 = vlaneseq
      %v480 = vshrl.u32 %v479, 7
      %v481 = vsub.s32 3, %v480
      %v482 = vrot.slane %v425, %v481
      %v483 = vlaneseq
      %v484 = vshrl.u32 %v483, 7
      %v485 = vsub.s32 3, %v484
      %v486 = vrot.slane %v426, %v485
      %v487 = vmul.f32 %v477, %v482
      %v488 = vmul.f32 %v477, %v486
      %v489 = vadd.f32 %v473, %v487
      %v490 = vadd.f32 %v474, %v488
      %491 = vrot.lane.b32.xlu0 %v225, 1
      %v492 = vpop.permute.xlu0 %491
      %493 = vrot.lane.b32.xlu0 %v229, 1
      %v494 = vpop.permute.xlu0 %493
      %vm495 = vcmp.lt.s32.totalorder %v236, 1
      %v496 = vsel %vm495, %v492, %v494
      %v497 = vsel %vm495, %v494, %v492
      %s498 = scalar_lea.vmem %s4, 6
      %v499 = vld [vmem:[%s498] sm:$0x3]
      %v501 = vlaneseq
      %v502 = vshrl.u32 %v501, 7
      %v503 = vsub.s32 0, %v502
      %v504 = vrot.slane %v499, %v503
      %v505 = vlaneseq
      %v506 = vshrl.u32 %v505, 7
      %v507 = vsub.s32 1, %v506
      %v508 = vrot.slane %v499, %v507
      %v511 = vmul.f32 %v497, %v504
      %v512 = vmul.f32 %v496, %v508
      %513 = vset.pattern.permute.xlu0 12
      %514 = vperm.xlu0 %513, %v227
      %v515 = vpop.permute.xlu0 %514
      %v517 = vlaneseq
      %v518 = vshrl.u32 %v517, 7
      %v519 = vsub.s32 0, %v518
      %v520 = vrot.slane %v511, %v519
      %v521 = vlaneseq
      %v522 = vshrl.u32 %v521, 7
      %v523 = vsub.s32 0, %v522
      %v524 = vrot.slane %v512, %v523
      %v525 = vmul.f32 %v515, %v520
      %v526 = vmul.f32 %v515, %v524
      %v527 = vadd.f32 %v489, %v525
      %v528 = vadd.f32 %v490, %v526
      %529 = vset.pattern.permute.xlu0 13
      %530 = vperm.xlu0 %529, %v227
      %v531 = vpop.permute.xlu0 %530
      %v533 = vlaneseq
      %v534 = vshrl.u32 %v533, 7
      %v535 = vsub.s32 1, %v534
      %v536 = vrot.slane %v511, %v535
      %v537 = vlaneseq
      %v538 = vshrl.u32 %v537, 7
      %v539 = vsub.s32 1, %v538
      %v540 = vrot.slane %v512, %v539
      %v541 = vmul.f32 %v531, %v536
      %v542 = vmul.f32 %v531, %v540
      %v543 = vadd.f32 %v527, %v541
      %v544 = vadd.f32 %v528, %v542
      %545 = vset.pattern.permute.xlu0 14
      %546 = vperm.xlu0 %545, %v227
      %v547 = vpop.permute.xlu0 %546
      %v549 = vlaneseq
      %v550 = vshrl.u32 %v549, 7
      %v551 = vsub.s32 2, %v550
      %v552 = vrot.slane %v511, %v551
      %v553 = vlaneseq
      %v554 = vshrl.u32 %v553, 7
      %v555 = vsub.s32 2, %v554
      %v556 = vrot.slane %v512, %v555
      %v557 = vmul.f32 %v547, %v552
      %v558 = vmul.f32 %v547, %v556
      %v559 = vadd.f32 %v543, %v557
      %v560 = vadd.f32 %v544, %v558
      %561 = vset.pattern.permute.xlu0 15
      %562 = vperm.xlu0 %561, %v227
      %v563 = vpop.permute.xlu0 %562
      %v565 = vlaneseq
      %v566 = vshrl.u32 %v565, 7
      %v567 = vsub.s32 3, %v566
      %v568 = vrot.slane %v511, %v567
      %v569 = vlaneseq
      %v570 = vshrl.u32 %v569, 7
      %v571 = vsub.s32 3, %v570
      %v572 = vrot.slane %v512, %v571
      %v573 = vmul.f32 %v563, %v568
      %v574 = vmul.f32 %v563, %v572
      %v575 = vadd.f32 %v559, %v573
      %v576 = vadd.f32 %v560, %v574
      %577 = vset.pattern.permute.xlu0 16
      %578 = vperm.xlu0 %577, %v227
      %v579 = vpop.permute.xlu0 %578
      %v581 = vlaneseq
      %v582 = vshrl.u32 %v581, 7
      %v583 = vsub.s32 0, %v582
      %v584 = vrot.slane %v225, %v583
      %v585 = vlaneseq
      %v586 = vshrl.u32 %v585, 7
      %v587 = vsub.s32 4, %v586
      %v588 = vrot.slane %v225, %v587
      %v591 = vlaneseq
      %v592 = vshrl.u32 %v591, 7
      %v593 = vsub.s32 0, %v592
      %v594 = vrot.slane %v584, %v593
      %v595 = vlaneseq
      %v596 = vshrl.u32 %v595, 7
      %v597 = vsub.s32 0, %v596
      %v598 = vrot.slane %v588, %v597
      %v599 = vmul.f32 %v579, %v594
      %v600 = vmul.f32 %v579, %v598
      %v601 = vadd.f32 %v575, %v599
      %v602 = vadd.f32 %v576, %v600
      %603 = vset.pattern.permute.xlu0 17
      %604 = vperm.xlu0 %603, %v227
      %v605 = vpop.permute.xlu0 %604
      %v607 = vlaneseq
      %v608 = vshrl.u32 %v607, 7
      %v609 = vsub.s32 1, %v608
      %v610 = vrot.slane %v225, %v609
      %v611 = vlaneseq
      %v612 = vshrl.u32 %v611, 7
      %v613 = vsub.s32 5, %v612
      %v614 = vrot.slane %v225, %v613
      %v617 = vlaneseq
      %v618 = vshrl.u32 %v617, 7
      %v619 = vsub.s32 1, %v618
      %v620 = vrot.slane %v610, %v619
      %v621 = vlaneseq
      %v622 = vshrl.u32 %v621, 7
      %v623 = vsub.s32 1, %v622
      %v624 = vrot.slane %v614, %v623
      %v625 = vmul.f32 %v605, %v620
      %v626 = vmul.f32 %v605, %v624
      %v627 = vadd.f32 %v601, %v625
      %v628 = vadd.f32 %v602, %v626
      %629 = vset.pattern.permute.xlu0 18
      %630 = vperm.xlu0 %629, %v227
      %v631 = vpop.permute.xlu0 %630
      %v633 = vlaneseq
      %v634 = vshrl.u32 %v633, 7
      %v635 = vsub.s32 2, %v634
      %v636 = vrot.slane %v225, %v635
      %v637 = vlaneseq
      %v638 = vshrl.u32 %v637, 7
      %v639 = vsub.s32 6, %v638
      %v640 = vrot.slane %v225, %v639
      %v643 = vlaneseq
      %v644 = vshrl.u32 %v643, 7
      %v645 = vsub.s32 2, %v644
      %v646 = vrot.slane %v636, %v645
      %v647 = vlaneseq
      %v648 = vshrl.u32 %v647, 7
      %v649 = vsub.s32 2, %v648
      %v650 = vrot.slane %v640, %v649
      %v651 = vmul.f32 %v631, %v646
      %v652 = vmul.f32 %v631, %v650
      %v653 = vadd.f32 %v627, %v651
      %v654 = vadd.f32 %v628, %v652
      %655 = vset.pattern.permute.xlu0 19
      %656 = vperm.xlu0 %655, %v227
      %v657 = vpop.permute.xlu0 %656
      %v659 = vlaneseq
      %v660 = vshrl.u32 %v659, 7
      %v661 = vsub.s32 3, %v660
      %v662 = vrot.slane %v225, %v661
      %v663 = vlaneseq
      %v664 = vshrl.u32 %v663, 7
      %v665 = vsub.s32 7, %v664
      %v666 = vrot.slane %v225, %v665
      %v669 = vlaneseq
      %v670 = vshrl.u32 %v669, 7
      %v671 = vsub.s32 3, %v670
      %v672 = vrot.slane %v662, %v671
      %v673 = vlaneseq
      %v674 = vshrl.u32 %v673, 7
      %v675 = vsub.s32 3, %v674
      %v676 = vrot.slane %v666, %v675
      %v677 = vmul.f32 %v657, %v672
      %v678 = vmul.f32 %v657, %v676
      %v679 = vadd.f32 %v653, %v677
      %v680 = vadd.f32 %v654, %v678
      %681 = vrot.lane.b32.xlu0 %v225, 127
      %v682 = vpop.permute.xlu0 %681
      %683 = vrot.lane.b32.xlu0 %v229, 127
      %v684 = vpop.permute.xlu0 %683
      %vm685 = vcmp.lt.s32.totalorder %v236, 127
      %v686 = vsel %vm685, %v682, %v684
      %v687 = vsel %vm685, %v684, %v682
      %s688 = scalar_lea.vmem %s4, 10
      %v689 = vld [vmem:[%s688] sm:$0x3]
      %v691 = vlaneseq
      %v692 = vshrl.u32 %v691, 7
      %v693 = vsub.s32 0, %v692
      %v694 = vrot.slane %v689, %v693
      %v695 = vlaneseq
      %v696 = vshrl.u32 %v695, 7
      %v697 = vsub.s32 1, %v696
      %v698 = vrot.slane %v689, %v697
      %v701 = vmul.f32 %v686, %v694
      %v702 = vmul.f32 %v687, %v698
      %703 = vset.pattern.permute.xlu0 20
      %704 = vperm.xlu0 %703, %v227
      %v705 = vpop.permute.xlu0 %704
      %v707 = vlaneseq
      %v708 = vshrl.u32 %v707, 7
      %v709 = vsub.s32 0, %v708
      %v710 = vrot.slane %v701, %v709
      %v711 = vlaneseq
      %v712 = vshrl.u32 %v711, 7
      %v713 = vsub.s32 0, %v712
      %v714 = vrot.slane %v702, %v713
      %v715 = vmul.f32 %v705, %v710
      %v716 = vmul.f32 %v705, %v714
      %v717 = vadd.f32 %v679, %v715
      %v718 = vadd.f32 %v680, %v716
      %719 = vset.pattern.permute.xlu0 21
      %720 = vperm.xlu0 %719, %v227
      %v721 = vpop.permute.xlu0 %720
      %v723 = vlaneseq
      %v724 = vshrl.u32 %v723, 7
      %v725 = vsub.s32 1, %v724
      %v726 = vrot.slane %v701, %v725
      %v727 = vlaneseq
      %v728 = vshrl.u32 %v727, 7
      %v729 = vsub.s32 1, %v728
      %v730 = vrot.slane %v702, %v729
      %v731 = vmul.f32 %v721, %v726
      %v732 = vmul.f32 %v721, %v730
      %v733 = vadd.f32 %v717, %v731
      %v734 = vadd.f32 %v718, %v732
      %735 = vset.pattern.permute.xlu0 22
      %736 = vperm.xlu0 %735, %v227
      %v737 = vpop.permute.xlu0 %736
      %v739 = vlaneseq
      %v740 = vshrl.u32 %v739, 7
      %v741 = vsub.s32 2, %v740
      %v742 = vrot.slane %v701, %v741
      %v743 = vlaneseq
      %v744 = vshrl.u32 %v743, 7
      %v745 = vsub.s32 2, %v744
      %v746 = vrot.slane %v702, %v745
      %v747 = vmul.f32 %v737, %v742
      %v748 = vmul.f32 %v737, %v746
      %v749 = vadd.f32 %v733, %v747
      %v750 = vadd.f32 %v734, %v748
      %751 = vset.pattern.permute.xlu0 23
      %752 = vperm.xlu0 %751, %v227
      %v753 = vpop.permute.xlu0 %752
      %v755 = vlaneseq
      %v756 = vshrl.u32 %v755, 7
      %v757 = vsub.s32 3, %v756
      %v758 = vrot.slane %v701, %v757
      %v759 = vlaneseq
      %v760 = vshrl.u32 %v759, 7
      %v761 = vsub.s32 3, %v760
      %v762 = vrot.slane %v702, %v761
      %v763 = vmul.f32 %v753, %v758
      %v764 = vmul.f32 %v753, %v762
      %v765 = vadd.f32 %v749, %v763
      %v766 = vadd.f32 %v750, %v764
      %767 = vrot.lane.b32.xlu0 %v225, 113
      %v768 = vpop.permute.xlu0 %767
      %769 = vrot.lane.b32.xlu0 %v229, 113
      %v770 = vpop.permute.xlu0 %769
      %vm771 = vcmp.lt.s32.totalorder %v236, 113
      %v772 = vsel %vm771, %v768, %v770
      %v773 = vsel %vm771, %v770, %v768
      %s774 = scalar_lea.vmem %s4, 12
      %v775 = vld [vmem:[%s774] sm:$0x3]
      %v777 = vlaneseq
      %v778 = vshrl.u32 %v777, 7
      %v779 = vsub.s32 0, %v778
      %v780 = vrot.slane %v775, %v779
      %v781 = vlaneseq
      %v782 = vshrl.u32 %v781, 7
      %v783 = vsub.s32 1, %v782
      %v784 = vrot.slane %v775, %v783
      %v787 = vmul.f32 %v772, %v780
      %v788 = vmul.f32 %v773, %v784
      %789 = vset.pattern.permute.xlu0 24
      %790 = vperm.xlu0 %789, %v227
      %v791 = vpop.permute.xlu0 %790
      %v793 = vlaneseq
      %v794 = vshrl.u32 %v793, 7
      %v795 = vsub.s32 0, %v794
      %v796 = vrot.slane %v787, %v795
      %v797 = vlaneseq
      %v798 = vshrl.u32 %v797, 7
      %v799 = vsub.s32 0, %v798
      %v800 = vrot.slane %v788, %v799
      %v801 = vmul.f32 %v791, %v796
      %v802 = vmul.f32 %v791, %v800
      %v803 = vadd.f32 %v765, %v801
      %v804 = vadd.f32 %v766, %v802
      %805 = vset.pattern.permute.xlu0 25
      %806 = vperm.xlu0 %805, %v227
      %v807 = vpop.permute.xlu0 %806
      %v809 = vlaneseq
      %v810 = vshrl.u32 %v809, 7
      %v811 = vsub.s32 1, %v810
      %v812 = vrot.slane %v787, %v811
      %v813 = vlaneseq
      %v814 = vshrl.u32 %v813, 7
      %v815 = vsub.s32 1, %v814
      %v816 = vrot.slane %v788, %v815
      %v817 = vmul.f32 %v807, %v812
      %v818 = vmul.f32 %v807, %v816
      %v819 = vadd.f32 %v803, %v817
      %v820 = vadd.f32 %v804, %v818
      %821 = vset.pattern.permute.xlu0 26
      %822 = vperm.xlu0 %821, %v227
      %v823 = vpop.permute.xlu0 %822
      %v825 = vlaneseq
      %v826 = vshrl.u32 %v825, 7
      %v827 = vsub.s32 2, %v826
      %v828 = vrot.slane %v787, %v827
      %v829 = vlaneseq
      %v830 = vshrl.u32 %v829, 7
      %v831 = vsub.s32 2, %v830
      %v832 = vrot.slane %v788, %v831
      %v833 = vmul.f32 %v823, %v828
      %v834 = vmul.f32 %v823, %v832
      %v835 = vadd.f32 %v819, %v833
      %v836 = vadd.f32 %v820, %v834
      %837 = vset.pattern.permute.xlu0 27
      %838 = vperm.xlu0 %837, %v227
      %v839 = vpop.permute.xlu0 %838
      %v841 = vlaneseq
      %v842 = vshrl.u32 %v841, 7
      %v843 = vsub.s32 3, %v842
      %v844 = vrot.slane %v787, %v843
      %v845 = vlaneseq
      %v846 = vshrl.u32 %v845, 7
      %v847 = vsub.s32 3, %v846
      %v848 = vrot.slane %v788, %v847
      %v849 = vmul.f32 %v839, %v844
      %v850 = vmul.f32 %v839, %v848
      %v851 = vadd.f32 %v835, %v849
      %v852 = vadd.f32 %v836, %v850
      %853 = vrot.lane.b32.xlu0 %v225, 112
      %v854 = vpop.permute.xlu0 %853
      %855 = vrot.lane.b32.xlu0 %v229, 112
      %v856 = vpop.permute.xlu0 %855
      %vm857 = vcmp.lt.s32.totalorder %v236, 112
      %v858 = vsel %vm857, %v854, %v856
      %v859 = vsel %vm857, %v856, %v854
      %s860 = scalar_lea.vmem %s4, 14
      %v861 = vld [vmem:[%s860] sm:$0x3]
      %v863 = vlaneseq
      %v864 = vshrl.u32 %v863, 7
      %v865 = vsub.s32 0, %v864
      %v866 = vrot.slane %v861, %v865
      %v867 = vlaneseq
      %v868 = vshrl.u32 %v867, 7
      %v869 = vsub.s32 1, %v868
      %v870 = vrot.slane %v861, %v869
      %v873 = vmul.f32 %v858, %v866
      %v874 = vmul.f32 %v859, %v870
      %875 = vset.pattern.permute.xlu0 28
      %876 = vperm.xlu0 %875, %v227
      %v877 = vpop.permute.xlu0 %876
      %v879 = vlaneseq
      %v880 = vshrl.u32 %v879, 7
      %v881 = vsub.s32 0, %v880
      %v882 = vrot.slane %v873, %v881
      %v883 = vlaneseq
      %v884 = vshrl.u32 %v883, 7
      %v885 = vsub.s32 0, %v884
      %v886 = vrot.slane %v874, %v885
      %v887 = vmul.f32 %v877, %v882
      %v888 = vmul.f32 %v877, %v886
      %v889 = vadd.f32 %v851, %v887
      %v890 = vadd.f32 %v852, %v888
      %891 = vset.pattern.permute.xlu0 29
      %892 = vperm.xlu0 %891, %v227
      %v893 = vpop.permute.xlu0 %892
      %v895 = vlaneseq
      %v896 = vshrl.u32 %v895, 7
      %v897 = vsub.s32 1, %v896
      %v898 = vrot.slane %v873, %v897
      %v899 = vlaneseq
      %v900 = vshrl.u32 %v899, 7
      %v901 = vsub.s32 1, %v900
      %v902 = vrot.slane %v874, %v901
      %v903 = vmul.f32 %v893, %v898
      %v904 = vmul.f32 %v893, %v902
      %v905 = vadd.f32 %v889, %v903
      %v906 = vadd.f32 %v890, %v904
      %907 = vset.pattern.permute.xlu0 30
      %908 = vperm.xlu0 %907, %v227
      %v909 = vpop.permute.xlu0 %908
      %v911 = vlaneseq
      %v912 = vshrl.u32 %v911, 7
      %v913 = vsub.s32 2, %v912
      %v914 = vrot.slane %v873, %v913
      %v915 = vlaneseq
      %v916 = vshrl.u32 %v915, 7
      %v917 = vsub.s32 2, %v916
      %v918 = vrot.slane %v874, %v917
      %v919 = vmul.f32 %v909, %v914
      %v920 = vmul.f32 %v909, %v918
      %v921 = vadd.f32 %v905, %v919
      %v922 = vadd.f32 %v906, %v920
      %923 = vset.pattern.permute.xlu0 31
      %924 = vperm.xlu0 %923, %v227
      %v925 = vpop.permute.xlu0 %924
      %v927 = vlaneseq
      %v928 = vshrl.u32 %v927, 7
      %v929 = vsub.s32 3, %v928
      %v930 = vrot.slane %v873, %v929
      %v931 = vlaneseq
      %v932 = vshrl.u32 %v931, 7
      %v933 = vsub.s32 3, %v932
      %v934 = vrot.slane %v874, %v933
      %v935 = vmul.f32 %v925, %v930
      %v936 = vmul.f32 %v925, %v934
      %v937 = vadd.f32 %v921, %v935
      %v938 = vadd.f32 %v922, %v936
      %939 = vrot.lane.b32.xlu0 %v225, 111
      %v940 = vpop.permute.xlu0 %939
      %941 = vrot.lane.b32.xlu0 %v229, 111
      %v942 = vpop.permute.xlu0 %941
      %vm943 = vcmp.lt.s32.totalorder %v236, 111
      %v944 = vsel %vm943, %v940, %v942
      %v945 = vsel %vm943, %v942, %v940
      %s946 = scalar_lea.vmem %s4, 16
      %v947 = vld [vmem:[%s946] sm:$0x3]
      %v949 = vlaneseq
      %v950 = vshrl.u32 %v949, 7
      %v951 = vsub.s32 0, %v950
      %v952 = vrot.slane %v947, %v951
      %v953 = vlaneseq
      %v954 = vshrl.u32 %v953, 7
      %v955 = vsub.s32 1, %v954
      %v956 = vrot.slane %v947, %v955
      %v959 = vmul.f32 %v944, %v952
      %v960 = vmul.f32 %v945, %v956
      %961 = vset.pattern.permute.xlu0 32
      %962 = vperm.xlu0 %961, %v227
      %v963 = vpop.permute.xlu0 %962
      %v965 = vlaneseq
      %v966 = vshrl.u32 %v965, 7
      %v967 = vsub.s32 0, %v966
      %v968 = vrot.slane %v959, %v967
      %v969 = vlaneseq
      %v970 = vshrl.u32 %v969, 7
      %v971 = vsub.s32 0, %v970
      %v972 = vrot.slane %v960, %v971
      %v973 = vmul.f32 %v963, %v968
      %v974 = vmul.f32 %v963, %v972
      %v975 = vadd.f32 %v937, %v973
      %v976 = vadd.f32 %v938, %v974
      %977 = vset.pattern.permute.xlu0 33
      %978 = vperm.xlu0 %977, %v227
      %v979 = vpop.permute.xlu0 %978
      %v981 = vlaneseq
      %v982 = vshrl.u32 %v981, 7
      %v983 = vsub.s32 1, %v982
      %v984 = vrot.slane %v959, %v983
      %v985 = vlaneseq
      %v986 = vshrl.u32 %v985, 7
      %v987 = vsub.s32 1, %v986
      %v988 = vrot.slane %v960, %v987
      %v989 = vmul.f32 %v979, %v984
      %v990 = vmul.f32 %v979, %v988
      %v991 = vadd.f32 %v975, %v989
      %v992 = vadd.f32 %v976, %v990
      %993 = vset.pattern.permute.xlu0 34
      %994 = vperm.xlu0 %993, %v227
      %v995 = vpop.permute.xlu0 %994
      %v997 = vlaneseq
      %v998 = vshrl.u32 %v997, 7
      %v999 = vsub.s32 2, %v998
      %v1000 = vrot.slane %v959, %v999
      %v1001 = vlaneseq
      %v1002 = vshrl.u32 %v1001, 7
      %v1003 = vsub.s32 2, %v1002
      %v1004 = vrot.slane %v960, %v1003
      %v1005 = vmul.f32 %v995, %v1000
      %v1006 = vmul.f32 %v995, %v1004
      %v1007 = vadd.f32 %v991, %v1005
      %v1008 = vadd.f32 %v992, %v1006
      %1009 = vset.pattern.permute.xlu0 35
      %1010 = vperm.xlu0 %1009, %v227
      %v1011 = vpop.permute.xlu0 %1010
      %v1013 = vlaneseq
      %v1014 = vshrl.u32 %v1013, 7
      %v1015 = vsub.s32 3, %v1014
      %v1016 = vrot.slane %v959, %v1015
      %v1017 = vlaneseq
      %v1018 = vshrl.u32 %v1017, 7
      %v1019 = vsub.s32 3, %v1018
      %v1020 = vrot.slane %v960, %v1019
      %v1021 = vmul.f32 %v1011, %v1016
      %v1022 = vmul.f32 %v1011, %v1020
      %v1023 = vadd.f32 %v1007, %v1021
      %v1024 = vadd.f32 %v1008, %v1022
      %v1025 = vld [vmem:[%s2] sm:$0xf]
      %1027 = vset.pattern.permute.xlu0 0
      %1028 = vperm.xlu0 %1027, %v1025
      %v1029 = vpop.permute.xlu0 %1028
      %v1031 = vadd.f32 %v1023, %v1029
      %v1032 = vadd.f32 %v1024, %v1029
      %v1033 = vmax.f32 %v1031, 0.0
      %v1034 = vmax.f32 %v1032, 0.0
      %v1037 = vcombine.low %v1033, %v1034
      %v1039 = vadd.f32 %v225, %v1037
      %s1040 = scalar_lea.vmem %s1, 4
      %v1041 = vld [vmem:[%s1040] sm:$0xf]
      %1042 = vrot.lane.b32.xlu0 %v225, 51
      %v1043 = vpop.permute.xlu0 %1042
      %1044 = vrot.lane.b32.xlu0 %v229, 51
      %v1045 = vpop.permute.xlu0 %1044
      %vm1046 = vcmp.lt.s32.totalorder %v236, 51
      %v1047 = vsel %vm1046, %v1043, %v1045
      %v1048 = vsel %vm1046, %v1045, %v1043
      %s1049 = scalar_lea.vmem %s4, 18
      %v1050 = vld [vmem:[%s1049] sm:$0x3]
      %v1052 = vlaneseq
      %v1053 = vshrl.u32 %v1052, 7
      %v1054 = vsub.s32 0, %v1053
      %v1055 = vrot.slane %v1050, %v1054
      %v1056 = vlaneseq
      %v1057 = vshrl.u32 %v1056, 7
      %v1058 = vsub.s32 1, %v1057
      %v1059 = vrot.slane %v1050, %v1058
      %v1062 = vmul.f32 %v1048, %v1055
      %v1063 = vmul.f32 %v1047, %v1059
      %1065 = vset.pattern.permute.xlu0 0
      %1066 = vperm.xlu0 %1065, %v1041
      %v1067 = vpop.permute.xlu0 %1066
      %v1069 = vlaneseq
      %v1070 = vshrl.u32 %v1069, 7
      %v1071 = vsub.s32 0, %v1070
      %v1072 = vrot.slane %v1062, %v1071
      %v1073 = vlaneseq
      %v1074 = vshrl.u32 %v1073, 7
      %v1075 = vsub.s32 0, %v1074
      %v1076 = vrot.slane %v1063, %v1075
      %v1077 = vmul.f32 %v1067, %v1072
      %v1078 = vmul.f32 %v1067, %v1076
      %v1079 = vadd.f32 %v1077, 0.0
      %v1080 = vadd.f32 %v1078, 0.0
      %1081 = vset.pattern.permute.xlu0 1
      %1082 = vperm.xlu0 %1081, %v1041
      %v1083 = vpop.permute.xlu0 %1082
      %v1085 = vlaneseq
      %v1086 = vshrl.u32 %v1085, 7
      %v1087 = vsub.s32 1, %v1086
      %v1088 = vrot.slane %v1062, %v1087
      %v1089 = vlaneseq
      %v1090 = vshrl.u32 %v1089, 7
      %v1091 = vsub.s32 1, %v1090
      %v1092 = vrot.slane %v1063, %v1091
      %v1093 = vmul.f32 %v1083, %v1088
      %v1094 = vmul.f32 %v1083, %v1092
      %v1095 = vadd.f32 %v1079, %v1093
      %v1096 = vadd.f32 %v1080, %v1094
      %1097 = vset.pattern.permute.xlu0 2
      %1098 = vperm.xlu0 %1097, %v1041
      %v1099 = vpop.permute.xlu0 %1098
      %v1101 = vlaneseq
      %v1102 = vshrl.u32 %v1101, 7
      %v1103 = vsub.s32 2, %v1102
      %v1104 = vrot.slane %v1062, %v1103
      %v1105 = vlaneseq
      %v1106 = vshrl.u32 %v1105, 7
      %v1107 = vsub.s32 2, %v1106
      %v1108 = vrot.slane %v1063, %v1107
      %v1109 = vmul.f32 %v1099, %v1104
      %v1110 = vmul.f32 %v1099, %v1108
      %v1111 = vadd.f32 %v1095, %v1109
      %v1112 = vadd.f32 %v1096, %v1110
      %1113 = vset.pattern.permute.xlu0 3
      %1114 = vperm.xlu0 %1113, %v1041
      %v1115 = vpop.permute.xlu0 %1114
      %v1117 = vlaneseq
      %v1118 = vshrl.u32 %v1117, 7
      %v1119 = vsub.s32 3, %v1118
      %v1120 = vrot.slane %v1062, %v1119
      %v1121 = vlaneseq
      %v1122 = vshrl.u32 %v1121, 7
      %v1123 = vsub.s32 3, %v1122
      %v1124 = vrot.slane %v1063, %v1123
      %v1125 = vmul.f32 %v1115, %v1120
      %v1126 = vmul.f32 %v1115, %v1124
      %v1127 = vadd.f32 %v1111, %v1125
      %v1128 = vadd.f32 %v1112, %v1126
      %1129 = vrot.lane.b32.xlu0 %v225, 48
      %v1130 = vpop.permute.xlu0 %1129
      %1131 = vrot.lane.b32.xlu0 %v229, 48
      %v1132 = vpop.permute.xlu0 %1131
      %vm1133 = vcmp.lt.s32.totalorder %v236, 48
      %v1134 = vsel %vm1133, %v1130, %v1132
      %v1135 = vsel %vm1133, %v1132, %v1130
      %s1136 = scalar_lea.vmem %s4, 20
      %v1137 = vld [vmem:[%s1136] sm:$0x3]
      %v1139 = vlaneseq
      %v1140 = vshrl.u32 %v1139, 7
      %v1141 = vsub.s32 0, %v1140
      %v1142 = vrot.slane %v1137, %v1141
      %v1143 = vlaneseq
      %v1144 = vshrl.u32 %v1143, 7
      %v1145 = vsub.s32 1, %v1144
      %v1146 = vrot.slane %v1137, %v1145
      %v1149 = vmul.f32 %v1135, %v1142
      %v1150 = vmul.f32 %v1134, %v1146
      %1151 = vset.pattern.permute.xlu0 4
      %1152 = vperm.xlu0 %1151, %v1041
      %v1153 = vpop.permute.xlu0 %1152
      %v1155 = vlaneseq
      %v1156 = vshrl.u32 %v1155, 7
      %v1157 = vsub.s32 0, %v1156
      %v1158 = vrot.slane %v1149, %v1157
      %v1159 = vlaneseq
      %v1160 = vshrl.u32 %v1159, 7
      %v1161 = vsub.s32 0, %v1160
      %v1162 = vrot.slane %v1150, %v1161
      %v1163 = vmul.f32 %v1153, %v1158
      %v1164 = vmul.f32 %v1153, %v1162
      %v1165 = vadd.f32 %v1127, %v1163
      %v1166 = vadd.f32 %v1128, %v1164
      %1167 = vset.pattern.permute.xlu0 5
      %1168 = vperm.xlu0 %1167, %v1041
      %v1169 = vpop.permute.xlu0 %1168
      %v1171 = vlaneseq
      %v1172 = vshrl.u32 %v1171, 7
      %v1173 = vsub.s32 1, %v1172
      %v1174 = vrot.slane %v1149, %v1173
      %v1175 = vlaneseq
      %v1176 = vshrl.u32 %v1175, 7
      %v1177 = vsub.s32 1, %v1176
      %v1178 = vrot.slane %v1150, %v1177
      %v1179 = vmul.f32 %v1169, %v1174
      %v1180 = vmul.f32 %v1169, %v1178
      %v1181 = vadd.f32 %v1165, %v1179
      %v1182 = vadd.f32 %v1166, %v1180
      %1183 = vset.pattern.permute.xlu0 6
      %1184 = vperm.xlu0 %1183, %v1041
      %v1185 = vpop.permute.xlu0 %1184
      %v1187 = vlaneseq
      %v1188 = vshrl.u32 %v1187, 7
      %v1189 = vsub.s32 2, %v1188
      %v1190 = vrot.slane %v1149, %v1189
      %v1191 = vlaneseq
      %v1192 = vshrl.u32 %v1191, 7
      %v1193 = vsub.s32 2, %v1192
      %v1194 = vrot.slane %v1150, %v1193
      %v1195 = vmul.f32 %v1185, %v1190
      %v1196 = vmul.f32 %v1185, %v1194
      %v1197 = vadd.f32 %v1181, %v1195
      %v1198 = vadd.f32 %v1182, %v1196
      %1199 = vset.pattern.permute.xlu0 7
      %1200 = vperm.xlu0 %1199, %v1041
      %v1201 = vpop.permute.xlu0 %1200
      %v1203 = vlaneseq
      %v1204 = vshrl.u32 %v1203, 7
      %v1205 = vsub.s32 3, %v1204
      %v1206 = vrot.slane %v1149, %v1205
      %v1207 = vlaneseq
      %v1208 = vshrl.u32 %v1207, 7
      %v1209 = vsub.s32 3, %v1208
      %v1210 = vrot.slane %v1150, %v1209
      %v1211 = vmul.f32 %v1201, %v1206
      %v1212 = vmul.f32 %v1201, %v1210
      %v1213 = vadd.f32 %v1197, %v1211
      %v1214 = vadd.f32 %v1198, %v1212
      %1215 = vrot.lane.b32.xlu0 %v225, 45
      %v1216 = vpop.permute.xlu0 %1215
      %1217 = vrot.lane.b32.xlu0 %v229, 45
      %v1218 = vpop.permute.xlu0 %1217
      %vm1219 = vcmp.lt.s32.totalorder %v236, 45
      %v1220 = vsel %vm1219, %v1216, %v1218
      %v1221 = vsel %vm1219, %v1218, %v1216
      %s1222 = scalar_lea.vmem %s4, 22
      %v1223 = vld [vmem:[%s1222] sm:$0x3]
      %v1225 = vlaneseq
      %v1226 = vshrl.u32 %v1225, 7
      %v1227 = vsub.s32 0, %v1226
      %v1228 = vrot.slane %v1223, %v1227
      %v1229 = vlaneseq
      %v1230 = vshrl.u32 %v1229, 7
      %v1231 = vsub.s32 1, %v1230
      %v1232 = vrot.slane %v1223, %v1231
      %v1235 = vmul.f32 %v1221, %v1228
      %v1236 = vmul.f32 %v1220, %v1232
      %1237 = vset.pattern.permute.xlu0 8
      %1238 = vperm.xlu0 %1237, %v1041
      %v1239 = vpop.permute.xlu0 %1238
      %v1241 = vlaneseq
      %v1242 = vshrl.u32 %v1241, 7
      %v1243 = vsub.s32 0, %v1242
      %v1244 = vrot.slane %v1235, %v1243
      %v1245 = vlaneseq
      %v1246 = vshrl.u32 %v1245, 7
      %v1247 = vsub.s32 0, %v1246
      %v1248 = vrot.slane %v1236, %v1247
      %v1249 = vmul.f32 %v1239, %v1244
      %v1250 = vmul.f32 %v1239, %v1248
      %v1251 = vadd.f32 %v1213, %v1249
      %v1252 = vadd.f32 %v1214, %v1250
      %1253 = vset.pattern.permute.xlu0 9
      %1254 = vperm.xlu0 %1253, %v1041
      %v1255 = vpop.permute.xlu0 %1254
      %v1257 = vlaneseq
      %v1258 = vshrl.u32 %v1257, 7
      %v1259 = vsub.s32 1, %v1258
      %v1260 = vrot.slane %v1235, %v1259
      %v1261 = vlaneseq
      %v1262 = vshrl.u32 %v1261, 7
      %v1263 = vsub.s32 1, %v1262
      %v1264 = vrot.slane %v1236, %v1263
      %v1265 = vmul.f32 %v1255, %v1260
      %v1266 = vmul.f32 %v1255, %v1264
      %v1267 = vadd.f32 %v1251, %v1265
      %v1268 = vadd.f32 %v1252, %v1266
      %1269 = vset.pattern.permute.xlu0 10
      %1270 = vperm.xlu0 %1269, %v1041
      %v1271 = vpop.permute.xlu0 %1270
      %v1273 = vlaneseq
      %v1274 = vshrl.u32 %v1273, 7
      %v1275 = vsub.s32 2, %v1274
      %v1276 = vrot.slane %v1235, %v1275
      %v1277 = vlaneseq
      %v1278 = vshrl.u32 %v1277, 7
      %v1279 = vsub.s32 2, %v1278
      %v1280 = vrot.slane %v1236, %v1279
      %v1281 = vmul.f32 %v1271, %v1276
      %v1282 = vmul.f32 %v1271, %v1280
      %v1283 = vadd.f32 %v1267, %v1281
      %v1284 = vadd.f32 %v1268, %v1282
      %1285 = vset.pattern.permute.xlu0 11
      %1286 = vperm.xlu0 %1285, %v1041
      %v1287 = vpop.permute.xlu0 %1286
      %v1289 = vlaneseq
      %v1290 = vshrl.u32 %v1289, 7
      %v1291 = vsub.s32 3, %v1290
      %v1292 = vrot.slane %v1235, %v1291
      %v1293 = vlaneseq
      %v1294 = vshrl.u32 %v1293, 7
      %v1295 = vsub.s32 3, %v1294
      %v1296 = vrot.slane %v1236, %v1295
      %v1297 = vmul.f32 %v1287, %v1292
      %v1298 = vmul.f32 %v1287, %v1296
      %v1299 = vadd.f32 %v1283, %v1297
      %v1300 = vadd.f32 %v1284, %v1298
      %1301 = vrot.lane.b32.xlu0 %v225, 3
      %v1302 = vpop.permute.xlu0 %1301
      %1303 = vrot.lane.b32.xlu0 %v229, 3
      %v1304 = vpop.permute.xlu0 %1303
      %vm1305 = vcmp.lt.s32.totalorder %v236, 3
      %v1306 = vsel %vm1305, %v1302, %v1304
      %v1307 = vsel %vm1305, %v1304, %v1302
      %s1308 = scalar_lea.vmem %s4, 24
      %v1309 = vld [vmem:[%s1308] sm:$0x3]
      %v1311 = vlaneseq
      %v1312 = vshrl.u32 %v1311, 7
      %v1313 = vsub.s32 0, %v1312
      %v1314 = vrot.slane %v1309, %v1313
      %v1315 = vlaneseq
      %v1316 = vshrl.u32 %v1315, 7
      %v1317 = vsub.s32 1, %v1316
      %v1318 = vrot.slane %v1309, %v1317
      %v1321 = vmul.f32 %v1307, %v1314
      %v1322 = vmul.f32 %v1306, %v1318
      %1323 = vset.pattern.permute.xlu0 12
      %1324 = vperm.xlu0 %1323, %v1041
      %v1325 = vpop.permute.xlu0 %1324
      %v1327 = vlaneseq
      %v1328 = vshrl.u32 %v1327, 7
      %v1329 = vsub.s32 0, %v1328
      %v1330 = vrot.slane %v1321, %v1329
      %v1331 = vlaneseq
      %v1332 = vshrl.u32 %v1331, 7
      %v1333 = vsub.s32 0, %v1332
      %v1334 = vrot.slane %v1322, %v1333
      %v1335 = vmul.f32 %v1325, %v1330
      %v1336 = vmul.f32 %v1325, %v1334
      %v1337 = vadd.f32 %v1299, %v1335
      %v1338 = vadd.f32 %v1300, %v1336
      %1339 = vset.pattern.permute.xlu0 13
      %1340 = vperm.xlu0 %1339, %v1041
      %v1341 = vpop.permute.xlu0 %1340
      %v1343 = vlaneseq
      %v1344 = vshrl.u32 %v1343, 7
      %v1345 = vsub.s32 1, %v1344
      %v1346 = vrot.slane %v1321, %v1345
      %v1347 = vlaneseq
      %v1348 = vshrl.u32 %v1347, 7
      %v1349 = vsub.s32 1, %v1348
      %v1350 = vrot.slane %v1322, %v1349
      %v1351 = vmul.f32 %v1341, %v1346
      %v1352 = vmul.f32 %v1341, %v1350
      %v1353 = vadd.f32 %v1337, %v1351
      %v1354 = vadd.f32 %v1338, %v1352
      %1355 = vset.pattern.permute.xlu0 14
      %1356 = vperm.xlu0 %1355, %v1041
      %v1357 = vpop.permute.xlu0 %1356
      %v1359 = vlaneseq
      %v1360 = vshrl.u32 %v1359, 7
      %v1361 = vsub.s32 2, %v1360
      %v1362 = vrot.slane %v1321, %v1361
      %v1363 = vlaneseq
      %v1364 = vshrl.u32 %v1363, 7
      %v1365 = vsub.s32 2, %v1364
      %v1366 = vrot.slane %v1322, %v1365
      %v1367 = vmul.f32 %v1357, %v1362
      %v1368 = vmul.f32 %v1357, %v1366
      %v1369 = vadd.f32 %v1353, %v1367
      %v1370 = vadd.f32 %v1354, %v1368
      %1371 = vset.pattern.permute.xlu0 15
      %1372 = vperm.xlu0 %1371, %v1041
      %v1373 = vpop.permute.xlu0 %1372
      %v1375 = vlaneseq
      %v1376 = vshrl.u32 %v1375, 7
      %v1377 = vsub.s32 3, %v1376
      %v1378 = vrot.slane %v1321, %v1377
      %v1379 = vlaneseq
      %v1380 = vshrl.u32 %v1379, 7
      %v1381 = vsub.s32 3, %v1380
      %v1382 = vrot.slane %v1322, %v1381
      %v1383 = vmul.f32 %v1373, %v1378
      %v1384 = vmul.f32 %v1373, %v1382
      %v1385 = vadd.f32 %v1369, %v1383
      %v1386 = vadd.f32 %v1370, %v1384
      %1387 = vset.pattern.permute.xlu0 16
      %1388 = vperm.xlu0 %1387, %v1041
      %v1389 = vpop.permute.xlu0 %1388
      %v1391 = vmul.f32 %v1389, %v594
      %v1392 = vmul.f32 %v1389, %v598
      %v1393 = vadd.f32 %v1385, %v1391
      %v1394 = vadd.f32 %v1386, %v1392
      %1395 = vset.pattern.permute.xlu0 17
      %1396 = vperm.xlu0 %1395, %v1041
      %v1397 = vpop.permute.xlu0 %1396
      %v1399 = vmul.f32 %v1397, %v620
      %v1400 = vmul.f32 %v1397, %v624
      %v1401 = vadd.f32 %v1393, %v1399
      %v1402 = vadd.f32 %v1394, %v1400
      %1403 = vset.pattern.permute.xlu0 18
      %1404 = vperm.xlu0 %1403, %v1041
      %v1405 = vpop.permute.xlu0 %1404
      %v1407 = vmul.f32 %v1405, %v646
      %v1408 = vmul.f32 %v1405, %v650
      %v1409 = vadd.f32 %v1401, %v1407
      %v1410 = vadd.f32 %v1402, %v1408
      %1411 = vset.pattern.permute.xlu0 19
      %1412 = vperm.xlu0 %1411, %v1041
      %v1413 = vpop.permute.xlu0 %1412
      %v1415 = vmul.f32 %v1413, %v672
      %v1416 = vmul.f32 %v1413, %v676
      %v1417 = vadd.f32 %v1409, %v1415
      %v1418 = vadd.f32 %v1410, %v1416
      %1419 = vrot.lane.b32.xlu0 %v225, 125
      %v1420 = vpop.permute.xlu0 %1419
      %1421 = vrot.lane.b32.xlu0 %v229, 125
      %v1422 = vpop.permute.xlu0 %1421
      %vm1423 = vcmp.lt.s32.totalorder %v236, 125
      %v1424 = vsel %vm1423, %v1420, %v1422
      %v1425 = vsel %vm1423, %v1422, %v1420
      %s1426 = scalar_lea.vmem %s4, 28
      %v1427 = vld [vmem:[%s1426] sm:$0x3]
      %v1429 = vlaneseq
      %v1430 = vshrl.u32 %v1429, 7
      %v1431 = vsub.s32 0, %v1430
      %v1432 = vrot.slane %v1427, %v1431
      %v1433 = vlaneseq
      %v1434 = vshrl.u32 %v1433, 7
      %v1435 = vsub.s32 1, %v1434
      %v1436 = vrot.slane %v1427, %v1435
      %v1439 = vmul.f32 %v1424, %v1432
      %v1440 = vmul.f32 %v1425, %v1436
      %1441 = vset.pattern.permute.xlu0 20
      %1442 = vperm.xlu0 %1441, %v1041
      %v1443 = vpop.permute.xlu0 %1442
      %v1445 = vlaneseq
      %v1446 = vshrl.u32 %v1445, 7
      %v1447 = vsub.s32 0, %v1446
      %v1448 = vrot.slane %v1439, %v1447
      %v1449 = vlaneseq
      %v1450 = vshrl.u32 %v1449, 7
      %v1451 = vsub.s32 0, %v1450
      %v1452 = vrot.slane %v1440, %v1451
      %v1453 = vmul.f32 %v1443, %v1448
      %v1454 = vmul.f32 %v1443, %v1452
      %v1455 = vadd.f32 %v1417, %v1453
      %v1456 = vadd.f32 %v1418, %v1454
      %1457 = vset.pattern.permute.xlu0 21
      %1458 = vperm.xlu0 %1457, %v1041
      %v1459 = vpop.permute.xlu0 %1458
      %v1461 = vlaneseq
      %v1462 = vshrl.u32 %v1461, 7
      %v1463 = vsub.s32 1, %v1462
      %v1464 = vrot.slane %v1439, %v1463
      %v1465 = vlaneseq
      %v1466 = vshrl.u32 %v1465, 7
      %v1467 = vsub.s32 1, %v1466
      %v1468 = vrot.slane %v1440, %v1467
      %v1469 = vmul.f32 %v1459, %v1464
      %v1470 = vmul.f32 %v1459, %v1468
      %v1471 = vadd.f32 %v1455, %v1469
      %v1472 = vadd.f32 %v1456, %v1470
      %1473 = vset.pattern.permute.xlu0 22
      %1474 = vperm.xlu0 %1473, %v1041
      %v1475 = vpop.permute.xlu0 %1474
      %v1477 = vlaneseq
      %v1478 = vshrl.u32 %v1477, 7
      %v1479 = vsub.s32 2, %v1478
      %v1480 = vrot.slane %v1439, %v1479
      %v1481 = vlaneseq
      %v1482 = vshrl.u32 %v1481, 7
      %v1483 = vsub.s32 2, %v1482
      %v1484 = vrot.slane %v1440, %v1483
      %v1485 = vmul.f32 %v1475, %v1480
      %v1486 = vmul.f32 %v1475, %v1484
      %v1487 = vadd.f32 %v1471, %v1485
      %v1488 = vadd.f32 %v1472, %v1486
      %1489 = vset.pattern.permute.xlu0 23
      %1490 = vperm.xlu0 %1489, %v1041
      %v1491 = vpop.permute.xlu0 %1490
      %v1493 = vlaneseq
      %v1494 = vshrl.u32 %v1493, 7
      %v1495 = vsub.s32 3, %v1494
      %v1496 = vrot.slane %v1439, %v1495
      %v1497 = vlaneseq
      %v1498 = vshrl.u32 %v1497, 7
      %v1499 = vsub.s32 3, %v1498
      %v1500 = vrot.slane %v1440, %v1499
      %v1501 = vmul.f32 %v1491, %v1496
      %v1502 = vmul.f32 %v1491, %v1500
      %v1503 = vadd.f32 %v1487, %v1501
      %v1504 = vadd.f32 %v1488, %v1502
      %1505 = vrot.lane.b32.xlu0 %v225, 83
      %v1506 = vpop.permute.xlu0 %1505
      %1507 = vrot.lane.b32.xlu0 %v229, 83
      %v1508 = vpop.permute.xlu0 %1507
      %vm1509 = vcmp.lt.s32.totalorder %v236, 83
      %v1510 = vsel %vm1509, %v1506, %v1508
      %v1511 = vsel %vm1509, %v1508, %v1506
      %s1512 = scalar_lea.vmem %s4, 30
      %v1513 = vld [vmem:[%s1512] sm:$0x3]
      %v1515 = vlaneseq
      %v1516 = vshrl.u32 %v1515, 7
      %v1517 = vsub.s32 0, %v1516
      %v1518 = vrot.slane %v1513, %v1517
      %v1519 = vlaneseq
      %v1520 = vshrl.u32 %v1519, 7
      %v1521 = vsub.s32 1, %v1520
      %v1522 = vrot.slane %v1513, %v1521
      %v1525 = vmul.f32 %v1510, %v1518
      %v1526 = vmul.f32 %v1511, %v1522
      %1527 = vset.pattern.permute.xlu0 24
      %1528 = vperm.xlu0 %1527, %v1041
      %v1529 = vpop.permute.xlu0 %1528
      %v1531 = vlaneseq
      %v1532 = vshrl.u32 %v1531, 7
      %v1533 = vsub.s32 0, %v1532
      %v1534 = vrot.slane %v1525, %v1533
      %v1535 = vlaneseq
      %v1536 = vshrl.u32 %v1535, 7
      %v1537 = vsub.s32 0, %v1536
      %v1538 = vrot.slane %v1526, %v1537
      %v1539 = vmul.f32 %v1529, %v1534
      %v1540 = vmul.f32 %v1529, %v1538
      %v1541 = vadd.f32 %v1503, %v1539
      %v1542 = vadd.f32 %v1504, %v1540
      %1543 = vset.pattern.permute.xlu0 25
      %1544 = vperm.xlu0 %1543, %v1041
      %v1545 = vpop.permute.xlu0 %1544
      %v1547 = vlaneseq
      %v1548 = vshrl.u32 %v1547, 7
      %v1549 = vsub.s32 1, %v1548
      %v1550 = vrot.slane %v1525, %v1549
      %v1551 = vlaneseq
      %v1552 = vshrl.u32 %v1551, 7
      %v1553 = vsub.s32 1, %v1552
      %v1554 = vrot.slane %v1526, %v1553
      %v1555 = vmul.f32 %v1545, %v1550
      %v1556 = vmul.f32 %v1545, %v1554
      %v1557 = vadd.f32 %v1541, %v1555
      %v1558 = vadd.f32 %v1542, %v1556
      %1559 = vset.pattern.permute.xlu0 26
      %1560 = vperm.xlu0 %1559, %v1041
      %v1561 = vpop.permute.xlu0 %1560
      %v1563 = vlaneseq
      %v1564 = vshrl.u32 %v1563, 7
      %v1565 = vsub.s32 2, %v1564
      %v1566 = vrot.slane %v1525, %v1565
      %v1567 = vlaneseq
      %v1568 = vshrl.u32 %v1567, 7
      %v1569 = vsub.s32 2, %v1568
      %v1570 = vrot.slane %v1526, %v1569
      %v1571 = vmul.f32 %v1561, %v1566
      %v1572 = vmul.f32 %v1561, %v1570
      %v1573 = vadd.f32 %v1557, %v1571
      %v1574 = vadd.f32 %v1558, %v1572
      %1575 = vset.pattern.permute.xlu0 27
      %1576 = vperm.xlu0 %1575, %v1041
      %v1577 = vpop.permute.xlu0 %1576
      %v1579 = vlaneseq
      %v1580 = vshrl.u32 %v1579, 7
      %v1581 = vsub.s32 3, %v1580
      %v1582 = vrot.slane %v1525, %v1581
      %v1583 = vlaneseq
      %v1584 = vshrl.u32 %v1583, 7
      %v1585 = vsub.s32 3, %v1584
      %v1586 = vrot.slane %v1526, %v1585
      %v1587 = vmul.f32 %v1577, %v1582
      %v1588 = vmul.f32 %v1577, %v1586
      %v1589 = vadd.f32 %v1573, %v1587
      %v1590 = vadd.f32 %v1574, %v1588
      %1591 = vrot.lane.b32.xlu0 %v225, 80
      %v1592 = vpop.permute.xlu0 %1591
      %1593 = vrot.lane.b32.xlu0 %v229, 80
      %v1594 = vpop.permute.xlu0 %1593
      %vm1595 = vcmp.lt.s32.totalorder %v236, 80
      %v1596 = vsel %vm1595, %v1592, %v1594
      %v1597 = vsel %vm1595, %v1594, %v1592
      %s1598 = scalar_lea.vmem %s4, 32
      %v1599 = vld [vmem:[%s1598] sm:$0x3]
      %v1601 = vlaneseq
      %v1602 = vshrl.u32 %v1601, 7
      %v1603 = vsub.s32 0, %v1602
      %v1604 = vrot.slane %v1599, %v1603
      %v1605 = vlaneseq
      %v1606 = vshrl.u32 %v1605, 7
      %v1607 = vsub.s32 1, %v1606
      %v1608 = vrot.slane %v1599, %v1607
      %v1611 = vmul.f32 %v1596, %v1604
      %v1612 = vmul.f32 %v1597, %v1608
      %1613 = vset.pattern.permute.xlu0 28
      %1614 = vperm.xlu0 %1613, %v1041
      %v1615 = vpop.permute.xlu0 %1614
      %v1617 = vlaneseq
      %v1618 = vshrl.u32 %v1617, 7
      %v1619 = vsub.s32 0, %v1618
      %v1620 = vrot.slane %v1611, %v1619
      %v1621 = vlaneseq
      %v1622 = vshrl.u32 %v1621, 7
      %v1623 = vsub.s32 0, %v1622
      %v1624 = vrot.slane %v1612, %v1623
      %v1625 = vmul.f32 %v1615, %v1620
      %v1626 = vmul.f32 %v1615, %v1624
      %v1627 = vadd.f32 %v1589, %v1625
      %v1628 = vadd.f32 %v1590, %v1626
      %1629 = vset.pattern.permute.xlu0 29
      %1630 = vperm.xlu0 %1629, %v1041
      %v1631 = vpop.permute.xlu0 %1630
      %v1633 = vlaneseq
      %v1634 = vshrl.u32 %v1633, 7
      %v1635 = vsub.s32 1, %v1634
      %v1636 = vrot.slane %v1611, %v1635
      %v1637 = vlaneseq
      %v1638 = vshrl.u32 %v1637, 7
      %v1639 = vsub.s32 1, %v1638
      %v1640 = vrot.slane %v1612, %v1639
      %v1641 = vmul.f32 %v1631, %v1636
      %v1642 = vmul.f32 %v1631, %v1640
      %v1643 = vadd.f32 %v1627, %v1641
      %v1644 = vadd.f32 %v1628, %v1642
      %1645 = vset.pattern.permute.xlu0 30
      %1646 = vperm.xlu0 %1645, %v1041
      %v1647 = vpop.permute.xlu0 %1646
      %v1649 = vlaneseq
      %v1650 = vshrl.u32 %v1649, 7
      %v1651 = vsub.s32 2, %v1650
      %v1652 = vrot.slane %v1611, %v1651
      %v1653 = vlaneseq
      %v1654 = vshrl.u32 %v1653, 7
      %v1655 = vsub.s32 2, %v1654
      %v1656 = vrot.slane %v1612, %v1655
      %v1657 = vmul.f32 %v1647, %v1652
      %v1658 = vmul.f32 %v1647, %v1656
      %v1659 = vadd.f32 %v1643, %v1657
      %v1660 = vadd.f32 %v1644, %v1658
      %1661 = vset.pattern.permute.xlu0 31
      %1662 = vperm.xlu0 %1661, %v1041
      %v1663 = vpop.permute.xlu0 %1662
      %v1665 = vlaneseq
      %v1666 = vshrl.u32 %v1665, 7
      %v1667 = vsub.s32 3, %v1666
      %v1668 = vrot.slane %v1611, %v1667
      %v1669 = vlaneseq
      %v1670 = vshrl.u32 %v1669, 7
      %v1671 = vsub.s32 3, %v1670
      %v1672 = vrot.slane %v1612, %v1671
      %v1673 = vmul.f32 %v1663, %v1668
      %v1674 = vmul.f32 %v1663, %v1672
      %v1675 = vadd.f32 %v1659, %v1673
      %v1676 = vadd.f32 %v1660, %v1674
      %1677 = vrot.lane.b32.xlu0 %v225, 77
      %v1678 = vpop.permute.xlu0 %1677
      %1679 = vrot.lane.b32.xlu0 %v229, 77
      %v1680 = vpop.permute.xlu0 %1679
      %vm1681 = vcmp.lt.s32.totalorder %v236, 77
      %v1682 = vsel %vm1681, %v1678, %v1680
      %v1683 = vsel %vm1681, %v1680, %v1678
      %s1684 = scalar_lea.vmem %s4, 34
      %v1685 = vld [vmem:[%s1684] sm:$0x3]
      %v1687 = vlaneseq
      %v1688 = vshrl.u32 %v1687, 7
      %v1689 = vsub.s32 0, %v1688
      %v1690 = vrot.slane %v1685, %v1689
      %v1691 = vlaneseq
      %v1692 = vshrl.u32 %v1691, 7
      %v1693 = vsub.s32 1, %v1692
      %v1694 = vrot.slane %v1685, %v1693
      %v1697 = vmul.f32 %v1682, %v1690
      %v1698 = vmul.f32 %v1683, %v1694
      %1699 = vset.pattern.permute.xlu0 32
      %1700 = vperm.xlu0 %1699, %v1041
      %v1701 = vpop.permute.xlu0 %1700
      %v1703 = vlaneseq
      %v1704 = vshrl.u32 %v1703, 7
      %v1705 = vsub.s32 0, %v1704
      %v1706 = vrot.slane %v1697, %v1705
      %v1707 = vlaneseq
      %v1708 = vshrl.u32 %v1707, 7
      %v1709 = vsub.s32 0, %v1708
      %v1710 = vrot.slane %v1698, %v1709
      %v1711 = vmul.f32 %v1701, %v1706
      %v1712 = vmul.f32 %v1701, %v1710
      %v1713 = vadd.f32 %v1675, %v1711
      %v1714 = vadd.f32 %v1676, %v1712
      %1715 = vset.pattern.permute.xlu0 33
      %1716 = vperm.xlu0 %1715, %v1041
      %v1717 = vpop.permute.xlu0 %1716
      %v1719 = vlaneseq
      %v1720 = vshrl.u32 %v1719, 7
      %v1721 = vsub.s32 1, %v1720
      %v1722 = vrot.slane %v1697, %v1721
      %v1723 = vlaneseq
      %v1724 = vshrl.u32 %v1723, 7
      %v1725 = vsub.s32 1, %v1724
      %v1726 = vrot.slane %v1698, %v1725
      %v1727 = vmul.f32 %v1717, %v1722
      %v1728 = vmul.f32 %v1717, %v1726
      %v1729 = vadd.f32 %v1713, %v1727
      %v1730 = vadd.f32 %v1714, %v1728
      %1731 = vset.pattern.permute.xlu0 34
      %1732 = vperm.xlu0 %1731, %v1041
      %v1733 = vpop.permute.xlu0 %1732
      %v1735 = vlaneseq
      %v1736 = vshrl.u32 %v1735, 7
      %v1737 = vsub.s32 2, %v1736
      %v1738 = vrot.slane %v1697, %v1737
      %v1739 = vlaneseq
      %v1740 = vshrl.u32 %v1739, 7
      %v1741 = vsub.s32 2, %v1740
      %v1742 = vrot.slane %v1698, %v1741
      %v1743 = vmul.f32 %v1733, %v1738
      %v1744 = vmul.f32 %v1733, %v1742
      %v1745 = vadd.f32 %v1729, %v1743
      %v1746 = vadd.f32 %v1730, %v1744
      %1747 = vset.pattern.permute.xlu0 35
      %1748 = vperm.xlu0 %1747, %v1041
      %v1749 = vpop.permute.xlu0 %1748
      %v1751 = vlaneseq
      %v1752 = vshrl.u32 %v1751, 7
      %v1753 = vsub.s32 3, %v1752
      %v1754 = vrot.slane %v1697, %v1753
      %v1755 = vlaneseq
      %v1756 = vshrl.u32 %v1755, 7
      %v1757 = vsub.s32 3, %v1756
      %v1758 = vrot.slane %v1698, %v1757
      %v1759 = vmul.f32 %v1749, %v1754
      %v1760 = vmul.f32 %v1749, %v1758
      %v1761 = vadd.f32 %v1745, %v1759
      %v1762 = vadd.f32 %v1746, %v1760
      %s1763 = scalar_lea.vmem %s2, 4
      %v1764 = vld [vmem:[%s1763] sm:$0xf]
      %1766 = vset.pattern.permute.xlu0 0
      %1767 = vperm.xlu0 %1766, %v1764
      %v1768 = vpop.permute.xlu0 %1767
      %v1770 = vadd.f32 %v1761, %v1768
      %v1771 = vadd.f32 %v1762, %v1768
      %1773 = vset.pattern.permute.xlu0 0
      %1774 = vperm.xlu0 %1773, %v226
      %v1775 = vpop.permute.xlu0 %1774
      %v1777 = vlaneseq
      %v1778 = vshrl.u32 %v1777, 7
      %v1779 = vsub.s32 0, %v1778
      %v1780 = vrot.slane %v1770, %v1779
      %v1781 = vlaneseq
      %v1782 = vshrl.u32 %v1781, 7
      %v1783 = vsub.s32 0, %v1782
      %v1784 = vrot.slane %v1771, %v1783
      %v1785 = vmul.f32 %v1775, %v1780
      %v1786 = vmul.f32 %v1775, %v1784
      %v1787 = vadd.f32 %v1785, 0.0
      %v1788 = vadd.f32 %v1786, 0.0
      %1789 = vset.pattern.permute.xlu0 1
      %1790 = vperm.xlu0 %1789, %v226
      %v1791 = vpop.permute.xlu0 %1790
      %v1793 = vlaneseq
      %v1794 = vshrl.u32 %v1793, 7
      %v1795 = vsub.s32 1, %v1794
      %v1796 = vrot.slane %v1770, %v1795
      %v1797 = vlaneseq
      %v1798 = vshrl.u32 %v1797, 7
      %v1799 = vsub.s32 1, %v1798
      %v1800 = vrot.slane %v1771, %v1799
      %v1801 = vmul.f32 %v1791, %v1796
      %v1802 = vmul.f32 %v1791, %v1800
      %v1803 = vadd.f32 %v1787, %v1801
      %v1804 = vadd.f32 %v1788, %v1802
      %1805 = vset.pattern.permute.xlu0 2
      %1806 = vperm.xlu0 %1805, %v226
      %v1807 = vpop.permute.xlu0 %1806
      %v1809 = vlaneseq
      %v1810 = vshrl.u32 %v1809, 7
      %v1811 = vsub.s32 2, %v1810
      %v1812 = vrot.slane %v1770, %v1811
      %v1813 = vlaneseq
      %v1814 = vshrl.u32 %v1813, 7
      %v1815 = vsub.s32 2, %v1814
      %v1816 = vrot.slane %v1771, %v1815
      %v1817 = vmul.f32 %v1807, %v1812
      %v1818 = vmul.f32 %v1807, %v1816
      %v1819 = vadd.f32 %v1803, %v1817
      %v1820 = vadd.f32 %v1804, %v1818
      %1821 = vset.pattern.permute.xlu0 3
      %1822 = vperm.xlu0 %1821, %v226
      %v1823 = vpop.permute.xlu0 %1822
      %v1825 = vlaneseq
      %v1826 = vshrl.u32 %v1825, 7
      %v1827 = vsub.s32 3, %v1826
      %v1828 = vrot.slane %v1770, %v1827
      %v1829 = vlaneseq
      %v1830 = vshrl.u32 %v1829, 7
      %v1831 = vsub.s32 3, %v1830
      %v1832 = vrot.slane %v1771, %v1831
      %v1833 = vmul.f32 %v1823, %v1828
      %v1834 = vmul.f32 %v1823, %v1832
      %v1835 = vadd.f32 %v1819, %v1833
      %v1836 = vadd.f32 %v1820, %v1834
      %s1837 = scalar_lea.vmem %s2, 12
      %v1838 = vld [vmem:[%s1837] sm:$0xf]
      %1840 = vset.pattern.permute.xlu0 0
      %1841 = vperm.xlu0 %1840, %v1838
      %v1842 = vpop.permute.xlu0 %1841
      %v1844 = vadd.f32 %v1835, %v1842
      %v1845 = vadd.f32 %v1836, %v1842
      %v1846 = vmax.f32 %v1844, 0.0
      %v1847 = vmax.f32 %v1845, 0.0
      %v1850 = vcombine.low %v1846, %v1847
      %v1852 = vadd.f32 %v1039, %v1850
      %1853 = vrot.lane.b32.xlu0 %v1031, 51
      %v1854 = vpop.permute.xlu0 %1853
      %1855 = vrot.lane.b32.xlu0 %v1032, 51
      %v1856 = vpop.permute.xlu0 %1855
      %v1857 = vsel %vm1046, %v1854, %v1856
      %v1858 = vsel %vm1046, %v1856, %v1854
      %v1859 = vmul.f32 %v1858, %v1055
      %v1860 = vmul.f32 %v1857, %v1059
      %v1861 = vlaneseq
      %v1862 = vshrl.u32 %v1861, 7
      %v1863 = vsub.s32 0, %v1862
      %v1864 = vrot.slane %v1859, %v1863
      %v1865 = vlaneseq
      %v1866 = vshrl.u32 %v1865, 7
      %v1867 = vsub.s32 0, %v1866
      %v1868 = vrot.slane %v1860, %v1867
      %v1869 = vmul.f32 %v1067, %v1864
      %v1870 = vmul.f32 %v1067, %v1868
      %v1871 = vadd.f32 %v1869, 0.0
      %v1872 = vadd.f32 %v1870, 0.0
      %v1873 = vlaneseq
      %v1874 = vshrl.u32 %v1873, 7
      %v1875 = vsub.s32 1, %v1874
      %v1876 = vrot.slane %v1859, %v1875
      %v1877 = vlaneseq
      %v1878 = vshrl.u32 %v1877, 7
      %v1879 = vsub.s32 1, %v1878
      %v1880 = vrot.slane %v1860, %v1879
      %v1881 = vmul.f32 %v1083, %v1876
      %v1882 = vmul.f32 %v1083, %v1880
      %v1883 = vadd.f32 %v1871, %v1881
      %v1884 = vadd.f32 %v1872, %v1882
      %v1885 = vlaneseq
      %v1886 = vshrl.u32 %v1885, 7
      %v1887 = vsub.s32 2, %v1886
      %v1888 = vrot.slane %v1859, %v1887
      %v1889 = vlaneseq
      %v1890 = vshrl.u32 %v1889, 7
      %v1891 = vsub.s32 2, %v1890
      %v1892 = vrot.slane %v1860, %v1891
      %v1893 = vmul.f32 %v1099, %v1888
      %v1894 = vmul.f32 %v1099, %v1892
      %v1895 = vadd.f32 %v1883, %v1893
      %v1896 = vadd.f32 %v1884, %v1894
      %v1897 = vlaneseq
      %v1898 = vshrl.u32 %v1897, 7
      %v1899 = vsub.s32 3, %v1898
      %v1900 = vrot.slane %v1859, %v1899
      %v1901 = vlaneseq
      %v1902 = vshrl.u32 %v1901, 7
      %v1903 = vsub.s32 3, %v1902
      %v1904 = vrot.slane %v1860, %v1903
      %v1905 = vmul.f32 %v1115, %v1900
      %v1906 = vmul.f32 %v1115, %v1904
      %v1907 = vadd.f32 %v1895, %v1905
      %v1908 = vadd.f32 %v1896, %v1906
      %1909 = vrot.lane.b32.xlu0 %v1031, 48
      %v1910 = vpop.permute.xlu0 %1909
      %1911 = vrot.lane.b32.xlu0 %v1032, 48
      %v1912 = vpop.permute.xlu0 %1911
      %v1913 = vsel %vm1133, %v1910, %v1912
      %v1914 = vsel %vm1133, %v1912, %v1910
      %v1915 = vmul.f32 %v1914, %v1142
      %v1916 = vmul.f32 %v1913, %v1146
      %v1917 = vlaneseq
      %v1918 = vshrl.u32 %v1917, 7
      %v1919 = vsub.s32 0, %v1918
      %v1920 = vrot.slane %v1915, %v1919
      %v1921 = vlaneseq
      %v1922 = vshrl.u32 %v1921, 7
      %v1923 = vsub.s32 0, %v1922
      %v1924 = vrot.slane %v1916, %v1923
      %v1925 = vmul.f32 %v1153, %v1920
      %v1926 = vmul.f32 %v1153, %v1924
      %v1927 = vadd.f32 %v1907, %v1925
      %v1928 = vadd.f32 %v1908, %v1926
      %v1929 = vlaneseq
      %v1930 = vshrl.u32 %v1929, 7
      %v1931 = vsub.s32 1, %v1930
      %v1932 = vrot.slane %v1915, %v1931
      %v1933 = vlaneseq
      %v1934 = vshrl.u32 %v1933, 7
      %v1935 = vsub.s32 1, %v1934
      %v1936 = vrot.slane %v1916, %v1935
      %v1937 = vmul.f32 %v1169, %v1932
      %v1938 = vmul.f32 %v1169, %v1936
      %v1939 = vadd.f32 %v1927, %v1937
      %v1940 = vadd.f32 %v1928, %v1938
      %v1941 = vlaneseq
      %v1942 = vshrl.u32 %v1941, 7
      %v1943 = vsub.s32 2, %v1942
      %v1944 = vrot.slane %v1915, %v1943
      %v1945 = vlaneseq
      %v1946 = vshrl.u32 %v1945, 7
      %v1947 = vsub.s32 2, %v1946
      %v1948 = vrot.slane %v1916, %v1947
      %v1949 = vmul.f32 %v1185, %v1944
      %v1950 = vmul.f32 %v1185, %v1948
      %v1951 = vadd.f32 %v1939, %v1949
      %v1952 = vadd.f32 %v1940, %v1950
      %v1953 = vlaneseq
      %v1954 = vshrl.u32 %v1953, 7
      %v1955 = vsub.s32 3, %v1954
      %v1956 = vrot.slane %v1915, %v1955
      %v1957 = vlaneseq
      %v1958 = vshrl.u32 %v1957, 7
      %v1959 = vsub.s32 3, %v1958
      %v1960 = vrot.slane %v1916, %v1959
      %v1961 = vmul.f32 %v1201, %v1956
      %v1962 = vmul.f32 %v1201, %v1960
      %v1963 = vadd.f32 %v1951, %v1961
      %v1964 = vadd.f32 %v1952, %v1962
      %1965 = vrot.lane.b32.xlu0 %v1031, 45
      %v1966 = vpop.permute.xlu0 %1965
      %1967 = vrot.lane.b32.xlu0 %v1032, 45
      %v1968 = vpop.permute.xlu0 %1967
      %v1969 = vsel %vm1219, %v1966, %v1968
      %v1970 = vsel %vm1219, %v1968, %v1966
      %v1971 = vmul.f32 %v1970, %v1228
      %v1972 = vmul.f32 %v1969, %v1232
      %v1973 = vlaneseq
      %v1974 = vshrl.u32 %v1973, 7
      %v1975 = vsub.s32 0, %v1974
      %v1976 = vrot.slane %v1971, %v1975
      %v1977 = vlaneseq
      %v1978 = vshrl.u32 %v1977, 7
      %v1979 = vsub.s32 0, %v1978
      %v1980 = vrot.slane %v1972, %v1979
      %v1981 = vmul.f32 %v1239, %v1976
      %v1982 = vmul.f32 %v1239, %v1980
      %v1983 = vadd.f32 %v1963, %v1981
      %v1984 = vadd.f32 %v1964, %v1982
      %v1985 = vlaneseq
      %v1986 = vshrl.u32 %v1985, 7
      %v1987 = vsub.s32 1, %v1986
      %v1988 = vrot.slane %v1971, %v1987
      %v1989 = vlaneseq
      %v1990 = vshrl.u32 %v1989, 7
      %v1991 = vsub.s32 1, %v1990
      %v1992 = vrot.slane %v1972, %v1991
      %v1993 = vmul.f32 %v1255, %v1988
      %v1994 = vmul.f32 %v1255, %v1992
      %v1995 = vadd.f32 %v1983, %v1993
      %v1996 = vadd.f32 %v1984, %v1994
      %v1997 = vlaneseq
      %v1998 = vshrl.u32 %v1997, 7
      %v1999 = vsub.s32 2, %v1998
      %v2000 = vrot.slane %v1971, %v1999
      %v2001 = vlaneseq
      %v2002 = vshrl.u32 %v2001, 7
      %v2003 = vsub.s32 2, %v2002
      %v2004 = vrot.slane %v1972, %v2003
      %v2005 = vmul.f32 %v1271, %v2000
      %v2006 = vmul.f32 %v1271, %v2004
      %v2007 = vadd.f32 %v1995, %v2005
      %v2008 = vadd.f32 %v1996, %v2006
      %v2009 = vlaneseq
      %v2010 = vshrl.u32 %v2009, 7
      %v2011 = vsub.s32 3, %v2010
      %v2012 = vrot.slane %v1971, %v2011
      %v2013 = vlaneseq
      %v2014 = vshrl.u32 %v2013, 7
      %v2015 = vsub.s32 3, %v2014
      %v2016 = vrot.slane %v1972, %v2015
      %v2017 = vmul.f32 %v1287, %v2012
      %v2018 = vmul.f32 %v1287, %v2016
      %v2019 = vadd.f32 %v2007, %v2017
      %v2020 = vadd.f32 %v2008, %v2018
      %2021 = vrot.lane.b32.xlu0 %v1031, 3
      %v2022 = vpop.permute.xlu0 %2021
      %2023 = vrot.lane.b32.xlu0 %v1032, 3
      %v2024 = vpop.permute.xlu0 %2023
      %v2025 = vsel %vm1305, %v2022, %v2024
      %v2026 = vsel %vm1305, %v2024, %v2022
      %v2027 = vmul.f32 %v2026, %v1314
      %v2028 = vmul.f32 %v2025, %v1318
      %v2029 = vlaneseq
      %v2030 = vshrl.u32 %v2029, 7
      %v2031 = vsub.s32 0, %v2030
      %v2032 = vrot.slane %v2027, %v2031
      %v2033 = vlaneseq
      %v2034 = vshrl.u32 %v2033, 7
      %v2035 = vsub.s32 0, %v2034
      %v2036 = vrot.slane %v2028, %v2035
      %v2037 = vmul.f32 %v1325, %v2032
      %v2038 = vmul.f32 %v1325, %v2036
      %v2039 = vadd.f32 %v2019, %v2037
      %v2040 = vadd.f32 %v2020, %v2038
      %v2041 = vlaneseq
      %v2042 = vshrl.u32 %v2041, 7
      %v2043 = vsub.s32 1, %v2042
      %v2044 = vrot.slane %v2027, %v2043
      %v2045 = vlaneseq
      %v2046 = vshrl.u32 %v2045, 7
      %v2047 = vsub.s32 1, %v2046
      %v2048 = vrot.slane %v2028, %v2047
      %v2049 = vmul.f32 %v1341, %v2044
      %v2050 = vmul.f32 %v1341, %v2048
      %v2051 = vadd.f32 %v2039, %v2049
      %v2052 = vadd.f32 %v2040, %v2050
      %v2053 = vlaneseq
      %v2054 = vshrl.u32 %v2053, 7
      %v2055 = vsub.s32 2, %v2054
      %v2056 = vrot.slane %v2027, %v2055
      %v2057 = vlaneseq
      %v2058 = vshrl.u32 %v2057, 7
      %v2059 = vsub.s32 2, %v2058
      %v2060 = vrot.slane %v2028, %v2059
      %v2061 = vmul.f32 %v1357, %v2056
      %v2062 = vmul.f32 %v1357, %v2060
      %v2063 = vadd.f32 %v2051, %v2061
      %v2064 = vadd.f32 %v2052, %v2062
      %v2065 = vlaneseq
      %v2066 = vshrl.u32 %v2065, 7
      %v2067 = vsub.s32 3, %v2066
      %v2068 = vrot.slane %v2027, %v2067
      %v2069 = vlaneseq
      %v2070 = vshrl.u32 %v2069, 7
      %v2071 = vsub.s32 3, %v2070
      %v2072 = vrot.slane %v2028, %v2071
      %v2073 = vmul.f32 %v1373, %v2068
      %v2074 = vmul.f32 %v1373, %v2072
      %v2075 = vadd.f32 %v2063, %v2073
      %v2076 = vadd.f32 %v2064, %v2074
      %v2077 = vlaneseq
      %v2078 = vshrl.u32 %v2077, 7
      %v2079 = vsub.s32 0, %v2078
      %v2080 = vrot.slane %v1031, %v2079
      %v2081 = vlaneseq
      %v2082 = vshrl.u32 %v2081, 7
      %v2083 = vsub.s32 0, %v2082
      %v2084 = vrot.slane %v1032, %v2083
      %v2085 = vmul.f32 %v1389, %v2080
      %v2086 = vmul.f32 %v1389, %v2084
      %v2087 = vadd.f32 %v2075, %v2085
      %v2088 = vadd.f32 %v2076, %v2086
      %v2089 = vlaneseq
      %v2090 = vshrl.u32 %v2089, 7
      %v2091 = vsub.s32 1, %v2090
      %v2092 = vrot.slane %v1031, %v2091
      %v2093 = vlaneseq
      %v2094 = vshrl.u32 %v2093, 7
      %v2095 = vsub.s32 1, %v2094
      %v2096 = vrot.slane %v1032, %v2095
      %v2097 = vmul.f32 %v1397, %v2092
      %v2098 = vmul.f32 %v1397, %v2096
      %v2099 = vadd.f32 %v2087, %v2097
      %v2100 = vadd.f32 %v2088, %v2098
      %v2101 = vlaneseq
      %v2102 = vshrl.u32 %v2101, 7
      %v2103 = vsub.s32 2, %v2102
      %v2104 = vrot.slane %v1031, %v2103
      %v2105 = vlaneseq
      %v2106 = vshrl.u32 %v2105, 7
      %v2107 = vsub.s32 2, %v2106
      %v2108 = vrot.slane %v1032, %v2107
      %v2109 = vmul.f32 %v1405, %v2104
      %v2110 = vmul.f32 %v1405, %v2108
      %v2111 = vadd.f32 %v2099, %v2109
      %v2112 = vadd.f32 %v2100, %v2110
      %v2113 = vlaneseq
      %v2114 = vshrl.u32 %v2113, 7
      %v2115 = vsub.s32 3, %v2114
      %v2116 = vrot.slane %v1031, %v2115
      %v2117 = vlaneseq
      %v2118 = vshrl.u32 %v2117, 7
      %v2119 = vsub.s32 3, %v2118
      %v2120 = vrot.slane %v1032, %v2119
      %v2121 = vmul.f32 %v1413, %v2116
      %v2122 = vmul.f32 %v1413, %v2120
      %v2123 = vadd.f32 %v2111, %v2121
      %v2124 = vadd.f32 %v2112, %v2122
      %2125 = vrot.lane.b32.xlu0 %v1031, 125
      %v2126 = vpop.permute.xlu0 %2125
      %2127 = vrot.lane.b32.xlu0 %v1032, 125
      %v2128 = vpop.permute.xlu0 %2127
      %v2129 = vsel %vm1423, %v2126, %v2128
      %v2130 = vsel %vm1423, %v2128, %v2126
      %v2131 = vmul.f32 %v2129, %v1432
      %v2132 = vmul.f32 %v2130, %v1436
      %v2133 = vlaneseq
      %v2134 = vshrl.u32 %v2133, 7
      %v2135 = vsub.s32 0, %v2134
      %v2136 = vrot.slane %v2131, %v2135
      %v2137 = vlaneseq
      %v2138 = vshrl.u32 %v2137, 7
      %v2139 = vsub.s32 0, %v2138
      %v2140 = vrot.slane %v2132, %v2139
      %v2141 = vmul.f32 %v1443, %v2136
      %v2142 = vmul.f32 %v1443, %v2140
      %v2143 = vadd.f32 %v2123, %v2141
      %v2144 = vadd.f32 %v2124, %v2142
      %v2145 = vlaneseq
      %v2146 = vshrl.u32 %v2145, 7
      %v2147 = vsub.s32 1, %v2146
      %v2148 = vrot.slane %v2131, %v2147
      %v2149 = vlaneseq
      %v2150 = vshrl.u32 %v2149, 7
      %v2151 = vsub.s32 1, %v2150
      %v2152 = vrot.slane %v2132, %v2151
      %v2153 = vmul.f32 %v1459, %v2148
      %v2154 = vmul.f32 %v1459, %v2152
      %v2155 = vadd.f32 %v2143, %v2153
      %v2156 = vadd.f32 %v2144, %v2154
      %v2157 = vlaneseq
      %v2158 = vshrl.u32 %v2157, 7
      %v2159 = vsub.s32 2, %v2158
      %v2160 = vrot.slane %v2131, %v2159
      %v2161 = vlaneseq
      %v2162 = vshrl.u32 %v2161, 7
      %v2163 = vsub.s32 2, %v2162
      %v2164 = vrot.slane %v2132, %v2163
      %v2165 = vmul.f32 %v1475, %v2160
      %v2166 = vmul.f32 %v1475, %v2164
      %v2167 = vadd.f32 %v2155, %v2165
      %v2168 = vadd.f32 %v2156, %v2166
      %v2169 = vlaneseq
      %v2170 = vshrl.u32 %v2169, 7
      %v2171 = vsub.s32 3, %v2170
      %v2172 = vrot.slane %v2131, %v2171
      %v2173 = vlaneseq
      %v2174 = vshrl.u32 %v2173, 7
      %v2175 = vsub.s32 3, %v2174
      %v2176 = vrot.slane %v2132, %v2175
      %v2177 = vmul.f32 %v1491, %v2172
      %v2178 = vmul.f32 %v1491, %v2176
      %v2179 = vadd.f32 %v2167, %v2177
      %v2180 = vadd.f32 %v2168, %v2178
      %2181 = vrot.lane.b32.xlu0 %v1031, 83
      %v2182 = vpop.permute.xlu0 %2181
      %2183 = vrot.lane.b32.xlu0 %v1032, 83
      %v2184 = vpop.permute.xlu0 %2183
      %v2185 = vsel %vm1509, %v2182, %v2184
      %v2186 = vsel %vm1509, %v2184, %v2182
      %v2187 = vmul.f32 %v2185, %v1518
      %v2188 = vmul.f32 %v2186, %v1522
      %v2189 = vlaneseq
      %v2190 = vshrl.u32 %v2189, 7
      %v2191 = vsub.s32 0, %v2190
      %v2192 = vrot.slane %v2187, %v2191
      %v2193 = vlaneseq
      %v2194 = vshrl.u32 %v2193, 7
      %v2195 = vsub.s32 0, %v2194
      %v2196 = vrot.slane %v2188, %v2195
      %v2197 = vmul.f32 %v1529, %v2192
      %v2198 = vmul.f32 %v1529, %v2196
      %v2199 = vadd.f32 %v2179, %v2197
      %v2200 = vadd.f32 %v2180, %v2198
      %v2201 = vlaneseq
      %v2202 = vshrl.u32 %v2201, 7
      %v2203 = vsub.s32 1, %v2202
      %v2204 = vrot.slane %v2187, %v2203
      %v2205 = vlaneseq
      %v2206 = vshrl.u32 %v2205, 7
      %v2207 = vsub.s32 1, %v2206
      %v2208 = vrot.slane %v2188, %v2207
      %v2209 = vmul.f32 %v1545, %v2204
      %v2210 = vmul.f32 %v1545, %v2208
      %v2211 = vadd.f32 %v2199, %v2209
      %v2212 = vadd.f32 %v2200, %v2210
      %v2213 = vlaneseq
      %v2214 = vshrl.u32 %v2213, 7
      %v2215 = vsub.s32 2, %v2214
      %v2216 = vrot.slane %v2187, %v2215
      %v2217 = vlaneseq
      %v2218 = vshrl.u32 %v2217, 7
      %v2219 = vsub.s32 2, %v2218
      %v2220 = vrot.slane %v2188, %v2219
      %v2221 = vmul.f32 %v1561, %v2216
      %v2222 = vmul.f32 %v1561, %v2220
      %v2223 = vadd.f32 %v2211, %v2221
      %v2224 = vadd.f32 %v2212, %v2222
      %v2225 = vlaneseq
      %v2226 = vshrl.u32 %v2225, 7
      %v2227 = vsub.s32 3, %v2226
      %v2228 = vrot.slane %v2187, %v2227
      %v2229 = vlaneseq
      %v2230 = vshrl.u32 %v2229, 7
      %v2231 = vsub.s32 3, %v2230
      %v2232 = vrot.slane %v2188, %v2231
      %v2233 = vmul.f32 %v1577, %v2228
      %v2234 = vmul.f32 %v1577, %v2232
      %v2235 = vadd.f32 %v2223, %v2233
      %v2236 = vadd.f32 %v2224, %v2234
      %2237 = vrot.lane.b32.xlu0 %v1031, 80
      %v2238 = vpop.permute.xlu0 %2237
      %2239 = vrot.lane.b32.xlu0 %v1032, 80
      %v2240 = vpop.permute.xlu0 %2239
      %v2241 = vsel %vm1595, %v2238, %v2240
      %v2242 = vsel %vm1595, %v2240, %v2238
      %v2243 = vmul.f32 %v2241, %v1604
      %v2244 = vmul.f32 %v2242, %v1608
      %v2245 = vlaneseq
      %v2246 = vshrl.u32 %v2245, 7
      %v2247 = vsub.s32 0, %v2246
      %v2248 = vrot.slane %v2243, %v2247
      %v2249 = vlaneseq
      %v2250 = vshrl.u32 %v2249, 7
      %v2251 = vsub.s32 0, %v2250
      %v2252 = vrot.slane %v2244, %v2251
      %v2253 = vmul.f32 %v1615, %v2248
      %v2254 = vmul.f32 %v1615, %v2252
      %v2255 = vadd.f32 %v2235, %v2253
      %v2256 = vadd.f32 %v2236, %v2254
      %v2257 = vlaneseq
      %v2258 = vshrl.u32 %v2257, 7
      %v2259 = vsub.s32 1, %v2258
      %v2260 = vrot.slane %v2243, %v2259
      %v2261 = vlaneseq
      %v2262 = vshrl.u32 %v2261, 7
      %v2263 = vsub.s32 1, %v2262
      %v2264 = vrot.slane %v2244, %v2263
      %v2265 = vmul.f32 %v1631, %v2260
      %v2266 = vmul.f32 %v1631, %v2264
      %v2267 = vadd.f32 %v2255, %v2265
      %v2268 = vadd.f32 %v2256, %v2266
      %v2269 = vlaneseq
      %v2270 = vshrl.u32 %v2269, 7
      %v2271 = vsub.s32 2, %v2270
      %v2272 = vrot.slane %v2243, %v2271
      %v2273 = vlaneseq
      %v2274 = vshrl.u32 %v2273, 7
      %v2275 = vsub.s32 2, %v2274
      %v2276 = vrot.slane %v2244, %v2275
      %v2277 = vmul.f32 %v1647, %v2272
      %v2278 = vmul.f32 %v1647, %v2276
      %v2279 = vadd.f32 %v2267, %v2277
      %v2280 = vadd.f32 %v2268, %v2278
      %v2281 = vlaneseq
      %v2282 = vshrl.u32 %v2281, 7
      %v2283 = vsub.s32 3, %v2282
      %v2284 = vrot.slane %v2243, %v2283
      %v2285 = vlaneseq
      %v2286 = vshrl.u32 %v2285, 7
      %v2287 = vsub.s32 3, %v2286
      %v2288 = vrot.slane %v2244, %v2287
      %v2289 = vmul.f32 %v1663, %v2284
      %v2290 = vmul.f32 %v1663, %v2288
      %v2291 = vadd.f32 %v2279, %v2289
      %v2292 = vadd.f32 %v2280, %v2290
      %2293 = vrot.lane.b32.xlu0 %v1031, 77
      %v2294 = vpop.permute.xlu0 %2293
      %2295 = vrot.lane.b32.xlu0 %v1032, 77
      %v2296 = vpop.permute.xlu0 %2295
      %v2297 = vsel %vm1681, %v2294, %v2296
      %v2298 = vsel %vm1681, %v2296, %v2294
      %v2299 = vmul.f32 %v2297, %v1690
      %v2300 = vmul.f32 %v2298, %v1694
      %v2301 = vlaneseq
      %v2302 = vshrl.u32 %v2301, 7
      %v2303 = vsub.s32 0, %v2302
      %v2304 = vrot.slane %v2299, %v2303
      %v2305 = vlaneseq
      %v2306 = vshrl.u32 %v2305, 7
      %v2307 = vsub.s32 0, %v2306
      %v2308 = vrot.slane %v2300, %v2307
      %v2309 = vmul.f32 %v1701, %v2304
      %v2310 = vmul.f32 %v1701, %v2308
      %v2311 = vadd.f32 %v2291, %v2309
      %v2312 = vadd.f32 %v2292, %v2310
      %v2313 = vlaneseq
      %v2314 = vshrl.u32 %v2313, 7
      %v2315 = vsub.s32 1, %v2314
      %v2316 = vrot.slane %v2299, %v2315
      %v2317 = vlaneseq
      %v2318 = vshrl.u32 %v2317, 7
      %v2319 = vsub.s32 1, %v2318
      %v2320 = vrot.slane %v2300, %v2319
      %v2321 = vmul.f32 %v1717, %v2316
      %v2322 = vmul.f32 %v1717, %v2320
      %v2323 = vadd.f32 %v2311, %v2321
      %v2324 = vadd.f32 %v2312, %v2322
      %v2325 = vlaneseq
      %v2326 = vshrl.u32 %v2325, 7
      %v2327 = vsub.s32 2, %v2326
      %v2328 = vrot.slane %v2299, %v2327
      %v2329 = vlaneseq
      %v2330 = vshrl.u32 %v2329, 7
      %v2331 = vsub.s32 2, %v2330
      %v2332 = vrot.slane %v2300, %v2331
      %v2333 = vmul.f32 %v1733, %v2328
      %v2334 = vmul.f32 %v1733, %v2332
      %v2335 = vadd.f32 %v2323, %v2333
      %v2336 = vadd.f32 %v2324, %v2334
      %v2337 = vlaneseq
      %v2338 = vshrl.u32 %v2337, 7
      %v2339 = vsub.s32 3, %v2338
      %v2340 = vrot.slane %v2299, %v2339
      %v2341 = vlaneseq
      %v2342 = vshrl.u32 %v2341, 7
      %v2343 = vsub.s32 3, %v2342
      %v2344 = vrot.slane %v2300, %v2343
      %v2345 = vmul.f32 %v1749, %v2340
      %v2346 = vmul.f32 %v1749, %v2344
      %v2347 = vadd.f32 %v2335, %v2345
      %v2348 = vadd.f32 %v2336, %v2346
      %v2349 = vadd.f32 %v2347, %v1768
      %v2350 = vadd.f32 %v2348, %v1768
      %v2351 = vlaneseq
      %v2352 = vshrl.u32 %v2351, 7
      %v2353 = vsub.s32 0, %v2352
      %v2354 = vrot.slane %v2349, %v2353
      %v2355 = vlaneseq
      %v2356 = vshrl.u32 %v2355, 7
      %v2357 = vsub.s32 0, %v2356
      %v2358 = vrot.slane %v2350, %v2357
      %v2359 = vmul.f32 %v1775, %v2354
      %v2360 = vmul.f32 %v1775, %v2358
      %v2361 = vadd.f32 %v2359, 0.0
      %v2362 = vadd.f32 %v2360, 0.0
      %v2363 = vlaneseq
      %v2364 = vshrl.u32 %v2363, 7
      %v2365 = vsub.s32 1, %v2364
      %v2366 = vrot.slane %v2349, %v2365
      %v2367 = vlaneseq
      %v2368 = vshrl.u32 %v2367, 7
      %v2369 = vsub.s32 1, %v2368
      %v2370 = vrot.slane %v2350, %v2369
      %v2371 = vmul.f32 %v1791, %v2366
      %v2372 = vmul.f32 %v1791, %v2370
      %v2373 = vadd.f32 %v2361, %v2371
      %v2374 = vadd.f32 %v2362, %v2372
      %v2375 = vlaneseq
      %v2376 = vshrl.u32 %v2375, 7
      %v2377 = vsub.s32 2, %v2376
      %v2378 = vrot.slane %v2349, %v2377
      %v2379 = vlaneseq
      %v2380 = vshrl.u32 %v2379, 7
      %v2381 = vsub.s32 2, %v2380
      %v2382 = vrot.slane %v2350, %v2381
      %v2383 = vmul.f32 %v1807, %v2378
      %v2384 = vmul.f32 %v1807, %v2382
      %v2385 = vadd.f32 %v2373, %v2383
      %v2386 = vadd.f32 %v2374, %v2384
      %v2387 = vlaneseq
      %v2388 = vshrl.u32 %v2387, 7
      %v2389 = vsub.s32 3, %v2388
      %v2390 = vrot.slane %v2349, %v2389
      %v2391 = vlaneseq
      %v2392 = vshrl.u32 %v2391, 7
      %v2393 = vsub.s32 3, %v2392
      %v2394 = vrot.slane %v2350, %v2393
      %v2395 = vmul.f32 %v1823, %v2390
      %v2396 = vmul.f32 %v1823, %v2394
      %v2397 = vadd.f32 %v2385, %v2395
      %v2398 = vadd.f32 %v2386, %v2396
      %v2399 = vadd.f32 %v2397, %v1842
      %v2400 = vadd.f32 %v2398, %v1842
      %v2401 = vmax.f32 %v2399, 0.0
      %v2402 = vmax.f32 %v2400, 0.0
      %v2405 = vcombine.low %v2401, %v2402
      %v2407 = vadd.f32 %v1852, %v2405
      %s2408 = scalar_lea.vmem %s1, 8
      %v2409 = vld [vmem:[%s2408] sm:$0xf]
      %2410 = vrot.lane.b32.xlu0 %v2349, 85
      %v2411 = vpop.permute.xlu0 %2410
      %2412 = vrot.lane.b32.xlu0 %v2350, 85
      %v2413 = vpop.permute.xlu0 %2412
      %vm2414 = vcmp.lt.s32.totalorder %v236, 85
      %v2415 = vsel %vm2414, %v2411, %v2413
      %v2416 = vsel %vm2414, %v2413, %v2411
      %s2417 = scalar_lea.vmem %s4, 36
      %v2418 = vld [vmem:[%s2417] sm:$0x3]
      %v2420 = vlaneseq
      %v2421 = vshrl.u32 %v2420, 7
      %v2422 = vsub.s32 0, %v2421
      %v2423 = vrot.slane %v2418, %v2422
      %v2424 = vlaneseq
      %v2425 = vshrl.u32 %v2424, 7
      %v2426 = vsub.s32 1, %v2425
      %v2427 = vrot.slane %v2418, %v2426
      %v2430 = vmul.f32 %v2416, %v2423
      %v2431 = vmul.f32 %v2415, %v2427
      %2433 = vset.pattern.permute.xlu0 0
      %2434 = vperm.xlu0 %2433, %v2409
      %v2435 = vpop.permute.xlu0 %2434
      %v2437 = vlaneseq
      %v2438 = vshrl.u32 %v2437, 7
      %v2439 = vsub.s32 0, %v2438
      %v2440 = vrot.slane %v2430, %v2439
      %v2441 = vlaneseq
      %v2442 = vshrl.u32 %v2441, 7
      %v2443 = vsub.s32 0, %v2442
      %v2444 = vrot.slane %v2431, %v2443
      %v2445 = vmul.f32 %v2435, %v2440
      %v2446 = vmul.f32 %v2435, %v2444
      %v2447 = vadd.f32 %v2445, 0.0
      %v2448 = vadd.f32 %v2446, 0.0
      %2449 = vset.pattern.permute.xlu0 1
      %2450 = vperm.xlu0 %2449, %v2409
      %v2451 = vpop.permute.xlu0 %2450
      %v2453 = vlaneseq
      %v2454 = vshrl.u32 %v2453, 7
      %v2455 = vsub.s32 1, %v2454
      %v2456 = vrot.slane %v2430, %v2455
      %v2457 = vlaneseq
      %v2458 = vshrl.u32 %v2457, 7
      %v2459 = vsub.s32 1, %v2458
      %v2460 = vrot.slane %v2431, %v2459
      %v2461 = vmul.f32 %v2451, %v2456
      %v2462 = vmul.f32 %v2451, %v2460
      %v2463 = vadd.f32 %v2447, %v2461
      %v2464 = vadd.f32 %v2448, %v2462
      %2465 = vset.pattern.permute.xlu0 2
      %2466 = vperm.xlu0 %2465, %v2409
      %v2467 = vpop.permute.xlu0 %2466
      %v2469 = vlaneseq
      %v2470 = vshrl.u32 %v2469, 7
      %v2471 = vsub.s32 2, %v2470
      %v2472 = vrot.slane %v2430, %v2471
      %v2473 = vlaneseq
      %v2474 = vshrl.u32 %v2473, 7
      %v2475 = vsub.s32 2, %v2474
      %v2476 = vrot.slane %v2431, %v2475
      %v2477 = vmul.f32 %v2467, %v2472
      %v2478 = vmul.f32 %v2467, %v2476
      %v2479 = vadd.f32 %v2463, %v2477
      %v2480 = vadd.f32 %v2464, %v2478
      %2481 = vset.pattern.permute.xlu0 3
      %2482 = vperm.xlu0 %2481, %v2409
      %v2483 = vpop.permute.xlu0 %2482
      %v2485 = vlaneseq
      %v2486 = vshrl.u32 %v2485, 7
      %v2487 = vsub.s32 3, %v2486
      %v2488 = vrot.slane %v2430, %v2487
      %v2489 = vlaneseq
      %v2490 = vshrl.u32 %v2489, 7
      %v2491 = vsub.s32 3, %v2490
      %v2492 = vrot.slane %v2431, %v2491
      %v2493 = vmul.f32 %v2483, %v2488
      %v2494 = vmul.f32 %v2483, %v2492
      %v2495 = vadd.f32 %v2479, %v2493
      %v2496 = vadd.f32 %v2480, %v2494
      %2497 = vrot.lane.b32.xlu0 %v2349, 80
      %v2498 = vpop.permute.xlu0 %2497
      %2499 = vrot.lane.b32.xlu0 %v2350, 80
      %v2500 = vpop.permute.xlu0 %2499
      %v2501 = vsel %vm1595, %v2498, %v2500
      %v2502 = vsel %vm1595, %v2500, %v2498
      %s2503 = scalar_lea.vmem %s4, 38
      %v2504 = vld [vmem:[%s2503] sm:$0x3]
      %v2506 = vlaneseq
      %v2507 = vshrl.u32 %v2506, 7
      %v2508 = vsub.s32 0, %v2507
      %v2509 = vrot.slane %v2504, %v2508
      %v2510 = vlaneseq
      %v2511 = vshrl.u32 %v2510, 7
      %v2512 = vsub.s32 1, %v2511
      %v2513 = vrot.slane %v2504, %v2512
      %v2516 = vmul.f32 %v2502, %v2509
      %v2517 = vmul.f32 %v2501, %v2513
      %2518 = vset.pattern.permute.xlu0 4
      %2519 = vperm.xlu0 %2518, %v2409
      %v2520 = vpop.permute.xlu0 %2519
      %v2522 = vlaneseq
      %v2523 = vshrl.u32 %v2522, 7
      %v2524 = vsub.s32 0, %v2523
      %v2525 = vrot.slane %v2516, %v2524
      %v2526 = vlaneseq
      %v2527 = vshrl.u32 %v2526, 7
      %v2528 = vsub.s32 0, %v2527
      %v2529 = vrot.slane %v2517, %v2528
      %v2530 = vmul.f32 %v2520, %v2525
      %v2531 = vmul.f32 %v2520, %v2529
      %v2532 = vadd.f32 %v2495, %v2530
      %v2533 = vadd.f32 %v2496, %v2531
      %2534 = vset.pattern.permute.xlu0 5
      %2535 = vperm.xlu0 %2534, %v2409
      %v2536 = vpop.permute.xlu0 %2535
      %v2538 = vlaneseq
      %v2539 = vshrl.u32 %v2538, 7
      %v2540 = vsub.s32 1, %v2539
      %v2541 = vrot.slane %v2516, %v2540
      %v2542 = vlaneseq
      %v2543 = vshrl.u32 %v2542, 7
      %v2544 = vsub.s32 1, %v2543
      %v2545 = vrot.slane %v2517, %v2544
      %v2546 = vmul.f32 %v2536, %v2541
      %v2547 = vmul.f32 %v2536, %v2545
      %v2548 = vadd.f32 %v2532, %v2546
      %v2549 = vadd.f32 %v2533, %v2547
      %2550 = vset.pattern.permute.xlu0 6
      %2551 = vperm.xlu0 %2550, %v2409
      %v2552 = vpop.permute.xlu0 %2551
      %v2554 = vlaneseq
      %v2555 = vshrl.u32 %v2554, 7
      %v2556 = vsub.s32 2, %v2555
      %v2557 = vrot.slane %v2516, %v2556
      %v2558 = vlaneseq
      %v2559 = vshrl.u32 %v2558, 7
      %v2560 = vsub.s32 2, %v2559
      %v2561 = vrot.slane %v2517, %v2560
      %v2562 = vmul.f32 %v2552, %v2557
      %v2563 = vmul.f32 %v2552, %v2561
      %v2564 = vadd.f32 %v2548, %v2562
      %v2565 = vadd.f32 %v2549, %v2563
      %2566 = vset.pattern.permute.xlu0 7
      %2567 = vperm.xlu0 %2566, %v2409
      %v2568 = vpop.permute.xlu0 %2567
      %v2570 = vlaneseq
      %v2571 = vshrl.u32 %v2570, 7
      %v2572 = vsub.s32 3, %v2571
      %v2573 = vrot.slane %v2516, %v2572
      %v2574 = vlaneseq
      %v2575 = vshrl.u32 %v2574, 7
      %v2576 = vsub.s32 3, %v2575
      %v2577 = vrot.slane %v2517, %v2576
      %v2578 = vmul.f32 %v2568, %v2573
      %v2579 = vmul.f32 %v2568, %v2577
      %v2580 = vadd.f32 %v2564, %v2578
      %v2581 = vadd.f32 %v2565, %v2579
      %2582 = vrot.lane.b32.xlu0 %v2349, 75
      %v2583 = vpop.permute.xlu0 %2582
      %2584 = vrot.lane.b32.xlu0 %v2350, 75
      %v2585 = vpop.permute.xlu0 %2584
      %vm2586 = vcmp.lt.s32.totalorder %v236, 75
      %v2587 = vsel %vm2586, %v2583, %v2585
      %v2588 = vsel %vm2586, %v2585, %v2583
      %s2589 = scalar_lea.vmem %s4, 40
      %v2590 = vld [vmem:[%s2589] sm:$0x3]
      %v2592 = vlaneseq
      %v2593 = vshrl.u32 %v2592, 7
      %v2594 = vsub.s32 0, %v2593
      %v2595 = vrot.slane %v2590, %v2594
      %v2596 = vlaneseq
      %v2597 = vshrl.u32 %v2596, 7
      %v2598 = vsub.s32 1, %v2597
      %v2599 = vrot.slane %v2590, %v2598
      %v2602 = vmul.f32 %v2588, %v2595
      %v2603 = vmul.f32 %v2587, %v2599
      %2604 = vset.pattern.permute.xlu0 8
      %2605 = vperm.xlu0 %2604, %v2409
      %v2606 = vpop.permute.xlu0 %2605
      %v2608 = vlaneseq
      %v2609 = vshrl.u32 %v2608, 7
      %v2610 = vsub.s32 0, %v2609
      %v2611 = vrot.slane %v2602, %v2610
      %v2612 = vlaneseq
      %v2613 = vshrl.u32 %v2612, 7
      %v2614 = vsub.s32 0, %v2613
      %v2615 = vrot.slane %v2603, %v2614
      %v2616 = vmul.f32 %v2606, %v2611
      %v2617 = vmul.f32 %v2606, %v2615
      %v2618 = vadd.f32 %v2580, %v2616
      %v2619 = vadd.f32 %v2581, %v2617
      %2620 = vset.pattern.permute.xlu0 9
      %2621 = vperm.xlu0 %2620, %v2409
      %v2622 = vpop.permute.xlu0 %2621
      %v2624 = vlaneseq
      %v2625 = vshrl.u32 %v2624, 7
      %v2626 = vsub.s32 1, %v2625
      %v2627 = vrot.slane %v2602, %v2626
      %v2628 = vlaneseq
      %v2629 = vshrl.u32 %v2628, 7
      %v2630 = vsub.s32 1, %v2629
      %v2631 = vrot.slane %v2603, %v2630
      %v2632 = vmul.f32 %v2622, %v2627
      %v2633 = vmul.f32 %v2622, %v2631
      %v2634 = vadd.f32 %v2618, %v2632
      %v2635 = vadd.f32 %v2619, %v2633
      %2636 = vset.pattern.permute.xlu0 10
      %2637 = vperm.xlu0 %2636, %v2409
      %v2638 = vpop.permute.xlu0 %2637
      %v2640 = vlaneseq
      %v2641 = vshrl.u32 %v2640, 7
      %v2642 = vsub.s32 2, %v2641
      %v2643 = vrot.slane %v2602, %v2642
      %v2644 = vlaneseq
      %v2645 = vshrl.u32 %v2644, 7
      %v2646 = vsub.s32 2, %v2645
      %v2647 = vrot.slane %v2603, %v2646
      %v2648 = vmul.f32 %v2638, %v2643
      %v2649 = vmul.f32 %v2638, %v2647
      %v2650 = vadd.f32 %v2634, %v2648
      %v2651 = vadd.f32 %v2635, %v2649
      %2652 = vset.pattern.permute.xlu0 11
      %2653 = vperm.xlu0 %2652, %v2409
      %v2654 = vpop.permute.xlu0 %2653
      %v2656 = vlaneseq
      %v2657 = vshrl.u32 %v2656, 7
      %v2658 = vsub.s32 3, %v2657
      %v2659 = vrot.slane %v2602, %v2658
      %v2660 = vlaneseq
      %v2661 = vshrl.u32 %v2660, 7
      %v2662 = vsub.s32 3, %v2661
      %v2663 = vrot.slane %v2603, %v2662
      %v2664 = vmul.f32 %v2654, %v2659
      %v2665 = vmul.f32 %v2654, %v2663
      %v2666 = vadd.f32 %v2650, %v2664
      %v2667 = vadd.f32 %v2651, %v2665
      %2668 = vrot.lane.b32.xlu0 %v2349, 5
      %v2669 = vpop.permute.xlu0 %2668
      %2670 = vrot.lane.b32.xlu0 %v2350, 5
      %v2671 = vpop.permute.xlu0 %2670
      %vm2672 = vcmp.lt.s32.totalorder %v236, 5
      %v2673 = vsel %vm2672, %v2669, %v2671
      %v2674 = vsel %vm2672, %v2671, %v2669
      %s2675 = scalar_lea.vmem %s4, 42
      %v2676 = vld [vmem:[%s2675] sm:$0x3]
      %v2678 = vlaneseq
      %v2679 = vshrl.u32 %v2678, 7
      %v2680 = vsub.s32 0, %v2679
      %v2681 = vrot.slane %v2676, %v2680
      %v2682 = vlaneseq
      %v2683 = vshrl.u32 %v2682, 7
      %v2684 = vsub.s32 1, %v2683
      %v2685 = vrot.slane %v2676, %v2684
      %v2688 = vmul.f32 %v2674, %v2681
      %v2689 = vmul.f32 %v2673, %v2685
      %2690 = vset.pattern.permute.xlu0 12
      %2691 = vperm.xlu0 %2690, %v2409
      %v2692 = vpop.permute.xlu0 %2691
      %v2694 = vlaneseq
      %v2695 = vshrl.u32 %v2694, 7
      %v2696 = vsub.s32 0, %v2695
      %v2697 = vrot.slane %v2688, %v2696
      %v2698 = vlaneseq
      %v2699 = vshrl.u32 %v2698, 7
      %v2700 = vsub.s32 0, %v2699
      %v2701 = vrot.slane %v2689, %v2700
      %v2702 = vmul.f32 %v2692, %v2697
      %v2703 = vmul.f32 %v2692, %v2701
      %v2704 = vadd.f32 %v2666, %v2702
      %v2705 = vadd.f32 %v2667, %v2703
      %2706 = vset.pattern.permute.xlu0 13
      %2707 = vperm.xlu0 %2706, %v2409
      %v2708 = vpop.permute.xlu0 %2707
      %v2710 = vlaneseq
      %v2711 = vshrl.u32 %v2710, 7
      %v2712 = vsub.s32 1, %v2711
      %v2713 = vrot.slane %v2688, %v2712
      %v2714 = vlaneseq
      %v2715 = vshrl.u32 %v2714, 7
      %v2716 = vsub.s32 1, %v2715
      %v2717 = vrot.slane %v2689, %v2716
      %v2718 = vmul.f32 %v2708, %v2713
      %v2719 = vmul.f32 %v2708, %v2717
      %v2720 = vadd.f32 %v2704, %v2718
      %v2721 = vadd.f32 %v2705, %v2719
      %2722 = vset.pattern.permute.xlu0 14
      %2723 = vperm.xlu0 %2722, %v2409
      %v2724 = vpop.permute.xlu0 %2723
      %v2726 = vlaneseq
      %v2727 = vshrl.u32 %v2726, 7
      %v2728 = vsub.s32 2, %v2727
      %v2729 = vrot.slane %v2688, %v2728
      %v2730 = vlaneseq
      %v2731 = vshrl.u32 %v2730, 7
      %v2732 = vsub.s32 2, %v2731
      %v2733 = vrot.slane %v2689, %v2732
      %v2734 = vmul.f32 %v2724, %v2729
      %v2735 = vmul.f32 %v2724, %v2733
      %v2736 = vadd.f32 %v2720, %v2734
      %v2737 = vadd.f32 %v2721, %v2735
      %2738 = vset.pattern.permute.xlu0 15
      %2739 = vperm.xlu0 %2738, %v2409
      %v2740 = vpop.permute.xlu0 %2739
      %v2742 = vlaneseq
      %v2743 = vshrl.u32 %v2742, 7
      %v2744 = vsub.s32 3, %v2743
      %v2745 = vrot.slane %v2688, %v2744
      %v2746 = vlaneseq
      %v2747 = vshrl.u32 %v2746, 7
      %v2748 = vsub.s32 3, %v2747
      %v2749 = vrot.slane %v2689, %v2748
      %v2750 = vmul.f32 %v2740, %v2745
      %v2751 = vmul.f32 %v2740, %v2749
      %v2752 = vadd.f32 %v2736, %v2750
      %v2753 = vadd.f32 %v2737, %v2751
      %2754 = vset.pattern.permute.xlu0 16
      %2755 = vperm.xlu0 %2754, %v2409
      %v2756 = vpop.permute.xlu0 %2755
      %v2758 = vmul.f32 %v2756, %v2354
      %v2759 = vmul.f32 %v2756, %v2358
      %v2760 = vadd.f32 %v2752, %v2758
      %v2761 = vadd.f32 %v2753, %v2759
      %2762 = vset.pattern.permute.xlu0 17
      %2763 = vperm.xlu0 %2762, %v2409
      %v2764 = vpop.permute.xlu0 %2763
      %v2766 = vmul.f32 %v2764, %v2366
      %v2767 = vmul.f32 %v2764, %v2370
      %v2768 = vadd.f32 %v2760, %v2766
      %v2769 = vadd.f32 %v2761, %v2767
      %2770 = vset.pattern.permute.xlu0 18
      %2771 = vperm.xlu0 %2770, %v2409
      %v2772 = vpop.permute.xlu0 %2771
      %v2774 = vmul.f32 %v2772, %v2378
      %v2775 = vmul.f32 %v2772, %v2382
      %v2776 = vadd.f32 %v2768, %v2774
      %v2777 = vadd.f32 %v2769, %v2775
      %2778 = vset.pattern.permute.xlu0 19
      %2779 = vperm.xlu0 %2778, %v2409
      %v2780 = vpop.permute.xlu0 %2779
      %v2782 = vmul.f32 %v2780, %v2390
      %v2783 = vmul.f32 %v2780, %v2394
      %v2784 = vadd.f32 %v2776, %v2782
      %v2785 = vadd.f32 %v2777, %v2783
      %2786 = vrot.lane.b32.xlu0 %v2349, 123
      %v2787 = vpop.permute.xlu0 %2786
      %2788 = vrot.lane.b32.xlu0 %v2350, 123
      %v2789 = vpop.permute.xlu0 %2788
      %vm2790 = vcmp.lt.s32.totalorder %v236, 123
      %v2791 = vsel %vm2790, %v2787, %v2789
      %v2792 = vsel %vm2790, %v2789, %v2787
      %s2793 = scalar_lea.vmem %s4, 46
      %v2794 = vld [vmem:[%s2793] sm:$0x3]
      %v2796 = vlaneseq
      %v2797 = vshrl.u32 %v2796, 7
      %v2798 = vsub.s32 0, %v2797
      %v2799 = vrot.slane %v2794, %v2798
      %v2800 = vlaneseq
      %v2801 = vshrl.u32 %v2800, 7
      %v2802 = vsub.s32 1, %v2801
      %v2803 = vrot.slane %v2794, %v2802
      %v2806 = vmul.f32 %v2791, %v2799
      %v2807 = vmul.f32 %v2792, %v2803
      %2808 = vset.pattern.permute.xlu0 20
      %2809 = vperm.xlu0 %2808, %v2409
      %v2810 = vpop.permute.xlu0 %2809
      %v2812 = vlaneseq
      %v2813 = vshrl.u32 %v2812, 7
      %v2814 = vsub.s32 0, %v2813
      %v2815 = vrot.slane %v2806, %v2814
      %v2816 = vlaneseq
      %v2817 = vshrl.u32 %v2816, 7
      %v2818 = vsub.s32 0, %v2817
      %v2819 = vrot.slane %v2807, %v2818
      %v2820 = vmul.f32 %v2810, %v2815
      %v2821 = vmul.f32 %v2810, %v2819
      %v2822 = vadd.f32 %v2784, %v2820
      %v2823 = vadd.f32 %v2785, %v2821
      %2824 = vset.pattern.permute.xlu0 21
      %2825 = vperm.xlu0 %2824, %v2409
      %v2826 = vpop.permute.xlu0 %2825
      %v2828 = vlaneseq
      %v2829 = vshrl.u32 %v2828, 7
      %v2830 = vsub.s32 1, %v2829
      %v2831 = vrot.slane %v2806, %v2830
      %v2832 = vlaneseq
      %v2833 = vshrl.u32 %v2832, 7
      %v2834 = vsub.s32 1, %v2833
      %v2835 = vrot.slane %v2807, %v2834
      %v2836 = vmul.f32 %v2826, %v2831
      %v2837 = vmul.f32 %v2826, %v2835
      %v2838 = vadd.f32 %v2822, %v2836
      %v2839 = vadd.f32 %v2823, %v2837
      %2840 = vset.pattern.permute.xlu0 22
      %2841 = vperm.xlu0 %2840, %v2409
      %v2842 = vpop.permute.xlu0 %2841
      %v2844 = vlaneseq
      %v2845 = vshrl.u32 %v2844, 7
      %v2846 = vsub.s32 2, %v2845
      %v2847 = vrot.slane %v2806, %v2846
      %v2848 = vlaneseq
      %v2849 = vshrl.u32 %v2848, 7
      %v2850 = vsub.s32 2, %v2849
      %v2851 = vrot.slane %v2807, %v2850
      %v2852 = vmul.f32 %v2842, %v2847
      %v2853 = vmul.f32 %v2842, %v2851
      %v2854 = vadd.f32 %v2838, %v2852
      %v2855 = vadd.f32 %v2839, %v2853
      %2856 = vset.pattern.permute.xlu0 23
      %2857 = vperm.xlu0 %2856, %v2409
      %v2858 = vpop.permute.xlu0 %2857
      %v2860 = vlaneseq
      %v2861 = vshrl.u32 %v2860, 7
      %v2862 = vsub.s32 3, %v2861
      %v2863 = vrot.slane %v2806, %v2862
      %v2864 = vlaneseq
      %v2865 = vshrl.u32 %v2864, 7
      %v2866 = vsub.s32 3, %v2865
      %v2867 = vrot.slane %v2807, %v2866
      %v2868 = vmul.f32 %v2858, %v2863
      %v2869 = vmul.f32 %v2858, %v2867
      %v2870 = vadd.f32 %v2854, %v2868
      %v2871 = vadd.f32 %v2855, %v2869
      %2872 = vrot.lane.b32.xlu0 %v2349, 53
      %v2873 = vpop.permute.xlu0 %2872
      %2874 = vrot.lane.b32.xlu0 %v2350, 53
      %v2875 = vpop.permute.xlu0 %2874
      %vm2876 = vcmp.lt.s32.totalorder %v236, 53
      %v2877 = vsel %vm2876, %v2873, %v2875
      %v2878 = vsel %vm2876, %v2875, %v2873
      %s2879 = scalar_lea.vmem %s4, 48
      %v2880 = vld [vmem:[%s2879] sm:$0x3]
      %v2882 = vlaneseq
      %v2883 = vshrl.u32 %v2882, 7
      %v2884 = vsub.s32 0, %v2883
      %v2885 = vrot.slane %v2880, %v2884
      %v2886 = vlaneseq
      %v2887 = vshrl.u32 %v2886, 7
      %v2888 = vsub.s32 1, %v2887
      %v2889 = vrot.slane %v2880, %v2888
      %v2892 = vmul.f32 %v2877, %v2885
      %v2893 = vmul.f32 %v2878, %v2889
      %2894 = vset.pattern.permute.xlu0 24
      %2895 = vperm.xlu0 %2894, %v2409
      %v2896 = vpop.permute.xlu0 %2895
      %v2898 = vlaneseq
      %v2899 = vshrl.u32 %v2898, 7
      %v2900 = vsub.s32 0, %v2899
      %v2901 = vrot.slane %v2892, %v2900
      %v2902 = vlaneseq
      %v2903 = vshrl.u32 %v2902, 7
      %v2904 = vsub.s32 0, %v2903
      %v2905 = vrot.slane %v2893, %v2904
      %v2906 = vmul.f32 %v2896, %v2901
      %v2907 = vmul.f32 %v2896, %v2905
      %v2908 = vadd.f32 %v2870, %v2906
      %v2909 = vadd.f32 %v2871, %v2907
      %2910 = vset.pattern.permute.xlu0 25
      %2911 = vperm.xlu0 %2910, %v2409
      %v2912 = vpop.permute.xlu0 %2911
      %v2914 = vlaneseq
      %v2915 = vshrl.u32 %v2914, 7
      %v2916 = vsub.s32 1, %v2915
      %v2917 = vrot.slane %v2892, %v2916
      %v2918 = vlaneseq
      %v2919 = vshrl.u32 %v2918, 7
      %v2920 = vsub.s32 1, %v2919
      %v2921 = vrot.slane %v2893, %v2920
      %v2922 = vmul.f32 %v2912, %v2917
      %v2923 = vmul.f32 %v2912, %v2921
      %v2924 = vadd.f32 %v2908, %v2922
      %v2925 = vadd.f32 %v2909, %v2923
      %2926 = vset.pattern.permute.xlu0 26
      %2927 = vperm.xlu0 %2926, %v2409
      %v2928 = vpop.permute.xlu0 %2927
      %v2930 = vlaneseq
      %v2931 = vshrl.u32 %v2930, 7
      %v2932 = vsub.s32 2, %v2931
      %v2933 = vrot.slane %v2892, %v2932
      %v2934 = vlaneseq
      %v2935 = vshrl.u32 %v2934, 7
      %v2936 = vsub.s32 2, %v2935
      %v2937 = vrot.slane %v2893, %v2936
      %v2938 = vmul.f32 %v2928, %v2933
      %v2939 = vmul.f32 %v2928, %v2937
      %v2940 = vadd.f32 %v2924, %v2938
      %v2941 = vadd.f32 %v2925, %v2939
      %2942 = vset.pattern.permute.xlu0 27
      %2943 = vperm.xlu0 %2942, %v2409
      %v2944 = vpop.permute.xlu0 %2943
      %v2946 = vlaneseq
      %v2947 = vshrl.u32 %v2946, 7
      %v2948 = vsub.s32 3, %v2947
      %v2949 = vrot.slane %v2892, %v2948
      %v2950 = vlaneseq
      %v2951 = vshrl.u32 %v2950, 7
      %v2952 = vsub.s32 3, %v2951
      %v2953 = vrot.slane %v2893, %v2952
      %v2954 = vmul.f32 %v2944, %v2949
      %v2955 = vmul.f32 %v2944, %v2953
      %v2956 = vadd.f32 %v2940, %v2954
      %v2957 = vadd.f32 %v2941, %v2955
      %2958 = vrot.lane.b32.xlu0 %v2349, 48
      %v2959 = vpop.permute.xlu0 %2958
      %2960 = vrot.lane.b32.xlu0 %v2350, 48
      %v2961 = vpop.permute.xlu0 %2960
      %v2962 = vsel %vm1133, %v2959, %v2961
      %v2963 = vsel %vm1133, %v2961, %v2959
      %s2964 = scalar_lea.vmem %s4, 50
      %v2965 = vld [vmem:[%s2964] sm:$0x3]
      %v2967 = vlaneseq
      %v2968 = vshrl.u32 %v2967, 7
      %v2969 = vsub.s32 0, %v2968
      %v2970 = vrot.slane %v2965, %v2969
      %v2971 = vlaneseq
      %v2972 = vshrl.u32 %v2971, 7
      %v2973 = vsub.s32 1, %v2972
      %v2974 = vrot.slane %v2965, %v2973
      %v2977 = vmul.f32 %v2962, %v2970
      %v2978 = vmul.f32 %v2963, %v2974
      %2979 = vset.pattern.permute.xlu0 28
      %2980 = vperm.xlu0 %2979, %v2409
      %v2981 = vpop.permute.xlu0 %2980
      %v2983 = vlaneseq
      %v2984 = vshrl.u32 %v2983, 7
      %v2985 = vsub.s32 0, %v2984
      %v2986 = vrot.slane %v2977, %v2985
      %v2987 = vlaneseq
      %v2988 = vshrl.u32 %v2987, 7
      %v2989 = vsub.s32 0, %v2988
      %v2990 = vrot.slane %v2978, %v2989
      %v2991 = vmul.f32 %v2981, %v2986
      %v2992 = vmul.f32 %v2981, %v2990
      %v2993 = vadd.f32 %v2956, %v2991
      %v2994 = vadd.f32 %v2957, %v2992
      %2995 = vset.pattern.permute.xlu0 29
      %2996 = vperm.xlu0 %2995, %v2409
      %v2997 = vpop.permute.xlu0 %2996
      %v2999 = vlaneseq
      %v3000 = vshrl.u32 %v2999, 7
      %v3001 = vsub.s32 1, %v3000
      %v3002 = vrot.slane %v2977, %v3001
      %v3003 = vlaneseq
      %v3004 = vshrl.u32 %v3003, 7
      %v3005 = vsub.s32 1, %v3004
      %v3006 = vrot.slane %v2978, %v3005
      %v3007 = vmul.f32 %v2997, %v3002
      %v3008 = vmul.f32 %v2997, %v3006
      %v3009 = vadd.f32 %v2993, %v3007
      %v3010 = vadd.f32 %v2994, %v3008
      %3011 = vset.pattern.permute.xlu0 30
      %3012 = vperm.xlu0 %3011, %v2409
      %v3013 = vpop.permute.xlu0 %3012
      %v3015 = vlaneseq
      %v3016 = vshrl.u32 %v3015, 7
      %v3017 = vsub.s32 2, %v3016
      %v3018 = vrot.slane %v2977, %v3017
      %v3019 = vlaneseq
      %v3020 = vshrl.u32 %v3019, 7
      %v3021 = vsub.s32 2, %v3020
      %v3022 = vrot.slane %v2978, %v3021
      %v3023 = vmul.f32 %v3013, %v3018
      %v3024 = vmul.f32 %v3013, %v3022
      %v3025 = vadd.f32 %v3009, %v3023
      %v3026 = vadd.f32 %v3010, %v3024
      %3027 = vset.pattern.permute.xlu0 31
      %3028 = vperm.xlu0 %3027, %v2409
      %v3029 = vpop.permute.xlu0 %3028
      %v3031 = vlaneseq
      %v3032 = vshrl.u32 %v3031, 7
      %v3033 = vsub.s32 3, %v3032
      %v3034 = vrot.slane %v2977, %v3033
      %v3035 = vlaneseq
      %v3036 = vshrl.u32 %v3035, 7
      %v3037 = vsub.s32 3, %v3036
      %v3038 = vrot.slane %v2978, %v3037
      %v3039 = vmul.f32 %v3029, %v3034
      %v3040 = vmul.f32 %v3029, %v3038
      %v3041 = vadd.f32 %v3025, %v3039
      %v3042 = vadd.f32 %v3026, %v3040
      %3043 = vrot.lane.b32.xlu0 %v2349, 43
      %v3044 = vpop.permute.xlu0 %3043
      %3045 = vrot.lane.b32.xlu0 %v2350, 43
      %v3046 = vpop.permute.xlu0 %3045
      %vm3047 = vcmp.lt.s32.totalorder %v236, 43
      %v3048 = vsel %vm3047, %v3044, %v3046
      %v3049 = vsel %vm3047, %v3046, %v3044
      %s3050 = scalar_lea.vmem %s4, 52
      %v3051 = vld [vmem:[%s3050] sm:$0x3]
      %v3053 = vlaneseq
      %v3054 = vshrl.u32 %v3053, 7
      %v3055 = vsub.s32 0, %v3054
      %v3056 = vrot.slane %v3051, %v3055
      %v3057 = vlaneseq
      %v3058 = vshrl.u32 %v3057, 7
      %v3059 = vsub.s32 1, %v3058
      %v3060 = vrot.slane %v3051, %v3059
      %v3063 = vmul.f32 %v3048, %v3056
      %v3064 = vmul.f32 %v3049, %v3060
      %3065 = vset.pattern.permute.xlu0 32
      %3066 = vperm.xlu0 %3065, %v2409
      %v3067 = vpop.permute.xlu0 %3066
      %v3069 = vlaneseq
      %v3070 = vshrl.u32 %v3069, 7
      %v3071 = vsub.s32 0, %v3070
      %v3072 = vrot.slane %v3063, %v3071
      %v3073 = vlaneseq
      %v3074 = vshrl.u32 %v3073, 7
      %v3075 = vsub.s32 0, %v3074
      %v3076 = vrot.slane %v3064, %v3075
      %v3077 = vmul.f32 %v3067, %v3072
      %v3078 = vmul.f32 %v3067, %v3076
      %v3079 = vadd.f32 %v3041, %v3077
      %v3080 = vadd.f32 %v3042, %v3078
      %3081 = vset.pattern.permute.xlu0 33
      %3082 = vperm.xlu0 %3081, %v2409
      %v3083 = vpop.permute.xlu0 %3082
      %v3085 = vlaneseq
      %v3086 = vshrl.u32 %v3085, 7
      %v3087 = vsub.s32 1, %v3086
      %v3088 = vrot.slane %v3063, %v3087
      %v3089 = vlaneseq
      %v3090 = vshrl.u32 %v3089, 7
      %v3091 = vsub.s32 1, %v3090
      %v3092 = vrot.slane %v3064, %v3091
      %v3093 = vmul.f32 %v3083, %v3088
      %v3094 = vmul.f32 %v3083, %v3092
      %v3095 = vadd.f32 %v3079, %v3093
      %v3096 = vadd.f32 %v3080, %v3094
      %3097 = vset.pattern.permute.xlu0 34
      %3098 = vperm.xlu0 %3097, %v2409
      %v3099 = vpop.permute.xlu0 %3098
      %v3101 = vlaneseq
      %v3102 = vshrl.u32 %v3101, 7
      %v3103 = vsub.s32 2, %v3102
      %v3104 = vrot.slane %v3063, %v3103
      %v3105 = vlaneseq
      %v3106 = vshrl.u32 %v3105, 7
      %v3107 = vsub.s32 2, %v3106
      %v3108 = vrot.slane %v3064, %v3107
      %v3109 = vmul.f32 %v3099, %v3104
      %v3110 = vmul.f32 %v3099, %v3108
      %v3111 = vadd.f32 %v3095, %v3109
      %v3112 = vadd.f32 %v3096, %v3110
      %3113 = vset.pattern.permute.xlu0 35
      %3114 = vperm.xlu0 %3113, %v2409
      %v3115 = vpop.permute.xlu0 %3114
      %v3117 = vlaneseq
      %v3118 = vshrl.u32 %v3117, 7
      %v3119 = vsub.s32 3, %v3118
      %v3120 = vrot.slane %v3063, %v3119
      %v3121 = vlaneseq
      %v3122 = vshrl.u32 %v3121, 7
      %v3123 = vsub.s32 3, %v3122
      %v3124 = vrot.slane %v3064, %v3123
      %v3125 = vmul.f32 %v3115, %v3120
      %v3126 = vmul.f32 %v3115, %v3124
      %v3127 = vadd.f32 %v3111, %v3125
      %v3128 = vadd.f32 %v3112, %v3126
      %s3129 = scalar_lea.vmem %s2, 8
      %v3130 = vld [vmem:[%s3129] sm:$0xf]
      %3132 = vset.pattern.permute.xlu0 0
      %3133 = vperm.xlu0 %3132, %v3130
      %v3134 = vpop.permute.xlu0 %3133
      %v3136 = vadd.f32 %v3127, %v3134
      %v3137 = vadd.f32 %v3128, %v3134
      %v3138 = vlaneseq
      %v3139 = vshrl.u32 %v3138, 7
      %v3140 = vsub.s32 0, %v3139
      %v3141 = vrot.slane %v3136, %v3140
      %v3142 = vlaneseq
      %v3143 = vshrl.u32 %v3142, 7
      %v3144 = vsub.s32 0, %v3143
      %v3145 = vrot.slane %v3137, %v3144
      %v3146 = vmul.f32 %v1775, %v3141
      %v3147 = vmul.f32 %v1775, %v3145
      %v3148 = vadd.f32 %v3146, 0.0
      %v3149 = vadd.f32 %v3147, 0.0
      %v3150 = vlaneseq
      %v3151 = vshrl.u32 %v3150, 7
      %v3152 = vsub.s32 1, %v3151
      %v3153 = vrot.slane %v3136, %v3152
      %v3154 = vlaneseq
      %v3155 = vshrl.u32 %v3154, 7
      %v3156 = vsub.s32 1, %v3155
      %v3157 = vrot.slane %v3137, %v3156
      %v3158 = vmul.f32 %v1791, %v3153
      %v3159 = vmul.f32 %v1791, %v3157
      %v3160 = vadd.f32 %v3148, %v3158
      %v3161 = vadd.f32 %v3149, %v3159
      %v3162 = vlaneseq
      %v3163 = vshrl.u32 %v3162, 7
      %v3164 = vsub.s32 2, %v3163
      %v3165 = vrot.slane %v3136, %v3164
      %v3166 = vlaneseq
      %v3167 = vshrl.u32 %v3166, 7
      %v3168 = vsub.s32 2, %v3167
      %v3169 = vrot.slane %v3137, %v3168
      %v3170 = vmul.f32 %v1807, %v3165
      %v3171 = vmul.f32 %v1807, %v3169
      %v3172 = vadd.f32 %v3160, %v3170
      %v3173 = vadd.f32 %v3161, %v3171
      %v3174 = vlaneseq
      %v3175 = vshrl.u32 %v3174, 7
      %v3176 = vsub.s32 3, %v3175
      %v3177 = vrot.slane %v3136, %v3176
      %v3178 = vlaneseq
      %v3179 = vshrl.u32 %v3178, 7
      %v3180 = vsub.s32 3, %v3179
      %v3181 = vrot.slane %v3137, %v3180
      %v3182 = vmul.f32 %v1823, %v3177
      %v3183 = vmul.f32 %v1823, %v3181
      %v3184 = vadd.f32 %v3172, %v3182
      %v3185 = vadd.f32 %v3173, %v3183
      %v3186 = vadd.f32 %v3184, %v1842
      %v3187 = vadd.f32 %v3185, %v1842
      %v3188 = vmax.f32 %v3186, 0.0
      %v3189 = vmax.f32 %v3187, 0.0
      %v3192 = vcombine.low %v3188, %v3189
      %v3194 = vadd.f32 %v2407, %v3192
      %3195 = vst [vmem:[%s224] sm:$0xff] %v3194
      %p3196 = scmp.lt.s32.totalorder %s16, 1
      %s3197 = scalar_select %p3196, %s16, 1
      %s3198 = smul.addr %s3197, 2
      %s3199 = smul.addr %s3198, 4
      %s3200 = scalar_lea.vmem %s5, %s3199
      // Predicated region
      $region41: #{dacblock_forward.1} parent=39 // pred_check
        %p3201 = pneg %p144
      $region42: #{dacblock_forward.1} parent=39 // pred_check_branch
        %3203 = sbr.rel (%p3201) target = $region44
      $region43: #{dacblock_forward.1} parent=39 // pred_region
        _
      $region44: #{dacblock_forward.1} parent=39 // pred_fallthru
        _
    $region40: #{dacblock_forward.1} parent=5 // pred_fallthru
      _
    %p3204 = scmp.le.s32.totalorder 2, %s11
    // Predicated region
    $region45: #{dacblock_forward.1} parent=5 // pred_check
      %p3205 = pneg %p3204
    $region46: #{dacblock_forward.1} parent=5 // pred_check_branch
      %3207 = sbr.rel (%p3205) target = $region48
    $region47: #{dacblock_forward.1} parent=5 // pred_region
      %s3208 = ssub.s32 %s11, 2
      // Predicated region
      $region49: #{dacblock_forward.1} parent=47 // pred_check
        %p3209 = pneg %p150
      $region50: #{dacblock_forward.1} parent=47 // pred_check_branch
        %3211 = sbr.rel (%p3209) target = $region52
      $region51: #{dacblock_forward.1} parent=47 // pred_region
        %p3212 = scmp.lt.s32.totalorder %s17, 1
        %s3213 = scalar_select %p3212, %s17, 1
        %s3214 = smul.addr %s3213, 2
        %s3215 = smul.addr %s3214, 4
        %s3216 = scalar_lea.vmem %s5, %s3215
      $region52: #{dacblock_forward.1} parent=47 // pred_fallthru
        _
    $region48: #{dacblock_forward.1} parent=5 // pred_fallthru
      _
  $region6: #{dacblock_forward.1} parent=0 // loop_footer
    %s15 = sadd.s32 1, %s11
  $region7: #{dacblock_forward.1} parent=0 // loop_footer_branch
    %10 = sbr.rel target = $region3
  $region8: #{dacblock_forward.1} parent=0 // loop_exit
    _

</llo_original>
